<compile_context>
chip_gen: v7x
topology: tpu7x:2x2x1
jax: 0.10.0
libtpu: 0.0.40
codegen_flags: <defaults>
</compile_context>

<pallas_src>
import functools

import jax
import jax.numpy as jnp
from jax.experimental import pallas as pl
from jax.experimental.pallas import tpu as pltpu


EPS = 1e-8
_LANES = 128
_MIN_PALLAS_ELEMENTS = 32 * 1024       # below this, pure JAX is faster
_MAX_MIN_TILE_BYTES = 4 << 20          # pathological (B, N) views -> pure JAX


def _round_up(x, m):
    return ((x + m - 1) // m) * m


def _is_v7x():
    """Two TensorCores per chip only on v7x; also gates tile / VMEM budgets."""
    try:
        kind = jax.devices()[0].device_kind.lower()
    except Exception:
        return False
    return "v7" in kind


def _pure_loss(predictions, targets, action_weights, rho_weight, soft_label_weight):
    """Pure-JAX forward (PyTorch semantics).  Small-input fast path + reference."""
    pr = predictions['rho_values'].astype(jnp.float32)
    tr = targets['rho_values'].astype(jnp.float32)
    ps = predictions['soft_labels'].astype(jnp.float32)
    ts = targets['soft_labels'].astype(jnp.float32)
    rho = (pr - tr) ** 2
    if action_weights is not None:
        rho = rho * action_weights.astype(jnp.float32)
    rho_loss = jnp.mean(rho)
    ps_c = jnp.clip(ps, EPS, 1.0)
    ts_c = jnp.clip(ts, EPS, 1.0)
    kl_loss = jnp.sum(ts_c * (jnp.log(ts_c) - jnp.log(ps_c))) / pr.shape[0]
    loss = rho_weight * rho_loss + soft_label_weight * kl_loss
    return {'loss': loss, 'rho_loss': rho_loss, 'soft_label_loss': kl_loss}


def _loss_kernel(*refs, has_weights, view_rows, tile_rows, steps, needs_mask):
    """Per-core partial sums of the weighted MSE term and the KL term."""
    if has_weights:
        (pr_ref, tr_ref, ps_ref, ts_ref, w_ref,
         rho_out, kl_out, rho_acc, kl_acc) = refs
    else:
        (pr_ref, tr_ref, ps_ref, ts_ref,
         rho_out, kl_out, rho_acc, kl_acc) = refs
        w_ref = None

    c = pl.program_id(0)      # core shard ("parallel" axis)
    s = pl.program_id(1)      # reduction step within the shard ("arbitrary")

    pr = pr_ref[...].astype(jnp.float32)
    tr = tr_ref[...].astype(jnp.float32)
    ps = ps_ref[...].astype(jnp.float32)
    ts = ts_ref[...].astype(jnp.float32)

    # MSE(reduction='none') [* action_weights].
    diff = pr - tr
    rho_elem = diff * diff
    if has_weights:
        rho_elem = rho_elem * w_ref[...].astype(jnp.float32)

    # KL (pre-batchmean sum): clamp both to [eps, 1]; one EUP log per element.
    ps_c = jnp.clip(ps, EPS, 1.0)
    ts_c = jnp.clip(ts, EPS, 1.0)
    kl_elem = ts_c * jnp.log(ts_c / ps_c)

    if needs_mask:
        # Zero rows beyond the logical end of this shard's data.  Garbage in
        # the (clamped / duplicated) out-of-bounds tail — even NaN/Inf — is
        # discarded by the select, never propagated.
        row0 = (c * steps + s) * tile_rows
        row_ids = jax.lax.broadcasted_iota(jnp.int32, rho_elem.shape, 0)
        valid = row_ids < (view_rows - row0)
        rho_elem = jnp.where(valid, rho_elem, 0.0)
        kl_elem = jnp.where(valid, kl_elem, 0.0)

    # Full-tile f32 VMEM accumulators: per step only VPU vreg adds; the XLU
    # cross-lane/sublane reduce + SMEM scalar store happen once per shard.
    @pl.when(s == 0)
    def _():
        rho_acc[...] = jnp.zeros_like(rho_acc)
        kl_acc[...] = jnp.zeros_like(kl_acc)

    rho_acc[...] += rho_elem
    kl_acc[...] += kl_elem

    @pl.when(s == steps - 1)
    def _():
        rho_out[0, 0] = jnp.sum(rho_acc[...])
        kl_out[0, 0] = jnp.sum(kl_acc[...])


def power_grid_loss(predictions, targets, action_weights=None,
                    rho_weight=0.7, soft_label_weight=0.3,
                    min_pallas_elements=_MIN_PALLAS_ELEMENTS,
                    max_tile_rows=None):
    """Pallas implementation of PowerGridLoss.forward."""
    pred_rho = predictions['rho_values']
    pred_soft = predictions['soft_labels']
    target_rho = targets['rho_values']
    target_soft = targets['soft_labels']

    b, n = pred_rho.shape
    total = b * n
    has_weights = action_weights is not None

    # Fast path: tiny problems are dominated by launch/tiling overhead.
    if total < min_pallas_elements:
        return _pure_loss(predictions, targets, action_weights,
                          rho_weight, soft_label_weight)

    # ---- Choose a 2-D HBM view without ever copying / padding inputs. ----
    if total % _LANES == 0:
        # Free reshape of a contiguous row-major array: lane-dense slab.
        view_rows, view_cols = total // _LANES, _LANES
    else:
        # Original layout; a full-extent last dim is exempt from the 128 rule.
        view_rows, view_cols = b, n

    row_bytes = view_cols * 4
    if view_cols != _LANES and 16 * row_bytes > _MAX_MIN_TILE_BYTES:
        # TODO(synk): pathological huge, non-128-divisible last dim; even a
        # minimal (16, N) tile would blow the VMEM budget -> pure-JAX fallback.
        return _pure_loss(predictions, targets, action_weights,
                          rho_weight, soft_label_weight)

    # ---- Per-generation tiling: shard across TCs only where they exist. ----
    is_v7 = _is_v7x()
    ncores = 2 if is_v7 else 1
    target_tile_bytes = (2 << 20) if is_v7 else (1 << 20)   # per input, per buffer
    vmem_limit = (48 << 20) if is_v7 else (32 << 20)

    tile_rows = max(16, (target_tile_bytes // row_bytes) // 16 * 16)
    if max_tile_rows is not None:
        tile_rows = max(16, min(tile_rows, _round_up(max_tile_rows, 16)))
    rows_per_core = pl.cdiv(view_rows, ncores)
    tile_rows = min(tile_rows, _round_up(rows_per_core, 16))
    if tile_rows > view_rows:
        tile_rows = view_rows            # full-extent block: always layout-legal
    steps = pl.cdiv(rows_per_core, tile_rows)
    needs_mask = (ncores * steps * tile_rows) != view_rows

    # Never hand Pallas a block index past the last (possibly partial) block;
    # duplicated reads are fully masked out via the logical row offset.
    last_block = pl.cdiv(view_rows, tile_rows) - 1

    def as_view(x):
        return x.reshape(view_rows, view_cols)   # metadata-only, no HBM copy

    inputs = [as_view(pred_rho), as_view(target_rho),
              as_view(pred_soft), as_view(target_soft)]
    if has_weights:
        inputs.append(as_view(action_weights))
    n_in = len(inputs)

    kernel = functools.partial(
        _loss_kernel, has_weights=has_weights, view_rows=view_rows,
        tile_rows=tile_rows, steps=steps, needs_mask=needs_mask)

    out_spec = pl.BlockSpec((1, 1), lambda c, s: (c, 0),
                            memory_space=pltpu.SMEM)
    scratch = [pltpu.VMEM((tile_rows, view_cols), jnp.float32)] * 2

    itemsize = max(x.dtype.itemsize for x in inputs)
    cost = pl.CostEstimate(
        flops=10 * total,
        transcendentals=total,                       # one log per element
        bytes_accessed=n_in * total * itemsize + 2 * ncores * 4,
    )

    def make_in_spec(triple_buffer):
        index_map = lambda c, s: (jnp.minimum(c * steps + s, last_block), 0)
        if triple_buffer:
            try:
                return pl.BlockSpec((tile_rows, view_cols), index_map,
                                    pipeline_mode=pl.Buffered(3))
            except TypeError:        # BlockSpec without pipeline_mode support
                pass
        return pl.BlockSpec((tile_rows, view_cols), index_map)

    def run(triple_buffer):
        return pl.pallas_call(
            kernel,
            grid=(ncores, steps),
            in_specs=[make_in_spec(triple_buffer)] * n_in,
            out_specs=(out_spec, out_spec),
            out_shape=(jax.ShapeDtypeStruct((ncores, 1), jnp.float32),
                       jax.ShapeDtypeStruct((ncores, 1), jnp.float32)),
            scratch_shapes=scratch,
            compiler_params=pltpu.CompilerParams(
                # TODO(synk): confirm via xprof that the outer axis shards
                # across both v7x TensorCores; switch to pltpu.CORE_PARALLEL
                # if plain "parallel" runs it serially on v7x.
                dimension_semantics=("parallel", "arbitrary"),
                vmem_limit_bytes=vmem_limit,
            ),
            cost_estimate=cost,
        )(*inputs)

    want_triple = steps >= 3    # deeper buffering only pays with a real pipeline
    try:
        rho_parts, kl_parts = run(want_triple)
    except Exception:
        if not want_triple:
            raise
        rho_parts, kl_parts = run(False)     # conservative double-buffer path

    # Combine per-core partials; apply the logical divisors (mean / batchmean).
    rho_loss = jnp.sum(rho_parts) / float(total)
    kl_loss = jnp.sum(kl_parts) / float(b)
    loss = rho_weight * rho_loss + soft_label_weight * kl_loss
    return {'loss': loss, 'rho_loss': rho_loss, 'soft_label_loss': kl_loss}


if __name__ == "__main__":
    key = jax.random.PRNGKey(0)

    def make_inputs(k, b, n, dtype=jnp.float32):
        k1, k2, k3, k4, k5 = jax.random.split(k, 5)
        preds = {'rho_values': jax.random.normal(k1, (b, n), dtype=dtype),
                 'soft_labels': jax.nn.softmax(
                     jax.random.normal(k3, (b, n), dtype=dtype), axis=-1)}
        tgts = {'rho_values': jax.random.normal(k2, (b, n), dtype=dtype),
                'soft_labels': jax.nn.softmax(
                    jax.random.normal(k4, (b, n), dtype=dtype), axis=-1)}
        w = jax.random.uniform(k5, (b, n), dtype=dtype, minval=0.5, maxval=1.5)
        return preds, tgts, w

    def check(out, ref, rtol=1e-4, atol=1e-6):
        assert jnp.allclose(out['loss'], ref['loss'], rtol=rtol, atol=atol)
        assert jnp.allclose(out['rho_loss'], ref['rho_loss'], rtol=rtol, atol=atol)
        assert jnp.allclose(out['soft_label_loss'], ref['soft_label_loss'],
                            rtol=rtol, atol=atol)

    keys = jax.random.split(key, 4)

    # 1) Small demo shape (batch=4, num_actions=16) -> pure-JAX fast path.
    p, t, w = make_inputs(keys[0], 4, 16)
    out = power_grid_loss(p, t, w)
    jax.block_until_ready(out['loss'])
    check(out, _pure_loss(p, t, w, 0.7, 0.3))

    # 2) Lane-dense Pallas path (total % 128 == 0): weighted and unweighted.
    p, t, w = make_inputs(keys[1], 64, 2048)
    out = power_grid_loss(p, t, w)
    jax.block_until_ready(out['loss'])
    check(out, _pure_loss(p, t, w, 0.7, 0.3))
    out_nw = power_grid_loss(p, t, None)
    jax.block_until_ready(out_nw['loss'])
    check(out_nw, _pure_loss(p, t, None, 0.7, 0.3))

    # 3) Multi-step reduction + ragged row-tail mask (small tiles force >1 step).
    p, t, w = make_inputs(keys[2], 256, 513)
    out = power_grid_loss(p, t, w, max_tile_rows=128, min_pallas_elements=0)
    jax.block_until_ready(out['loss'])
    check(out, _pure_loss(p, t, w, 0.7, 0.3))

    # 4) total % 128 != 0 -> original (B, N) view, full-extent last dim + mask.
    p, t, w = make_inputs(keys[3], 129, 1017)
    out = power_grid_loss(p, t, w, min_pallas_elements=0)
    jax.block_until_ready(out['loss'])
    check(out, _pure_loss(p, t, w, 0.7, 0.3))

    print("KERNEL_OK")
</pallas_src>

<mosaic_0001>
module attributes {stable_mosaic.version = 11 : i64} {
  func.func @_loss_kernel(%arg0: i32, %arg1: i32, %arg2: memref<1024x128xf32, #tpu.memory_space<vmem>>, %arg3: memref<1024x128xf32, #tpu.memory_space<vmem>>, %arg4: memref<1024x128xf32, #tpu.memory_space<vmem>>, %arg5: memref<1024x128xf32, #tpu.memory_space<vmem>>, %arg6: memref<1024x128xf32, #tpu.memory_space<vmem>>, %arg7: memref<1x1xf32, #tpu.memory_space<smem>>, %arg8: memref<1x1xf32, #tpu.memory_space<smem>>, %arg9: memref<1024x128xf32, #tpu.memory_space<vmem>>, %arg10: memref<1024x128xf32, #tpu.memory_space<vmem>>) attributes {dimension_semantics = [#tpu.dimension_semantics<parallel>, #tpu.dimension_semantics<arbitrary>], iteration_bounds = array<i64: 1, 1>, scalar_prefetch = 0 : i64, scratch_operands = 2 : i64, tpu.core_type = #tpu.core_type<tc>, window_params = [{transform_indices = @transform_0, window_bounds = array<i64: 1024, 128>}, {transform_indices = @transform_1, window_bounds = array<i64: 1024, 128>}, {transform_indices = @transform_2, window_bounds = array<i64: 1024, 128>}, {transform_indices = @transform_3, window_bounds = array<i64: 1024, 128>}, {transform_indices = @transform_4, window_bounds = array<i64: 1024, 128>}, {transform_indices = @transform_5, window_bounds = array<i64: 1, 1>}, {transform_indices = @transform_6, window_bounds = array<i64: 1, 1>}]} {
    %c0 = arith.constant 0 : index
    %c0_0 = arith.constant 0 : index
    %0 = vector.load %arg2[%c0, %c0_0] : memref<1024x128xf32, #tpu.memory_space<vmem>>, vector<1024x128xf32>
    %c0_1 = arith.constant 0 : index
    %c0_2 = arith.constant 0 : index
    %1 = vector.load %arg3[%c0_1, %c0_2] : memref<1024x128xf32, #tpu.memory_space<vmem>>, vector<1024x128xf32>
    %c0_3 = arith.constant 0 : index
    %c0_4 = arith.constant 0 : index
    %2 = vector.load %arg4[%c0_3, %c0_4] : memref<1024x128xf32, #tpu.memory_space<vmem>>, vector<1024x128xf32>
    %c0_5 = arith.constant 0 : index
    %c0_6 = arith.constant 0 : index
    %3 = vector.load %arg5[%c0_5, %c0_6] : memref<1024x128xf32, #tpu.memory_space<vmem>>, vector<1024x128xf32>
    %4 = arith.subf %0, %1 : vector<1024x128xf32>
    %5 = arith.mulf %4, %4 : vector<1024x128xf32>
    %c0_7 = arith.constant 0 : index
    %c0_8 = arith.constant 0 : index
    %6 = vector.load %arg6[%c0_7, %c0_8] : memref<1024x128xf32, #tpu.memory_space<vmem>>, vector<1024x128xf32>
    %7 = arith.mulf %5, %6 : vector<1024x128xf32>
    %cst = arith.constant 9.99999993E-9 : f32
    %cst_9 = arith.constant 1.000000e+00 : f32
    %8 = vector.broadcast %cst : f32 to vector<1024x128xf32>
    %9 = arith.maximumf %8, %2 : vector<1024x128xf32>
    %10 = vector.broadcast %cst_9 : f32 to vector<1024x128xf32>
    %11 = arith.minimumf %10, %9 : vector<1024x128xf32>
    %cst_10 = arith.constant 9.99999993E-9 : f32
    %cst_11 = arith.constant 1.000000e+00 : f32
    %12 = vector.broadcast %cst_10 : f32 to vector<1024x128xf32>
    %13 = arith.maximumf %12, %3 : vector<1024x128xf32>
    %14 = vector.broadcast %cst_11 : f32 to vector<1024x128xf32>
    %15 = arith.minimumf %14, %13 : vector<1024x128xf32>
    %16 = arith.divf %15, %11 : vector<1024x128xf32>
    %17 = math.log %16 : vector<1024x128xf32>
    %18 = arith.mulf %15, %17 : vector<1024x128xf32>
    %c0_i32 = arith.constant 0 : i32
    %19 = arith.cmpi eq, %arg1, %c0_i32 : i32
    %20 = arith.extui %19 : i1 to i32
    %c0_i32_12 = arith.constant 0 : i32
    %21 = arith.cmpi ne, %20, %c0_i32_12 : i32
    scf.if %21 {
      %cst_23 = arith.constant 0.000000e+00 : f32
      %31 = vector.broadcast %cst_23 : f32 to vector<1024x128xf32>
      %c0_24 = arith.constant 0 : index
      %c0_25 = arith.constant 0 : index
      %32 = vector.load %arg9[%c0_24, %c0_25] : memref<1024x128xf32, #tpu.memory_space<vmem>>, vector<1024x128xf32>
      tpu.vector_store %arg9[%c0_24, %c0_25], %31 {strides = array<i32>} : memref<1024x128xf32, #tpu.memory_space<vmem>>, vector<1024x128xf32>,
      %cst_26 = arith.constant 0.000000e+00 : f32
      %33 = vector.broadcast %cst_26 : f32 to vector<1024x128xf32>
      %c0_27 = arith.constant 0 : index
      %c0_28 = arith.constant 0 : index
      %34 = vector.load %arg10[%c0_27, %c0_28] : memref<1024x128xf32, #tpu.memory_space<vmem>>, vector<1024x128xf32>
      tpu.vector_store %arg10[%c0_27, %c0_28], %33 {strides = array<i32>} : memref<1024x128xf32, #tpu.memory_space<vmem>>, vector<1024x128xf32>,
    } else {
    }
    %c0_13 = arith.constant 0 : index
    %c0_14 = arith.constant 0 : index
    %22 = vector.load %arg9[%c0_13, %c0_14] : memref<1024x128xf32, #tpu.memory_space<vmem>>, vector<1024x128xf32>
    %23 = arith.addf %22, %7 : vector<1024x128xf32>
    %c0_15 = arith.constant 0 : index
    %c0_16 = arith.constant 0 : index
    %24 = vector.load %arg9[%c0_15, %c0_16] : memref<1024x128xf32, #tpu.memory_space<vmem>>, vector<1024x128xf32>
    tpu.vector_store %arg9[%c0_15, %c0_16], %23 {strides = array<i32>} : memref<1024x128xf32, #tpu.memory_space<vmem>>, vector<1024x128xf32>,
    %c0_17 = arith.constant 0 : index
    %c0_18 = arith.constant 0 : index
    %25 = vector.load %arg10[%c0_17, %c0_18] : memref<1024x128xf32, #tpu.memory_space<vmem>>, vector<1024x128xf32>
    %26 = arith.addf %25, %18 : vector<1024x128xf32>
    %c0_19 = arith.constant 0 : index
    %c0_20 = arith.constant 0 : index
    %27 = vector.load %arg10[%c0_19, %c0_20] : memref<1024x128xf32, #tpu.memory_space<vmem>>, vector<1024x128xf32>
    tpu.vector_store %arg10[%c0_19, %c0_20], %26 {strides = array<i32>} : memref<1024x128xf32, #tpu.memory_space<vmem>>, vector<1024x128xf32>,
    %c0_i32_21 = arith.constant 0 : i32
    %28 = arith.cmpi eq, %arg1, %c0_i32_21 : i32
    %29 = arith.extui %28 : i1 to i32
    %c0_i32_22 = arith.constant 0 : i32
    %30 = arith.cmpi ne, %29, %c0_i32_22 : i32
    scf.if %30 {
      %c0_23 = arith.constant 0 : index
      %c0_24 = arith.constant 0 : index
      %31 = vector.load %arg9[%c0_23, %c0_24] : memref<1024x128xf32, #tpu.memory_space<vmem>>, vector<1024x128xf32>
      %32 = vector.shape_cast %31 : vector<1024x128xf32> to vector<1x1024x128xf32>
      %cst_25 = arith.constant dense<0.000000e+00> : vector<1xf32>
      %33 = vector.multi_reduction <add>, %32, %cst_25 [1, 2] : vector<1x1024x128xf32> to vector<1xf32>
      %34 = vector.shape_cast %33 : vector<1xf32> to vector<1x1x1xf32>
      %35 = vector.extract %34[0, 0, 0] : f32 from vector<1x1x1xf32>
      %c0_26 = arith.constant 0 : index
      %c0_27 = arith.constant 0 : index
      %36 = memref.load %arg7[%c0_26, %c0_27] : memref<1x1xf32, #tpu.memory_space<smem>>
      memref.store %35, %arg7[%c0_26, %c0_27] : memref<1x1xf32, #tpu.memory_space<smem>>
      %c0_28 = arith.constant 0 : index
      %c0_29 = arith.constant 0 : index
      %37 = vector.load %arg10[%c0_28, %c0_29] : memref<1024x128xf32, #tpu.memory_space<vmem>>, vector<1024x128xf32>
      %38 = vector.shape_cast %37 : vector<1024x128xf32> to vector<1x1024x128xf32>
      %cst_30 = arith.constant dense<0.000000e+00> : vector<1xf32>
      %39 = vector.multi_reduction <add>, %38, %cst_30 [1, 2] : vector<1x1024x128xf32> to vector<1xf32>
      %40 = vector.shape_cast %39 : vector<1xf32> to vector<1x1x1xf32>
      %41 = vector.extract %40[0, 0, 0] : f32 from vector<1x1x1xf32>
      %c0_31 = arith.constant 0 : index
      %c0_32 = arith.constant 0 : index
      %42 = memref.load %arg8[%c0_31, %c0_32] : memref<1x1xf32, #tpu.memory_space<smem>>
      memref.store %41, %arg8[%c0_31, %c0_32] : memref<1x1xf32, #tpu.memory_space<smem>>
    } else {
    }
    return
  }
  func.func @transform_0(%arg0: i32, %arg1: i32) -> (i32, i32) {
    %c1_i32 = arith.constant 1 : i32
    %0 = arith.muli %arg0, %c1_i32 : i32
    %1 = arith.addi %0, %arg1 : i32
    %c0_i32 = arith.constant 0 : i32
    %2 = arith.minsi %1, %c0_i32 : i32
    %c0_i32_0 = arith.constant 0 : i32
    %c0_i32_1 = arith.constant 0 : i32
    return %2, %c0_i32_0 : i32, i32
  }
  func.func @transform_1(%arg0: i32, %arg1: i32) -> (i32, i32) {
    %c1_i32 = arith.constant 1 : i32
    %0 = arith.muli %arg0, %c1_i32 : i32
    %1 = arith.addi %0, %arg1 : i32
    %c0_i32 = arith.constant 0 : i32
    %2 = arith.minsi %1, %c0_i32 : i32
    %c0_i32_0 = arith.constant 0 : i32
    %c0_i32_1 = arith.constant 0 : i32
    return %2, %c0_i32_0 : i32, i32
  }
  func.func @transform_2(%arg0: i32, %arg1: i32) -> (i32, i32) {
    %c1_i32 = arith.constant 1 : i32
    %0 = arith.muli %arg0, %c1_i32 : i32
    %1 = arith.addi %0, %arg1 : i32
    %c0_i32 = arith.constant 0 : i32
    %2 = arith.minsi %1, %c0_i32 : i32
    %c0_i32_0 = arith.constant 0 : i32
    %c0_i32_1 = arith.constant 0 : i32
    return %2, %c0_i32_0 : i32, i32
  }
  func.func @transform_3(%arg0: i32, %arg1: i32) -> (i32, i32) {
    %c1_i32 = arith.constant 1 : i32
    %0 = arith.muli %arg0, %c1_i32 : i32
    %1 = arith.addi %0, %arg1 : i32
    %c0_i32 = arith.constant 0 : i32
    %2 = arith.minsi %1, %c0_i32 : i32
    %c0_i32_0 = arith.constant 0 : i32
    %c0_i32_1 = arith.constant 0 : i32
    return %2, %c0_i32_0 : i32, i32
  }
  func.func @transform_4(%arg0: i32, %arg1: i32) -> (i32, i32) {
    %c1_i32 = arith.constant 1 : i32
    %0 = arith.muli %arg0, %c1_i32 : i32
    %1 = arith.addi %0, %arg1 : i32
    %c0_i32 = arith.constant 0 : i32
    %2 = arith.minsi %1, %c0_i32 : i32
    %c0_i32_0 = arith.constant 0 : i32
    %c0_i32_1 = arith.constant 0 : i32
    return %2, %c0_i32_0 : i32, i32
  }
  func.func @transform_5(%arg0: i32, %arg1: i32) -> (i32, i32) {
    %c0_i32 = arith.constant 0 : i32
    %c0_i32_0 = arith.constant 0 : i32
    return %arg0, %c0_i32 : i32, i32
  }
  func.func @transform_6(%arg0: i32, %arg1: i32) -> (i32, i32) {
    %c0_i32 = arith.constant 0 : i32
    %c0_i32_0 = arith.constant 0 : i32
    return %arg0, %c0_i32 : i32, i32
  }
}

</mosaic_0001>

<llo_original>
// kernel: tpu_custom_call.1
$region0: #{tpu_custom_call.1}
  #allocation0 [shape = 'u32[]', space=smem, size = 0x4, offset = 0x4, fixed_abs, tag = 'smem constant byte address 0x4 - core index']
  #allocation1 [shape = 'u32[144,128]{1,0:T(1,128)}', space=vmem, size = 0x12000, scoped, tag = 'internal scratch']
  #allocation2 [shape = 'f32[1024,128]{1,0:T(8,128)}', space=vmem, size = 0x80000, scoped, tag = 'scratch operand']
  #allocation3 [shape = 'f32[1024,128]{1,0:T(8,128)}', space=vmem, size = 0x80000, scoped, tag = 'scratch operand']
  %s0 = inlined_call_operand.hbm [shape: f32[1024,128], index: 0, kind: input, shape index: {}]
  %s1 = inlined_call_operand.hbm [shape: f32[1024,128], index: 1, kind: input, shape index: {}]
  %s2 = inlined_call_operand.hbm [shape: f32[1024,128], index: 2, kind: input, shape index: {}]
  %s3 = inlined_call_operand.hbm [shape: f32[1024,128], index: 3, kind: input, shape index: {}]
  %s4 = inlined_call_operand.hbm [shape: f32[1024,128], index: 4, kind: input, shape index: {}]
  %s5 = inlined_call_operand.hbm [shape: f32[1,1], index: 5, kind: output, shape index: {0}]
  %s6 = inlined_call_operand.hbm [shape: f32[1,1], index: 6, kind: output, shape index: {1}]
  %7 = xla_tuple %s5, %s6
  %s8 = sld [smem:[#allocation0]]
  $region66: #{tpu_custom_call.1} parent=0
    _
  %s10 = ssub.s32 1, %s8
  %s11 = scalar_select 0, %s10, %s8
  $region1: #{tpu_custom_call.1} parent=0
    #allocation4 [shape = 'u8[524288]{0}', space=vmem, size = 0x80000, scoped, tag = 'input window, operand 0, single buffered']
    #allocation5 [shape = 's32[1]{0}', space=sflag, size = 0x4, scoped, tag = 'scoped memory for tpu_custom_call.1']
    #allocation6 [shape = 's32[1]{0}', space=sflag, size = 0x4, scoped, tag = 'scoped memory for tpu_custom_call.1']
    #allocation7 [shape = 'u8[524288]{0}', space=vmem, size = 0x80000, scoped, tag = 'input window, operand 1, single buffered']
    #allocation8 [shape = 's32[1]{0}', space=sflag, size = 0x4, scoped, tag = 'scoped memory for tpu_custom_call.1']
    #allocation9 [shape = 'u8[524288]{0}', space=vmem, size = 0x80000, scoped, tag = 'input window, operand 2, single buffered']
    #allocation10 [shape = 'u8[524288]{0}', space=vmem, size = 0x80000, scoped, tag = 'input window, operand 3, single buffered']
    #allocation11 [shape = 's32[1]{0}', space=sflag, size = 0x4, scoped, tag = 'scoped memory for tpu_custom_call.1']
    #allocation12 [shape = 'u8[524288]{0}', space=vmem, size = 0x80000, scoped, tag = 'input window, operand 4, single buffered']
    #allocation13 [shape = 'u8[512]{0}', space=smem, size = 0x200, scoped, tag = 'output window, operand 0, single buffered']
    #allocation14 [shape = 'u8[512]{0}', space=smem, size = 0x200, scoped, tag = 'output window, operand 1, single buffered']
    #allocation15 [shape = 's32[1]{0}', space=sflag, size = 0x4, scoped, tag = 'scoped memory for tpu_custom_call.1']
    %12 = vsyncpa [#allocation5], 0
    %13 = vsyncpa [#allocation8], 0
    %14 = vsyncpa [#allocation11], 0
    %15 = vsyncpa [#allocation6], 0
    %16 = vsyncpa [#allocation15], 0
    // Predicated region
    $region2: #{tpu_custom_call.1} parent=1 // pred_check
      _
    $region3: #{tpu_custom_call.1} parent=1 // pred_check_branch
      %18 = sbr.rel (0) target = $region5
    $region4: #{tpu_custom_call.1} parent=1 // pred_region
      %s19 = sadd.s32 0, 0
      %p20 = scmp.lt.s32.totalorder %s19, 0
      %s21 = scalar_select %p20, %s19, 0
      %s22 = smul.u32 128, %s21
      %s24 = ssub.s32 16384, 16384
      %25 = vsyncadd [#allocation5], %s24
      %s26 = smul.addr %s22, 128
      %s27 = scalar_lea.hbm %s0, %s26
      %s28 = sshll.u32 [#allocation4], 4
      %s29 = int_to_ptr.vmem [resolvable:$true] %s28
      %34 = dma.hbm_to_vmem [thread:$0]  %s27, 16384, %s29, [#allocation5], 128, 128, 8
    $region5: #{tpu_custom_call.1} parent=1 // pred_fallthru
      _
    // Predicated region
    $region6: #{tpu_custom_call.1} parent=1 // pred_check
      _
    $region7: #{tpu_custom_call.1} parent=1 // pred_check_branch
      %36 = sbr.rel (0) target = $region9
    $region8: #{tpu_custom_call.1} parent=1 // pred_region
      %s37 = sadd.s32 0, 0
      %p38 = scmp.lt.s32.totalorder %s37, 0
      %s39 = scalar_select %p38, %s37, 0
      %s40 = smul.u32 128, %s39
      %s42 = ssub.s32 16384, 16384
      %43 = vsyncadd [#allocation8], %s42
      %s44 = smul.addr %s40, 128
      %s45 = scalar_lea.hbm %s1, %s44
      %s46 = sshll.u32 [#allocation7], 4
      %s47 = int_to_ptr.vmem [resolvable:$true] %s46
      %52 = dma.hbm_to_vmem [thread:$0]  %s45, 16384, %s47, [#allocation8], 128, 128, 8
    $region9: #{tpu_custom_call.1} parent=1 // pred_fallthru
      _
    // Predicated region
    $region10: #{tpu_custom_call.1} parent=1 // pred_check
      _
    $region11: #{tpu_custom_call.1} parent=1 // pred_check_branch
      %54 = sbr.rel (0) target = $region13
    $region12: #{tpu_custom_call.1} parent=1 // pred_region
      %s55 = sadd.s32 0, 0
      %p56 = scmp.lt.s32.totalorder %s55, 0
      %s57 = scalar_select %p56, %s55, 0
      %s58 = smul.u32 128, %s57
      %s60 = ssub.s32 16384, 16384
      %61 = vsyncadd [#allocation8], %s60
      %s62 = smul.addr %s58, 128
      %s63 = scalar_lea.hbm %s2, %s62
      %s64 = sshll.u32 [#allocation9], 4
      %s65 = int_to_ptr.vmem [resolvable:$true] %s64
      %70 = dma.hbm_to_vmem [thread:$0]  %s63, 16384, %s65, [#allocation8], 128, 128, 8
    $region13: #{tpu_custom_call.1} parent=1 // pred_fallthru
      _
    // Predicated region
    $region14: #{tpu_custom_call.1} parent=1 // pred_check
      _
    $region15: #{tpu_custom_call.1} parent=1 // pred_check_branch
      %72 = sbr.rel (0) target = $region17
    $region16: #{tpu_custom_call.1} parent=1 // pred_region
      %s73 = sadd.s32 0, 0
      %p74 = scmp.lt.s32.totalorder %s73, 0
      %s75 = scalar_select %p74, %s73, 0
      %s76 = smul.u32 128, %s75
      %s78 = ssub.s32 16384, 16384
      %79 = vsyncadd [#allocation11], %s78
      %s80 = smul.addr %s76, 128
      %s81 = scalar_lea.hbm %s3, %s80
      %s82 = sshll.u32 [#allocation10], 4
      %s83 = int_to_ptr.vmem [resolvable:$true] %s82
      %88 = dma.hbm_to_vmem [thread:$0]  %s81, 16384, %s83, [#allocation11], 128, 128, 8
    $region17: #{tpu_custom_call.1} parent=1 // pred_fallthru
      _
    // Predicated region
    $region18: #{tpu_custom_call.1} parent=1 // pred_check
      _
    $region19: #{tpu_custom_call.1} parent=1 // pred_check_branch
      %90 = sbr.rel (0) target = $region21
    $region20: #{tpu_custom_call.1} parent=1 // pred_region
      %s91 = sadd.s32 0, 0
      %p92 = scmp.lt.s32.totalorder %s91, 0
      %s93 = scalar_select %p92, %s91, 0
      %s94 = smul.u32 128, %s93
      %s96 = ssub.s32 16384, 16384
      %97 = vsyncadd [#allocation11], %s96
      %s98 = smul.addr %s94, 128
      %s99 = scalar_lea.hbm %s4, %s98
      %s100 = sshll.u32 [#allocation12], 4
      %s101 = int_to_ptr.vmem [resolvable:$true] %s100
      %106 = dma.hbm_to_vmem [thread:$0]  %s99, 16384, %s101, [#allocation11], 128, 128, 8
    $region21: #{tpu_custom_call.1} parent=1 // pred_fallthru
      _
    // Predicated region
    $region22: #{tpu_custom_call.1} parent=1 // pred_check
      _
    $region23: #{tpu_custom_call.1} parent=1 // pred_check_branch
      %108 = sbr.rel (0) target = $region25
    $region24: #{tpu_custom_call.1} parent=1 // pred_region
      %109 = dma.done [#allocation5], 16384
    $region25: #{tpu_custom_call.1} parent=1 // pred_fallthru
      _
    // Predicated region
    $region26: #{tpu_custom_call.1} parent=1 // pred_check
      _
    $region27: #{tpu_custom_call.1} parent=1 // pred_check_branch
      %111 = sbr.rel (0) target = $region29
    $region28: #{tpu_custom_call.1} parent=1 // pred_region
      %112 = dma.done [#allocation8], 16384
    $region29: #{tpu_custom_call.1} parent=1 // pred_fallthru
      _
    // Predicated region
    $region30: #{tpu_custom_call.1} parent=1 // pred_check
      _
    $region31: #{tpu_custom_call.1} parent=1 // pred_check_branch
      %114 = sbr.rel (0) target = $region33
    $region32: #{tpu_custom_call.1} parent=1 // pred_region
      %115 = dma.done [#allocation8], 16384
    $region33: #{tpu_custom_call.1} parent=1 // pred_fallthru
      _
    // Predicated region
    $region34: #{tpu_custom_call.1} parent=1 // pred_check
      _
    $region35: #{tpu_custom_call.1} parent=1 // pred_check_branch
      %117 = sbr.rel (0) target = $region37
    $region36: #{tpu_custom_call.1} parent=1 // pred_region
      %118 = dma.done [#allocation11], 16384
    $region37: #{tpu_custom_call.1} parent=1 // pred_fallthru
      _
    // Predicated region
    $region38: #{tpu_custom_call.1} parent=1 // pred_check
      _
    $region39: #{tpu_custom_call.1} parent=1 // pred_check_branch
      %120 = sbr.rel (0) target = $region41
    $region40: #{tpu_custom_call.1} parent=1 // pred_region
      %121 = dma.done [#allocation11], 16384
    $region41: #{tpu_custom_call.1} parent=1 // pred_fallthru
      _
    %s122 = sadd.s32 0, 0
    %p123 = scmp.lt.s32.totalorder %s122, 0
    %s124 = scalar_select %p123, %s122, 0
    %s125 = smul.u32 128, %s124
    %s126 = sadd.s32 0, 0
    %p127 = scmp.lt.s32.totalorder %s126, 0
    %s128 = scalar_select %p127, %s126, 0
    %s129 = smul.u32 128, %s128
    %s130 = sadd.s32 0, 0
    %p131 = scmp.lt.s32.totalorder %s130, 0
    %s132 = scalar_select %p131, %s130, 0
    %s133 = smul.u32 128, %s132
    %s134 = sadd.s32 0, 0
    %p135 = scmp.lt.s32.totalorder %s134, 0
    %s136 = scalar_select %p135, %s134, 0
    %s137 = smul.u32 128, %s136
    %s138 = sadd.s32 0, 0
    %p139 = scmp.lt.s32.totalorder %s138, 0
    %s140 = scalar_select %p139, %s138, 0
    %s141 = smul.u32 128, %s140
    %v142 = vld [vmem:[#allocation4] sm:$0xff]
    %v143 = vld [vmem:[#allocation4 + $0x8] sm:$0xff]
    %v144 = vld [vmem:[#allocation4 + $0x10] sm:$0xff]
    %v145 = vld [vmem:[#allocation4 + $0x18] sm:$0xff]
    %v146 = vld [vmem:[#allocation4 + $0x20] sm:$0xff]
    %v147 = vld [vmem:[#allocation4 + $0x28] sm:$0xff]
    %v148 = vld [vmem:[#allocation4 + $0x30] sm:$0xff]
    %v149 = vld [vmem:[#allocation4 + $0x38] sm:$0xff]
    %v150 = vld [vmem:[#allocation4 + $0x40] sm:$0xff]
    %v151 = vld [vmem:[#allocation4 + $0x48] sm:$0xff]
    %v152 = vld [vmem:[#allocation4 + $0x50] sm:$0xff]
    %v153 = vld [vmem:[#allocation4 + $0x58] sm:$0xff]
    %v154 = vld [vmem:[#allocation4 + $0x60] sm:$0xff]
    %v155 = vld [vmem:[#allocation4 + $0x68] sm:$0xff]
    %v156 = vld [vmem:[#allocation4 + $0x70] sm:$0xff]
    %v157 = vld [vmem:[#allocation4 + $0x78] sm:$0xff]
    %v158 = vld [vmem:[#allocation4 + $0x80] sm:$0xff]
    %v159 = vld [vmem:[#allocation4 + $0x88] sm:$0xff]
    %v160 = vld [vmem:[#allocation4 + $0x90] sm:$0xff]
    %v161 = vld [vmem:[#allocation4 + $0x98] sm:$0xff]
    %v162 = vld [vmem:[#allocation4 + $0xa0] sm:$0xff]
    %v163 = vld [vmem:[#allocation4 + $0xa8] sm:$0xff]
    %v164 = vld [vmem:[#allocation4 + $0xb0] sm:$0xff]
    %v165 = vld [vmem:[#allocation4 + $0xb8] sm:$0xff]
    %v166 = vld [vmem:[#allocation4 + $0xc0] sm:$0xff]
    %v167 = vld [vmem:[#allocation4 + $0xc8] sm:$0xff]
    %v168 = vld [vmem:[#allocation4 + $0xd0] sm:$0xff]
    %v169 = vld [vmem:[#allocation4 + $0xd8] sm:$0xff]
    %v170 = vld [vmem:[#allocation4 + $0xe0] sm:$0xff]
    %v171 = vld [vmem:[#allocation4 + $0xe8] sm:$0xff]
    %v172 = vld [vmem:[#allocation4 + $0xf0] sm:$0xff]
    %v173 = vld [vmem:[#allocation4 + $0xf8] sm:$0xff]
    %v174 = vld [vmem:[#allocation4 + $0x100] sm:$0xff]
    %v175 = vld [vmem:[#allocation4 + $0x108] sm:$0xff]
    %v176 = vld [vmem:[#allocation4 + $0x110] sm:$0xff]
    %v177 = vld [vmem:[#allocation4 + $0x118] sm:$0xff]
    %v178 = vld [vmem:[#allocation4 + $0x120] sm:$0xff]
    %v179 = vld [vmem:[#allocation4 + $0x128] sm:$0xff]
    %v180 = vld [vmem:[#allocation4 + $0x130] sm:$0xff]
    %v181 = vld [vmem:[#allocation4 + $0x138] sm:$0xff]
    %v182 = vld [vmem:[#allocation4 + $0x140] sm:$0xff]
    %v183 = vld [vmem:[#allocation4 + $0x148] sm:$0xff]
    %v184 = vld [vmem:[#allocation4 + $0x150] sm:$0xff]
    %v185 = vld [vmem:[#allocation4 + $0x158] sm:$0xff]
    %v186 = vld [vmem:[#allocation4 + $0x160] sm:$0xff]
    %v187 = vld [vmem:[#allocation4 + $0x168] sm:$0xff]
    %v188 = vld [vmem:[#allocation4 + $0x170] sm:$0xff]
    %v189 = vld [vmem:[#allocation4 + $0x178] sm:$0xff]
    %v190 = vld [vmem:[#allocation4 + $0x180] sm:$0xff]
    %v191 = vld [vmem:[#allocation4 + $0x188] sm:$0xff]
    %v192 = vld [vmem:[#allocation4 + $0x190] sm:$0xff]
    %v193 = vld [vmem:[#allocation4 + $0x198] sm:$0xff]
    %v194 = vld [vmem:[#allocation4 + $0x1a0] sm:$0xff]
    %v195 = vld [vmem:[#allocation4 + $0x1a8] sm:$0xff]
    %v196 = vld [vmem:[#allocation4 + $0x1b0] sm:$0xff]
    %v197 = vld [vmem:[#allocation4 + $0x1b8] sm:$0xff]
    %v198 = vld [vmem:[#allocation4 + $0x1c0] sm:$0xff]
    %v199 = vld [vmem:[#allocation4 + $0x1c8] sm:$0xff]
    %v200 = vld [vmem:[#allocation4 + $0x1d0] sm:$0xff]
    %v201 = vld [vmem:[#allocation4 + $0x1d8] sm:$0xff]
    %v202 = vld [vmem:[#allocation4 + $0x1e0] sm:$0xff]
    %v203 = vld [vmem:[#allocation4 + $0x1e8] sm:$0xff]
    %v204 = vld [vmem:[#allocation4 + $0x1f0] sm:$0xff]
    %v205 = vld [vmem:[#allocation4 + $0x1f8] sm:$0xff]
    %v206 = vld [vmem:[#allocation4 + $0x200] sm:$0xff]
    %v207 = vld [vmem:[#allocation4 + $0x208] sm:$0xff]
    %v208 = vld [vmem:[#allocation4 + $0x210] sm:$0xff]
    %v209 = vld [vmem:[#allocation4 + $0x218] sm:$0xff]
    %v210 = vld [vmem:[#allocation4 + $0x220] sm:$0xff]
    %v211 = vld [vmem:[#allocation4 + $0x228] sm:$0xff]
    %v212 = vld [vmem:[#allocation4 + $0x230] sm:$0xff]
    %v213 = vld [vmem:[#allocation4 + $0x238] sm:$0xff]
    %v214 = vld [vmem:[#allocation4 + $0x240] sm:$0xff]
    %v215 = vld [vmem:[#allocation4 + $0x248] sm:$0xff]
    %v216 = vld [vmem:[#allocation4 + $0x250] sm:$0xff]
    %v217 = vld [vmem:[#allocation4 + $0x258] sm:$0xff]
    %v218 = vld [vmem:[#allocation4 + $0x260] sm:$0xff]
    %v219 = vld [vmem:[#allocation4 + $0x268] sm:$0xff]
    %v220 = vld [vmem:[#allocation4 + $0x270] sm:$0xff]
    %v221 = vld [vmem:[#allocation4 + $0x278] sm:$0xff]
    %v222 = vld [vmem:[#allocation4 + $0x280] sm:$0xff]
    %v223 = vld [vmem:[#allocation4 + $0x288] sm:$0xff]
    %v224 = vld [vmem:[#allocation4 + $0x290] sm:$0xff]
    %v225 = vld [vmem:[#allocation4 + $0x298] sm:$0xff]
    %v226 = vld [vmem:[#allocation4 + $0x2a0] sm:$0xff]
    %v227 = vld [vmem:[#allocation4 + $0x2a8] sm:$0xff]
    %v228 = vld [vmem:[#allocation4 + $0x2b0] sm:$0xff]
    %v229 = vld [vmem:[#allocation4 + $0x2b8] sm:$0xff]
    %v230 = vld [vmem:[#allocation4 + $0x2c0] sm:$0xff]
    %v231 = vld [vmem:[#allocation4 + $0x2c8] sm:$0xff]
    %v232 = vld [vmem:[#allocation4 + $0x2d0] sm:$0xff]
    %v233 = vld [vmem:[#allocation4 + $0x2d8] sm:$0xff]
    %v234 = vld [vmem:[#allocation4 + $0x2e0] sm:$0xff]
    %v235 = vld [vmem:[#allocation4 + $0x2e8] sm:$0xff]
    %v236 = vld [vmem:[#allocation4 + $0x2f0] sm:$0xff]
    %v237 = vld [vmem:[#allocation4 + $0x2f8] sm:$0xff]
    %v238 = vld [vmem:[#allocation4 + $0x300] sm:$0xff]
    %v239 = vld [vmem:[#allocation4 + $0x308] sm:$0xff]
    %v240 = vld [vmem:[#allocation4 + $0x310] sm:$0xff]
    %v241 = vld [vmem:[#allocation4 + $0x318] sm:$0xff]
    %v242 = vld [vmem:[#allocation4 + $0x320] sm:$0xff]
    %v243 = vld [vmem:[#allocation4 + $0x328] sm:$0xff]
    %v244 = vld [vmem:[#allocation4 + $0x330] sm:$0xff]
    %v245 = vld [vmem:[#allocation4 + $0x338] sm:$0xff]
    %v246 = vld [vmem:[#allocation4 + $0x340] sm:$0xff]
    %v247 = vld [vmem:[#allocation4 + $0x348] sm:$0xff]
    %v248 = vld [vmem:[#allocation4 + $0x350] sm:$0xff]
    %v249 = vld [vmem:[#allocation4 + $0x358] sm:$0xff]
    %v250 = vld [vmem:[#allocation4 + $0x360] sm:$0xff]
    %v251 = vld [vmem:[#allocation4 + $0x368] sm:$0xff]
    %v252 = vld [vmem:[#allocation4 + $0x370] sm:$0xff]
    %v253 = vld [vmem:[#allocation4 + $0x378] sm:$0xff]
    %v254 = vld [vmem:[#allocation4 + $0x380] sm:$0xff]
    %v255 = vld [vmem:[#allocation4 + $0x388] sm:$0xff]
    %v256 = vld [vmem:[#allocation4 + $0x390] sm:$0xff]
    %v257 = vld [vmem:[#allocation4 + $0x398] sm:$0xff]
    %v258 = vld [vmem:[#allocation4 + $0x3a0] sm:$0xff]
    %v259 = vld [vmem:[#allocation4 + $0x3a8] sm:$0xff]
    %v260 = vld [vmem:[#allocation4 + $0x3b0] sm:$0xff]
    %v261 = vld [vmem:[#allocation4 + $0x3b8] sm:$0xff]
    %v262 = vld [vmem:[#allocation4 + $0x3c0] sm:$0xff]
    %v263 = vld [vmem:[#allocation4 + $0x3c8] sm:$0xff]
    %v264 = vld [vmem:[#allocation4 + $0x3d0] sm:$0xff]
    %v265 = vld [vmem:[#allocation4 + $0x3d8] sm:$0xff]
    %v266 = vld [vmem:[#allocation4 + $0x3e0] sm:$0xff]
    %v267 = vld [vmem:[#allocation4 + $0x3e8] sm:$0xff]
    %v268 = vld [vmem:[#allocation4 + $0x3f0] sm:$0xff]
    %v269 = vld [vmem:[#allocation4 + $0x3f8] sm:$0xff]
    %v270 = vld [vmem:[#allocation7] sm:$0xff]
    %v271 = vld [vmem:[#allocation7 + $0x8] sm:$0xff]
    %v272 = vld [vmem:[#allocation7 + $0x10] sm:$0xff]
    %v273 = vld [vmem:[#allocation7 + $0x18] sm:$0xff]
    %v274 = vld [vmem:[#allocation7 + $0x20] sm:$0xff]
    %v275 = vld [vmem:[#allocation7 + $0x28] sm:$0xff]
    %v276 = vld [vmem:[#allocation7 + $0x30] sm:$0xff]
    %v277 = vld [vmem:[#allocation7 + $0x38] sm:$0xff]
    %v278 = vld [vmem:[#allocation7 + $0x40] sm:$0xff]
    %v279 = vld [vmem:[#allocation7 + $0x48] sm:$0xff]
    %v280 = vld [vmem:[#allocation7 + $0x50] sm:$0xff]
    %v281 = vld [vmem:[#allocation7 + $0x58] sm:$0xff]
    %v282 = vld [vmem:[#allocation7 + $0x60] sm:$0xff]
    %v283 = vld [vmem:[#allocation7 + $0x68] sm:$0xff]
    %v284 = vld [vmem:[#allocation7 + $0x70] sm:$0xff]
    %v285 = vld [vmem:[#allocation7 + $0x78] sm:$0xff]
    %v286 = vld [vmem:[#allocation7 + $0x80] sm:$0xff]
    %v287 = vld [vmem:[#allocation7 + $0x88] sm:$0xff]
    %v288 = vld [vmem:[#allocation7 + $0x90] sm:$0xff]
    %v289 = vld [vmem:[#allocation7 + $0x98] sm:$0xff]
    %v290 = vld [vmem:[#allocation7 + $0xa0] sm:$0xff]
    %v291 = vld [vmem:[#allocation7 + $0xa8] sm:$0xff]
    %v292 = vld [vmem:[#allocation7 + $0xb0] sm:$0xff]
    %v293 = vld [vmem:[#allocation7 + $0xb8] sm:$0xff]
    %v294 = vld [vmem:[#allocation7 + $0xc0] sm:$0xff]
    %v295 = vld [vmem:[#allocation7 + $0xc8] sm:$0xff]
    %v296 = vld [vmem:[#allocation7 + $0xd0] sm:$0xff]
    %v297 = vld [vmem:[#allocation7 + $0xd8] sm:$0xff]
    %v298 = vld [vmem:[#allocation7 + $0xe0] sm:$0xff]
    %v299 = vld [vmem:[#allocation7 + $0xe8] sm:$0xff]
    %v300 = vld [vmem:[#allocation7 + $0xf0] sm:$0xff]
    %v301 = vld [vmem:[#allocation7 + $0xf8] sm:$0xff]
    %v302 = vld [vmem:[#allocation7 + $0x100] sm:$0xff]
    %v303 = vld [vmem:[#allocation7 + $0x108] sm:$0xff]
    %v304 = vld [vmem:[#allocation7 + $0x110] sm:$0xff]
    %v305 = vld [vmem:[#allocation7 + $0x118] sm:$0xff]
    %v306 = vld [vmem:[#allocation7 + $0x120] sm:$0xff]
    %v307 = vld [vmem:[#allocation7 + $0x128] sm:$0xff]
    %v308 = vld [vmem:[#allocation7 + $0x130] sm:$0xff]
    %v309 = vld [vmem:[#allocation7 + $0x138] sm:$0xff]
    %v310 = vld [vmem:[#allocation7 + $0x140] sm:$0xff]
    %v311 = vld [vmem:[#allocation7 + $0x148] sm:$0xff]
    %v312 = vld [vmem:[#allocation7 + $0x150] sm:$0xff]
    %v313 = vld [vmem:[#allocation7 + $0x158] sm:$0xff]
    %v314 = vld [vmem:[#allocation7 + $0x160] sm:$0xff]
    %v315 = vld [vmem:[#allocation7 + $0x168] sm:$0xff]
    %v316 = vld [vmem:[#allocation7 + $0x170] sm:$0xff]
    %v317 = vld [vmem:[#allocation7 + $0x178] sm:$0xff]
    %v318 = vld [vmem:[#allocation7 + $0x180] sm:$0xff]
    %v319 = vld [vmem:[#allocation7 + $0x188] sm:$0xff]
    %v320 = vld [vmem:[#allocation7 + $0x190] sm:$0xff]
    %v321 = vld [vmem:[#allocation7 + $0x198] sm:$0xff]
    %v322 = vld [vmem:[#allocation7 + $0x1a0] sm:$0xff]
    %v323 = vld [vmem:[#allocation7 + $0x1a8] sm:$0xff]
    %v324 = vld [vmem:[#allocation7 + $0x1b0] sm:$0xff]
    %v325 = vld [vmem:[#allocation7 + $0x1b8] sm:$0xff]
    %v326 = vld [vmem:[#allocation7 + $0x1c0] sm:$0xff]
    %v327 = vld [vmem:[#allocation7 + $0x1c8] sm:$0xff]
    %v328 = vld [vmem:[#allocation7 + $0x1d0] sm:$0xff]
    %v329 = vld [vmem:[#allocation7 + $0x1d8] sm:$0xff]
    %v330 = vld [vmem:[#allocation7 + $0x1e0] sm:$0xff]
    %v331 = vld [vmem:[#allocation7 + $0x1e8] sm:$0xff]
    %v332 = vld [vmem:[#allocation7 + $0x1f0] sm:$0xff]
    %v333 = vld [vmem:[#allocation7 + $0x1f8] sm:$0xff]
    %v334 = vld [vmem:[#allocation7 + $0x200] sm:$0xff]
    %v335 = vld [vmem:[#allocation7 + $0x208] sm:$0xff]
    %v336 = vld [vmem:[#allocation7 + $0x210] sm:$0xff]
    %v337 = vld [vmem:[#allocation7 + $0x218] sm:$0xff]
    %v338 = vld [vmem:[#allocation7 + $0x220] sm:$0xff]
    %v339 = vld [vmem:[#allocation7 + $0x228] sm:$0xff]
    %v340 = vld [vmem:[#allocation7 + $0x230] sm:$0xff]
    %v341 = vld [vmem:[#allocation7 + $0x238] sm:$0xff]
    %v342 = vld [vmem:[#allocation7 + $0x240] sm:$0xff]
    %v343 = vld [vmem:[#allocation7 + $0x248] sm:$0xff]
    %v344 = vld [vmem:[#allocation7 + $0x250] sm:$0xff]
    %v345 = vld [vmem:[#allocation7 + $0x258] sm:$0xff]
    %v346 = vld [vmem:[#allocation7 + $0x260] sm:$0xff]
    %v347 = vld [vmem:[#allocation7 + $0x268] sm:$0xff]
    %v348 = vld [vmem:[#allocation7 + $0x270] sm:$0xff]
    %v349 = vld [vmem:[#allocation7 + $0x278] sm:$0xff]
    %v350 = vld [vmem:[#allocation7 + $0x280] sm:$0xff]
    %v351 = vld [vmem:[#allocation7 + $0x288] sm:$0xff]
    %v352 = vld [vmem:[#allocation7 + $0x290] sm:$0xff]
    %v353 = vld [vmem:[#allocation7 + $0x298] sm:$0xff]
    %v354 = vld [vmem:[#allocation7 + $0x2a0] sm:$0xff]
    %v355 = vld [vmem:[#allocation7 + $0x2a8] sm:$0xff]
    %v356 = vld [vmem:[#allocation7 + $0x2b0] sm:$0xff]
    %v357 = vld [vmem:[#allocation7 + $0x2b8] sm:$0xff]
    %v358 = vld [vmem:[#allocation7 + $0x2c0] sm:$0xff]
    %v359 = vld [vmem:[#allocation7 + $0x2c8] sm:$0xff]
    %v360 = vld [vmem:[#allocation7 + $0x2d0] sm:$0xff]
    %v361 = vld [vmem:[#allocation7 + $0x2d8] sm:$0xff]
    %v362 = vld [vmem:[#allocation7 + $0x2e0] sm:$0xff]
    %v363 = vld [vmem:[#allocation7 + $0x2e8] sm:$0xff]
    %v364 = vld [vmem:[#allocation7 + $0x2f0] sm:$0xff]
    %v365 = vld [vmem:[#allocation7 + $0x2f8] sm:$0xff]
    %v366 = vld [vmem:[#allocation7 + $0x300] sm:$0xff]
    %v367 = vld [vmem:[#allocation7 + $0x308] sm:$0xff]
    %v368 = vld [vmem:[#allocation7 + $0x310] sm:$0xff]
    %v369 = vld [vmem:[#allocation7 + $0x318] sm:$0xff]
    %v370 = vld [vmem:[#allocation7 + $0x320] sm:$0xff]
    %v371 = vld [vmem:[#allocation7 + $0x328] sm:$0xff]
    %v372 = vld [vmem:[#allocation7 + $0x330] sm:$0xff]
    %v373 = vld [vmem:[#allocation7 + $0x338] sm:$0xff]
    %v374 = vld [vmem:[#allocation7 + $0x340] sm:$0xff]
    %v375 = vld [vmem:[#allocation7 + $0x348] sm:$0xff]
    %v376 = vld [vmem:[#allocation7 + $0x350] sm:$0xff]
    %v377 = vld [vmem:[#allocation7 + $0x358] sm:$0xff]
    %v378 = vld [vmem:[#allocation7 + $0x360] sm:$0xff]
    %v379 = vld [vmem:[#allocation7 + $0x368] sm:$0xff]
    %v380 = vld [vmem:[#allocation7 + $0x370] sm:$0xff]
    %v381 = vld [vmem:[#allocation7 + $0x378] sm:$0xff]
    %v382 = vld [vmem:[#allocation7 + $0x380] sm:$0xff]
    %v383 = vld [vmem:[#allocation7 + $0x388] sm:$0xff]
    %v384 = vld [vmem:[#allocation7 + $0x390] sm:$0xff]
    %v385 = vld [vmem:[#allocation7 + $0x398] sm:$0xff]
    %v386 = vld [vmem:[#allocation7 + $0x3a0] sm:$0xff]
    %v387 = vld [vmem:[#allocation7 + $0x3a8] sm:$0xff]
    %v388 = vld [vmem:[#allocation7 + $0x3b0] sm:$0xff]
    %v389 = vld [vmem:[#allocation7 + $0x3b8] sm:$0xff]
    %v390 = vld [vmem:[#allocation7 + $0x3c0] sm:$0xff]
    %v391 = vld [vmem:[#allocation7 + $0x3c8] sm:$0xff]
    %v392 = vld [vmem:[#allocation7 + $0x3d0] sm:$0xff]
    %v393 = vld [vmem:[#allocation7 + $0x3d8] sm:$0xff]
    %v394 = vld [vmem:[#allocation7 + $0x3e0] sm:$0xff]
    %v395 = vld [vmem:[#allocation7 + $0x3e8] sm:$0xff]
    %v396 = vld [vmem:[#allocation7 + $0x3f0] sm:$0xff]
    %v397 = vld [vmem:[#allocation7 + $0x3f8] sm:$0xff]
    %v398 = vld [vmem:[#allocation9] sm:$0xff]
    %v399 = vld [vmem:[#allocation9 + $0x8] sm:$0xff]
    %v400 = vld [vmem:[#allocation9 + $0x10] sm:$0xff]
    %v401 = vld [vmem:[#allocation9 + $0x18] sm:$0xff]
    %v402 = vld [vmem:[#allocation9 + $0x20] sm:$0xff]
    %v403 = vld [vmem:[#allocation9 + $0x28] sm:$0xff]
    %v404 = vld [vmem:[#allocation9 + $0x30] sm:$0xff]
    %v405 = vld [vmem:[#allocation9 + $0x38] sm:$0xff]
    %v406 = vld [vmem:[#allocation9 + $0x40] sm:$0xff]
    %v407 = vld [vmem:[#allocation9 + $0x48] sm:$0xff]
    %v408 = vld [vmem:[#allocation9 + $0x50] sm:$0xff]
    %v409 = vld [vmem:[#allocation9 + $0x58] sm:$0xff]
    %v410 = vld [vmem:[#allocation9 + $0x60] sm:$0xff]
    %v411 = vld [vmem:[#allocation9 + $0x68] sm:$0xff]
    %v412 = vld [vmem:[#allocation9 + $0x70] sm:$0xff]
    %v413 = vld [vmem:[#allocation9 + $0x78] sm:$0xff]
    %v414 = vld [vmem:[#allocation9 + $0x80] sm:$0xff]
    %v415 = vld [vmem:[#allocation9 + $0x88] sm:$0xff]
    %v416 = vld [vmem:[#allocation9 + $0x90] sm:$0xff]
    %v417 = vld [vmem:[#allocation9 + $0x98] sm:$0xff]
    %v418 = vld [vmem:[#allocation9 + $0xa0] sm:$0xff]
    %v419 = vld [vmem:[#allocation9 + $0xa8] sm:$0xff]
    %v420 = vld [vmem:[#allocation9 + $0xb0] sm:$0xff]
    %v421 = vld [vmem:[#allocation9 + $0xb8] sm:$0xff]
    %v422 = vld [vmem:[#allocation9 + $0xc0] sm:$0xff]
    %v423 = vld [vmem:[#allocation9 + $0xc8] sm:$0xff]
    %v424 = vld [vmem:[#allocation9 + $0xd0] sm:$0xff]
    %v425 = vld [vmem:[#allocation9 + $0xd8] sm:$0xff]
    %v426 = vld [vmem:[#allocation9 + $0xe0] sm:$0xff]
    %v427 = vld [vmem:[#allocation9 + $0xe8] sm:$0xff]
    %v428 = vld [vmem:[#allocation9 + $0xf0] sm:$0xff]
    %v429 = vld [vmem:[#allocation9 + $0xf8] sm:$0xff]
    %v430 = vld [vmem:[#allocation9 + $0x100] sm:$0xff]
    %v431 = vld [vmem:[#allocation9 + $0x108] sm:$0xff]
    %v432 = vld [vmem:[#allocation9 + $0x110] sm:$0xff]
    %v433 = vld [vmem:[#allocation9 + $0x118] sm:$0xff]
    %v434 = vld [vmem:[#allocation9 + $0x120] sm:$0xff]
    %v435 = vld [vmem:[#allocation9 + $0x128] sm:$0xff]
    %v436 = vld [vmem:[#allocation9 + $0x130] sm:$0xff]
    %v437 = vld [vmem:[#allocation9 + $0x138] sm:$0xff]
    %v438 = vld [vmem:[#allocation9 + $0x140] sm:$0xff]
    %v439 = vld [vmem:[#allocation9 + $0x148] sm:$0xff]
    %v440 = vld [vmem:[#allocation9 + $0x150] sm:$0xff]
    %v441 = vld [vmem:[#allocation9 + $0x158] sm:$0xff]
    %v442 = vld [vmem:[#allocation9 + $0x160] sm:$0xff]
    %v443 = vld [vmem:[#allocation9 + $0x168] sm:$0xff]
    %v444 = vld [vmem:[#allocation9 + $0x170] sm:$0xff]
    %v445 = vld [vmem:[#allocation9 + $0x178] sm:$0xff]
    %v446 = vld [vmem:[#allocation9 + $0x180] sm:$0xff]
    %v447 = vld [vmem:[#allocation9 + $0x188] sm:$0xff]
    %v448 = vld [vmem:[#allocation9 + $0x190] sm:$0xff]
    %v449 = vld [vmem:[#allocation9 + $0x198] sm:$0xff]
    %v450 = vld [vmem:[#allocation9 + $0x1a0] sm:$0xff]
    %v451 = vld [vmem:[#allocation9 + $0x1a8] sm:$0xff]
    %v452 = vld [vmem:[#allocation9 + $0x1b0] sm:$0xff]
    %v453 = vld [vmem:[#allocation9 + $0x1b8] sm:$0xff]
    %v454 = vld [vmem:[#allocation9 + $0x1c0] sm:$0xff]
    %v455 = vld [vmem:[#allocation9 + $0x1c8] sm:$0xff]
    %v456 = vld [vmem:[#allocation9 + $0x1d0] sm:$0xff]
    %v457 = vld [vmem:[#allocation9 + $0x1d8] sm:$0xff]
    %v458 = vld [vmem:[#allocation9 + $0x1e0] sm:$0xff]
    %v459 = vld [vmem:[#allocation9 + $0x1e8] sm:$0xff]
    %v460 = vld [vmem:[#allocation9 + $0x1f0] sm:$0xff]
    %v461 = vld [vmem:[#allocation9 + $0x1f8] sm:$0xff]
    %v462 = vld [vmem:[#allocation9 + $0x200] sm:$0xff]
    %v463 = vld [vmem:[#allocation9 + $0x208] sm:$0xff]
    %v464 = vld [vmem:[#allocation9 + $0x210] sm:$0xff]
    %v465 = vld [vmem:[#allocation9 + $0x218] sm:$0xff]
    %v466 = vld [vmem:[#allocation9 + $0x220] sm:$0xff]
    %v467 = vld [vmem:[#allocation9 + $0x228] sm:$0xff]
    %v468 = vld [vmem:[#allocation9 + $0x230] sm:$0xff]
    %v469 = vld [vmem:[#allocation9 + $0x238] sm:$0xff]
    %v470 = vld [vmem:[#allocation9 + $0x240] sm:$0xff]
    %v471 = vld [vmem:[#allocation9 + $0x248] sm:$0xff]
    %v472 = vld [vmem:[#allocation9 + $0x250] sm:$0xff]
    %v473 = vld [vmem:[#allocation9 + $0x258] sm:$0xff]
    %v474 = vld [vmem:[#allocation9 + $0x260] sm:$0xff]
    %v475 = vld [vmem:[#allocation9 + $0x268] sm:$0xff]
    %v476 = vld [vmem:[#allocation9 + $0x270] sm:$0xff]
    %v477 = vld [vmem:[#allocation9 + $0x278] sm:$0xff]
    %v478 = vld [vmem:[#allocation9 + $0x280] sm:$0xff]
    %v479 = vld [vmem:[#allocation9 + $0x288] sm:$0xff]
    %v480 = vld [vmem:[#allocation9 + $0x290] sm:$0xff]
    %v481 = vld [vmem:[#allocation9 + $0x298] sm:$0xff]
    %v482 = vld [vmem:[#allocation9 + $0x2a0] sm:$0xff]
    %v483 = vld [vmem:[#allocation9 + $0x2a8] sm:$0xff]
    %v484 = vld [vmem:[#allocation9 + $0x2b0] sm:$0xff]
    %v485 = vld [vmem:[#allocation9 + $0x2b8] sm:$0xff]
    %v486 = vld [vmem:[#allocation9 + $0x2c0] sm:$0xff]
    %v487 = vld [vmem:[#allocation9 + $0x2c8] sm:$0xff]
    %v488 = vld [vmem:[#allocation9 + $0x2d0] sm:$0xff]
    %v489 = vld [vmem:[#allocation9 + $0x2d8] sm:$0xff]
    %v490 = vld [vmem:[#allocation9 + $0x2e0] sm:$0xff]
    %v491 = vld [vmem:[#allocation9 + $0x2e8] sm:$0xff]
    %v492 = vld [vmem:[#allocation9 + $0x2f0] sm:$0xff]
    %v493 = vld [vmem:[#allocation9 + $0x2f8] sm:$0xff]
    %v494 = vld [vmem:[#allocation9 + $0x300] sm:$0xff]
    %v495 = vld [vmem:[#allocation9 + $0x308] sm:$0xff]
    %v496 = vld [vmem:[#allocation9 + $0x310] sm:$0xff]
    %v497 = vld [vmem:[#allocation9 + $0x318] sm:$0xff]
    %v498 = vld [vmem:[#allocation9 + $0x320] sm:$0xff]
    %v499 = vld [vmem:[#allocation9 + $0x328] sm:$0xff]
    %v500 = vld [vmem:[#allocation9 + $0x330] sm:$0xff]
    %v501 = vld [vmem:[#allocation9 + $0x338] sm:$0xff]
    %v502 = vld [vmem:[#allocation9 + $0x340] sm:$0xff]
    %v503 = vld [vmem:[#allocation9 + $0x348] sm:$0xff]
    %v504 = vld [vmem:[#allocation9 + $0x350] sm:$0xff]
    %v505 = vld [vmem:[#allocation9 + $0x358] sm:$0xff]
    %v506 = vld [vmem:[#allocation9 + $0x360] sm:$0xff]
    %v507 = vld [vmem:[#allocation9 + $0x368] sm:$0xff]
    %v508 = vld [vmem:[#allocation9 + $0x370] sm:$0xff]
    %v509 = vld [vmem:[#allocation9 + $0x378] sm:$0xff]
    %v510 = vld [vmem:[#allocation9 + $0x380] sm:$0xff]
    %v511 = vld [vmem:[#allocation9 + $0x388] sm:$0xff]
    %v512 = vld [vmem:[#allocation9 + $0x390] sm:$0xff]
    %v513 = vld [vmem:[#allocation9 + $0x398] sm:$0xff]
    %v514 = vld [vmem:[#allocation9 + $0x3a0] sm:$0xff]
    %v515 = vld [vmem:[#allocation9 + $0x3a8] sm:$0xff]
    %v516 = vld [vmem:[#allocation9 + $0x3b0] sm:$0xff]
    %v517 = vld [vmem:[#allocation9 + $0x3b8] sm:$0xff]
    %v518 = vld [vmem:[#allocation9 + $0x3c0] sm:$0xff]
    %v519 = vld [vmem:[#allocation9 + $0x3c8] sm:$0xff]
    %v520 = vld [vmem:[#allocation9 + $0x3d0] sm:$0xff]
    %v521 = vld [vmem:[#allocation9 + $0x3d8] sm:$0xff]
    %v522 = vld [vmem:[#allocation9 + $0x3e0] sm:$0xff]
    %v523 = vld [vmem:[#allocation9 + $0x3e8] sm:$0xff]
    %v524 = vld [vmem:[#allocation9 + $0x3f0] sm:$0xff]
    %v525 = vld [vmem:[#allocation9 + $0x3f8] sm:$0xff]
    %v526 = vld [vmem:[#allocation10] sm:$0xff]
    %v527 = vld [vmem:[#allocation10 + $0x8] sm:$0xff]
    %v528 = vld [vmem:[#allocation10 + $0x10] sm:$0xff]
    %v529 = vld [vmem:[#allocation10 + $0x18] sm:$0xff]
    %v530 = vld [vmem:[#allocation10 + $0x20] sm:$0xff]
    %v531 = vld [vmem:[#allocation10 + $0x28] sm:$0xff]
    %v532 = vld [vmem:[#allocation10 + $0x30] sm:$0xff]
    %v533 = vld [vmem:[#allocation10 + $0x38] sm:$0xff]
    %v534 = vld [vmem:[#allocation10 + $0x40] sm:$0xff]
    %v535 = vld [vmem:[#allocation10 + $0x48] sm:$0xff]
    %v536 = vld [vmem:[#allocation10 + $0x50] sm:$0xff]
    %v537 = vld [vmem:[#allocation10 + $0x58] sm:$0xff]
    %v538 = vld [vmem:[#allocation10 + $0x60] sm:$0xff]
    %v539 = vld [vmem:[#allocation10 + $0x68] sm:$0xff]
    %v540 = vld [vmem:[#allocation10 + $0x70] sm:$0xff]
    %v541 = vld [vmem:[#allocation10 + $0x78] sm:$0xff]
    %v542 = vld [vmem:[#allocation10 + $0x80] sm:$0xff]
    %v543 = vld [vmem:[#allocation10 + $0x88] sm:$0xff]
    %v544 = vld [vmem:[#allocation10 + $0x90] sm:$0xff]
    %v545 = vld [vmem:[#allocation10 + $0x98] sm:$0xff]
    %v546 = vld [vmem:[#allocation10 + $0xa0] sm:$0xff]
    %v547 = vld [vmem:[#allocation10 + $0xa8] sm:$0xff]
    %v548 = vld [vmem:[#allocation10 + $0xb0] sm:$0xff]
    %v549 = vld [vmem:[#allocation10 + $0xb8] sm:$0xff]
    %v550 = vld [vmem:[#allocation10 + $0xc0] sm:$0xff]
    %v551 = vld [vmem:[#allocation10 + $0xc8] sm:$0xff]
    %v552 = vld [vmem:[#allocation10 + $0xd0] sm:$0xff]
    %v553 = vld [vmem:[#allocation10 + $0xd8] sm:$0xff]
    %v554 = vld [vmem:[#allocation10 + $0xe0] sm:$0xff]
    %v555 = vld [vmem:[#allocation10 + $0xe8] sm:$0xff]
    %v556 = vld [vmem:[#allocation10 + $0xf0] sm:$0xff]
    %v557 = vld [vmem:[#allocation10 + $0xf8] sm:$0xff]
    %v558 = vld [vmem:[#allocation10 + $0x100] sm:$0xff]
    %v559 = vld [vmem:[#allocation10 + $0x108] sm:$0xff]
    %v560 = vld [vmem:[#allocation10 + $0x110] sm:$0xff]
    %v561 = vld [vmem:[#allocation10 + $0x118] sm:$0xff]
    %v562 = vld [vmem:[#allocation10 + $0x120] sm:$0xff]
    %v563 = vld [vmem:[#allocation10 + $0x128] sm:$0xff]
    %v564 = vld [vmem:[#allocation10 + $0x130] sm:$0xff]
    %v565 = vld [vmem:[#allocation10 + $0x138] sm:$0xff]
    %v566 = vld [vmem:[#allocation10 + $0x140] sm:$0xff]
    %v567 = vld [vmem:[#allocation10 + $0x148] sm:$0xff]
    %v568 = vld [vmem:[#allocation10 + $0x150] sm:$0xff]
    %v569 = vld [vmem:[#allocation10 + $0x158] sm:$0xff]
    %v570 = vld [vmem:[#allocation10 + $0x160] sm:$0xff]
    %v571 = vld [vmem:[#allocation10 + $0x168] sm:$0xff]
    %v572 = vld [vmem:[#allocation10 + $0x170] sm:$0xff]
    %v573 = vld [vmem:[#allocation10 + $0x178] sm:$0xff]
    %v574 = vld [vmem:[#allocation10 + $0x180] sm:$0xff]
    %v575 = vld [vmem:[#allocation10 + $0x188] sm:$0xff]
    %v576 = vld [vmem:[#allocation10 + $0x190] sm:$0xff]
    %v577 = vld [vmem:[#allocation10 + $0x198] sm:$0xff]
    %v578 = vld [vmem:[#allocation10 + $0x1a0] sm:$0xff]
    %v579 = vld [vmem:[#allocation10 + $0x1a8] sm:$0xff]
    %v580 = vld [vmem:[#allocation10 + $0x1b0] sm:$0xff]
    %v581 = vld [vmem:[#allocation10 + $0x1b8] sm:$0xff]
    %v582 = vld [vmem:[#allocation10 + $0x1c0] sm:$0xff]
    %v583 = vld [vmem:[#allocation10 + $0x1c8] sm:$0xff]
    %v584 = vld [vmem:[#allocation10 + $0x1d0] sm:$0xff]
    %v585 = vld [vmem:[#allocation10 + $0x1d8] sm:$0xff]
    %v586 = vld [vmem:[#allocation10 + $0x1e0] sm:$0xff]
    %v587 = vld [vmem:[#allocation10 + $0x1e8] sm:$0xff]
    %v588 = vld [vmem:[#allocation10 + $0x1f0] sm:$0xff]
    %v589 = vld [vmem:[#allocation10 + $0x1f8] sm:$0xff]
    %v590 = vld [vmem:[#allocation10 + $0x200] sm:$0xff]
    %v591 = vld [vmem:[#allocation10 + $0x208] sm:$0xff]
    %v592 = vld [vmem:[#allocation10 + $0x210] sm:$0xff]
    %v593 = vld [vmem:[#allocation10 + $0x218] sm:$0xff]
    %v594 = vld [vmem:[#allocation10 + $0x220] sm:$0xff]
    %v595 = vld [vmem:[#allocation10 + $0x228] sm:$0xff]
    %v596 = vld [vmem:[#allocation10 + $0x230] sm:$0xff]
    %v597 = vld [vmem:[#allocation10 + $0x238] sm:$0xff]
    %v598 = vld [vmem:[#allocation10 + $0x240] sm:$0xff]
    %v599 = vld [vmem:[#allocation10 + $0x248] sm:$0xff]
    %v600 = vld [vmem:[#allocation10 + $0x250] sm:$0xff]
    %v601 = vld [vmem:[#allocation10 + $0x258] sm:$0xff]
    %v602 = vld [vmem:[#allocation10 + $0x260] sm:$0xff]
    %v603 = vld [vmem:[#allocation10 + $0x268] sm:$0xff]
    %v604 = vld [vmem:[#allocation10 + $0x270] sm:$0xff]
    %v605 = vld [vmem:[#allocation10 + $0x278] sm:$0xff]
    %v606 = vld [vmem:[#allocation10 + $0x280] sm:$0xff]
    %v607 = vld [vmem:[#allocation10 + $0x288] sm:$0xff]
    %v608 = vld [vmem:[#allocation10 + $0x290] sm:$0xff]
    %v609 = vld [vmem:[#allocation10 + $0x298] sm:$0xff]
    %v610 = vld [vmem:[#allocation10 + $0x2a0] sm:$0xff]
    %v611 = vld [vmem:[#allocation10 + $0x2a8] sm:$0xff]
    %v612 = vld [vmem:[#allocation10 + $0x2b0] sm:$0xff]
    %v613 = vld [vmem:[#allocation10 + $0x2b8] sm:$0xff]
    %v614 = vld [vmem:[#allocation10 + $0x2c0] sm:$0xff]
    %v615 = vld [vmem:[#allocation10 + $0x2c8] sm:$0xff]
    %v616 = vld [vmem:[#allocation10 + $0x2d0] sm:$0xff]
    %v617 = vld [vmem:[#allocation10 + $0x2d8] sm:$0xff]
    %v618 = vld [vmem:[#allocation10 + $0x2e0] sm:$0xff]
    %v619 = vld [vmem:[#allocation10 + $0x2e8] sm:$0xff]
    %v620 = vld [vmem:[#allocation10 + $0x2f0] sm:$0xff]
    %v621 = vld [vmem:[#allocation10 + $0x2f8] sm:$0xff]
    %v622 = vld [vmem:[#allocation10 + $0x300] sm:$0xff]
    %v623 = vld [vmem:[#allocation10 + $0x308] sm:$0xff]
    %v624 = vld [vmem:[#allocation10 + $0x310] sm:$0xff]
    %v625 = vld [vmem:[#allocation10 + $0x318] sm:$0xff]
    %v626 = vld [vmem:[#allocation10 + $0x320] sm:$0xff]
    %v627 = vld [vmem:[#allocation10 + $0x328] sm:$0xff]
    %v628 = vld [vmem:[#allocation10 + $0x330] sm:$0xff]
    %v629 = vld [vmem:[#allocation10 + $0x338] sm:$0xff]
    %v630 = vld [vmem:[#allocation10 + $0x340] sm:$0xff]
    %v631 = vld [vmem:[#allocation10 + $0x348] sm:$0xff]
    %v632 = vld [vmem:[#allocation10 + $0x350] sm:$0xff]
    %v633 = vld [vmem:[#allocation10 + $0x358] sm:$0xff]
    %v634 = vld [vmem:[#allocation10 + $0x360] sm:$0xff]
    %v635 = vld [vmem:[#allocation10 + $0x368] sm:$0xff]
    %v636 = vld [vmem:[#allocation10 + $0x370] sm:$0xff]
    %v637 = vld [vmem:[#allocation10 + $0x378] sm:$0xff]
    %v638 = vld [vmem:[#allocation10 + $0x380] sm:$0xff]
    %v639 = vld [vmem:[#allocation10 + $0x388] sm:$0xff]
    %v640 = vld [vmem:[#allocation10 + $0x390] sm:$0xff]
    %v641 = vld [vmem:[#allocation10 + $0x398] sm:$0xff]
    %v642 = vld [vmem:[#allocation10 + $0x3a0] sm:$0xff]
    %v643 = vld [vmem:[#allocation10 + $0x3a8] sm:$0xff]
    %v644 = vld [vmem:[#allocation10 + $0x3b0] sm:$0xff]
    %v645 = vld [vmem:[#allocation10 + $0x3b8] sm:$0xff]
    %v646 = vld [vmem:[#allocation10 + $0x3c0] sm:$0xff]
    %v647 = vld [vmem:[#allocation10 + $0x3c8] sm:$0xff]
    %v648 = vld [vmem:[#allocation10 + $0x3d0] sm:$0xff]
    %v649 = vld [vmem:[#allocation10 + $0x3d8] sm:$0xff]
    %v650 = vld [vmem:[#allocation10 + $0x3e0] sm:$0xff]
    %v651 = vld [vmem:[#allocation10 + $0x3e8] sm:$0xff]
    %v652 = vld [vmem:[#allocation10 + $0x3f0] sm:$0xff]
    %v653 = vld [vmem:[#allocation10 + $0x3f8] sm:$0xff]
    %v654 = vsub.f32 %v142, %v270
    %v655 = vsub.f32 %v143, %v271
    %v656 = vsub.f32 %v144, %v272
    %v657 = vsub.f32 %v145, %v273
    %v658 = vsub.f32 %v146, %v274
    %v659 = vsub.f32 %v147, %v275
    %v660 = vsub.f32 %v148, %v276
    %v661 = vsub.f32 %v149, %v277
    %v662 = vsub.f32 %v150, %v278
    %v663 = vsub.f32 %v151, %v279
    %v664 = vsub.f32 %v152, %v280
    %v665 = vsub.f32 %v153, %v281
    %v666 = vsub.f32 %v154, %v282
    %v667 = vsub.f32 %v155, %v283
    %v668 = vsub.f32 %v156, %v284
    %v669 = vsub.f32 %v157, %v285
    %v670 = vsub.f32 %v158, %v286
    %v671 = vsub.f32 %v159, %v287
    %v672 = vsub.f32 %v160, %v288
    %v673 = vsub.f32 %v161, %v289
    %v674 = vsub.f32 %v162, %v290
    %v675 = vsub.f32 %v163, %v291
    %v676 = vsub.f32 %v164, %v292
    %v677 = vsub.f32 %v165, %v293
    %v678 = vsub.f32 %v166, %v294
    %v679 = vsub.f32 %v167, %v295
    %v680 = vsub.f32 %v168, %v296
    %v681 = vsub.f32 %v169, %v297
    %v682 = vsub.f32 %v170, %v298
    %v683 = vsub.f32 %v171, %v299
    %v684 = vsub.f32 %v172, %v300
    %v685 = vsub.f32 %v173, %v301
    %v686 = vsub.f32 %v174, %v302
    %v687 = vsub.f32 %v175, %v303
    %v688 = vsub.f32 %v176, %v304
    %v689 = vsub.f32 %v177, %v305
    %v690 = vsub.f32 %v178, %v306
    %v691 = vsub.f32 %v179, %v307
    %v692 = vsub.f32 %v180, %v308
    %v693 = vsub.f32 %v181, %v309
    %v694 = vsub.f32 %v182, %v310
    %v695 = vsub.f32 %v183, %v311
    %v696 = vsub.f32 %v184, %v312
    %v697 = vsub.f32 %v185, %v313
    %v698 = vsub.f32 %v186, %v314
    %v699 = vsub.f32 %v187, %v315
    %v700 = vsub.f32 %v188, %v316
    %v701 = vsub.f32 %v189, %v317
    %v702 = vsub.f32 %v190, %v318
    %v703 = vsub.f32 %v191, %v319
    %v704 = vsub.f32 %v192, %v320
    %v705 = vsub.f32 %v193, %v321
    %v706 = vsub.f32 %v194, %v322
    %v707 = vsub.f32 %v195, %v323
    %v708 = vsub.f32 %v196, %v324
    %v709 = vsub.f32 %v197, %v325
    %v710 = vsub.f32 %v198, %v326
    %v711 = vsub.f32 %v199, %v327
    %v712 = vsub.f32 %v200, %v328
    %v713 = vsub.f32 %v201, %v329
    %v714 = vsub.f32 %v202, %v330
    %v715 = vsub.f32 %v203, %v331
    %v716 = vsub.f32 %v204, %v332
    %v717 = vsub.f32 %v205, %v333
    %v718 = vsub.f32 %v206, %v334
    %v719 = vsub.f32 %v207, %v335
    %v720 = vsub.f32 %v208, %v336
    %v721 = vsub.f32 %v209, %v337
    %v722 = vsub.f32 %v210, %v338
    %v723 = vsub.f32 %v211, %v339
    %v724 = vsub.f32 %v212, %v340
    %v725 = vsub.f32 %v213, %v341
    %v726 = vsub.f32 %v214, %v342
    %v727 = vsub.f32 %v215, %v343
    %v728 = vsub.f32 %v216, %v344
    %v729 = vsub.f32 %v217, %v345
    %v730 = vsub.f32 %v218, %v346
    %v731 = vsub.f32 %v219, %v347
    %v732 = vsub.f32 %v220, %v348
    %v733 = vsub.f32 %v221, %v349
    %v734 = vsub.f32 %v222, %v350
    %v735 = vsub.f32 %v223, %v351
    %v736 = vsub.f32 %v224, %v352
    %v737 = vsub.f32 %v225, %v353
    %v738 = vsub.f32 %v226, %v354
    %v739 = vsub.f32 %v227, %v355
    %v740 = vsub.f32 %v228, %v356
    %v741 = vsub.f32 %v229, %v357
    %v742 = vsub.f32 %v230, %v358
    %v743 = vsub.f32 %v231, %v359
    %v744 = vsub.f32 %v232, %v360
    %v745 = vsub.f32 %v233, %v361
    %v746 = vsub.f32 %v234, %v362
    %v747 = vsub.f32 %v235, %v363
    %v748 = vsub.f32 %v236, %v364
    %v749 = vsub.f32 %v237, %v365
    %v750 = vsub.f32 %v238, %v366
    %v751 = vsub.f32 %v239, %v367
    %v752 = vsub.f32 %v240, %v368
    %v753 = vsub.f32 %v241, %v369
    %v754 = vsub.f32 %v242, %v370
    %v755 = vsub.f32 %v243, %v371
    %v756 = vsub.f32 %v244, %v372
    %v757 = vsub.f32 %v245, %v373
    %v758 = vsub.f32 %v246, %v374
    %v759 = vsub.f32 %v247, %v375
    %v760 = vsub.f32 %v248, %v376
    %v761 = vsub.f32 %v249, %v377
    %v762 = vsub.f32 %v250, %v378
    %v763 = vsub.f32 %v251, %v379
    %v764 = vsub.f32 %v252, %v380
    %v765 = vsub.f32 %v253, %v381
    %v766 = vsub.f32 %v254, %v382
    %v767 = vsub.f32 %v255, %v383
    %v768 = vsub.f32 %v256, %v384
    %v769 = vsub.f32 %v257, %v385
    %v770 = vsub.f32 %v258, %v386
    %v771 = vsub.f32 %v259, %v387
    %v772 = vsub.f32 %v260, %v388
    %v773 = vsub.f32 %v261, %v389
    %v774 = vsub.f32 %v262, %v390
    %v775 = vsub.f32 %v263, %v391
    %v776 = vsub.f32 %v264, %v392
    %v777 = vsub.f32 %v265, %v393
    %v778 = vsub.f32 %v266, %v394
    %v779 = vsub.f32 %v267, %v395
    %v780 = vsub.f32 %v268, %v396
    %v781 = vsub.f32 %v269, %v397
    %v782 = vmul.f32 %v654, %v654
    %v783 = vmul.f32 %v655, %v655
    %v784 = vmul.f32 %v656, %v656
    %v785 = vmul.f32 %v657, %v657
    %v786 = vmul.f32 %v658, %v658
    %v787 = vmul.f32 %v659, %v659
    %v788 = vmul.f32 %v660, %v660
    %v789 = vmul.f32 %v661, %v661
    %v790 = vmul.f32 %v662, %v662
    %v791 = vmul.f32 %v663, %v663
    %v792 = vmul.f32 %v664, %v664
    %v793 = vmul.f32 %v665, %v665
    %v794 = vmul.f32 %v666, %v666
    %v795 = vmul.f32 %v667, %v667
    %v796 = vmul.f32 %v668, %v668
    %v797 = vmul.f32 %v669, %v669
    %v798 = vmul.f32 %v670, %v670
    %v799 = vmul.f32 %v671, %v671
    %v800 = vmul.f32 %v672, %v672
    %v801 = vmul.f32 %v673, %v673
    %v802 = vmul.f32 %v674, %v674
    %v803 = vmul.f32 %v675, %v675
    %v804 = vmul.f32 %v676, %v676
    %v805 = vmul.f32 %v677, %v677
    %v806 = vmul.f32 %v678, %v678
    %v807 = vmul.f32 %v679, %v679
    %v808 = vmul.f32 %v680, %v680
    %v809 = vmul.f32 %v681, %v681
    %v810 = vmul.f32 %v682, %v682
    %v811 = vmul.f32 %v683, %v683
    %v812 = vmul.f32 %v684, %v684
    %v813 = vmul.f32 %v685, %v685
    %v814 = vmul.f32 %v686, %v686
    %v815 = vmul.f32 %v687, %v687
    %v816 = vmul.f32 %v688, %v688
    %v817 = vmul.f32 %v689, %v689
    %v818 = vmul.f32 %v690, %v690
    %v819 = vmul.f32 %v691, %v691
    %v820 = vmul.f32 %v692, %v692
    %v821 = vmul.f32 %v693, %v693
    %v822 = vmul.f32 %v694, %v694
    %v823 = vmul.f32 %v695, %v695
    %v824 = vmul.f32 %v696, %v696
    %v825 = vmul.f32 %v697, %v697
    %v826 = vmul.f32 %v698, %v698
    %v827 = vmul.f32 %v699, %v699
    %v828 = vmul.f32 %v700, %v700
    %v829 = vmul.f32 %v701, %v701
    %v830 = vmul.f32 %v702, %v702
    %v831 = vmul.f32 %v703, %v703
    %v832 = vmul.f32 %v704, %v704
    %v833 = vmul.f32 %v705, %v705
    %v834 = vmul.f32 %v706, %v706
    %v835 = vmul.f32 %v707, %v707
    %v836 = vmul.f32 %v708, %v708
    %v837 = vmul.f32 %v709, %v709
    %v838 = vmul.f32 %v710, %v710
    %v839 = vmul.f32 %v711, %v711
    %v840 = vmul.f32 %v712, %v712
    %v841 = vmul.f32 %v713, %v713
    %v842 = vmul.f32 %v714, %v714
    %v843 = vmul.f32 %v715, %v715
    %v844 = vmul.f32 %v716, %v716
    %v845 = vmul.f32 %v717, %v717
    %v846 = vmul.f32 %v718, %v718
    %v847 = vmul.f32 %v719, %v719
    %v848 = vmul.f32 %v720, %v720
    %v849 = vmul.f32 %v721, %v721
    %v850 = vmul.f32 %v722, %v722
    %v851 = vmul.f32 %v723, %v723
    %v852 = vmul.f32 %v724, %v724
    %v853 = vmul.f32 %v725, %v725
    %v854 = vmul.f32 %v726, %v726
    %v855 = vmul.f32 %v727, %v727
    %v856 = vmul.f32 %v728, %v728
    %v857 = vmul.f32 %v729, %v729
    %v858 = vmul.f32 %v730, %v730
    %v859 = vmul.f32 %v731, %v731
    %v860 = vmul.f32 %v732, %v732
    %v861 = vmul.f32 %v733, %v733
    %v862 = vmul.f32 %v734, %v734
    %v863 = vmul.f32 %v735, %v735
    %v864 = vmul.f32 %v736, %v736
    %v865 = vmul.f32 %v737, %v737
    %v866 = vmul.f32 %v738, %v738
    %v867 = vmul.f32 %v739, %v739
    %v868 = vmul.f32 %v740, %v740
    %v869 = vmul.f32 %v741, %v741
    %v870 = vmul.f32 %v742, %v742
    %v871 = vmul.f32 %v743, %v743
    %v872 = vmul.f32 %v744, %v744
    %v873 = vmul.f32 %v745, %v745
    %v874 = vmul.f32 %v746, %v746
    %v875 = vmul.f32 %v747, %v747
    %v876 = vmul.f32 %v748, %v748
    %v877 = vmul.f32 %v749, %v749
    %v878 = vmul.f32 %v750, %v750
    %v879 = vmul.f32 %v751, %v751
    %v880 = vmul.f32 %v752, %v752
    %v881 = vmul.f32 %v753, %v753
    %v882 = vmul.f32 %v754, %v754
    %v883 = vmul.f32 %v755, %v755
    %v884 = vmul.f32 %v756, %v756
    %v885 = vmul.f32 %v757, %v757
    %v886 = vmul.f32 %v758, %v758
    %v887 = vmul.f32 %v759, %v759
    %v888 = vmul.f32 %v760, %v760
    %v889 = vmul.f32 %v761, %v761
    %v890 = vmul.f32 %v762, %v762
    %v891 = vmul.f32 %v763, %v763
    %v892 = vmul.f32 %v764, %v764
    %v893 = vmul.f32 %v765, %v765
    %v894 = vmul.f32 %v766, %v766
    %v895 = vmul.f32 %v767, %v767
    %v896 = vmul.f32 %v768, %v768
    %v897 = vmul.f32 %v769, %v769
    %v898 = vmul.f32 %v770, %v770
    %v899 = vmul.f32 %v771, %v771
    %v900 = vmul.f32 %v772, %v772
    %v901 = vmul.f32 %v773, %v773
    %v902 = vmul.f32 %v774, %v774
    %v903 = vmul.f32 %v775, %v775
    %v904 = vmul.f32 %v776, %v776
    %v905 = vmul.f32 %v777, %v777
    %v906 = vmul.f32 %v778, %v778
    %v907 = vmul.f32 %v779, %v779
    %v908 = vmul.f32 %v780, %v780
    %v909 = vmul.f32 %v781, %v781
    %v910 = vld [vmem:[#allocation12] sm:$0xff]
    %v911 = vld [vmem:[#allocation12 + $0x8] sm:$0xff]
    %v912 = vld [vmem:[#allocation12 + $0x10] sm:$0xff]
    %v913 = vld [vmem:[#allocation12 + $0x18] sm:$0xff]
    %v914 = vld [vmem:[#allocation12 + $0x20] sm:$0xff]
    %v915 = vld [vmem:[#allocation12 + $0x28] sm:$0xff]
    %v916 = vld [vmem:[#allocation12 + $0x30] sm:$0xff]
    %v917 = vld [vmem:[#allocation12 + $0x38] sm:$0xff]
    %v918 = vld [vmem:[#allocation12 + $0x40] sm:$0xff]
    %v919 = vld [vmem:[#allocation12 + $0x48] sm:$0xff]
    %v920 = vld [vmem:[#allocation12 + $0x50] sm:$0xff]
    %v921 = vld [vmem:[#allocation12 + $0x58] sm:$0xff]
    %v922 = vld [vmem:[#allocation12 + $0x60] sm:$0xff]
    %v923 = vld [vmem:[#allocation12 + $0x68] sm:$0xff]
    %v924 = vld [vmem:[#allocation12 + $0x70] sm:$0xff]
    %v925 = vld [vmem:[#allocation12 + $0x78] sm:$0xff]
    %v926 = vld [vmem:[#allocation12 + $0x80] sm:$0xff]
    %v927 = vld [vmem:[#allocation12 + $0x88] sm:$0xff]
    %v928 = vld [vmem:[#allocation12 + $0x90] sm:$0xff]
    %v929 = vld [vmem:[#allocation12 + $0x98] sm:$0xff]
    %v930 = vld [vmem:[#allocation12 + $0xa0] sm:$0xff]
    %v931 = vld [vmem:[#allocation12 + $0xa8] sm:$0xff]
    %v932 = vld [vmem:[#allocation12 + $0xb0] sm:$0xff]
    %v933 = vld [vmem:[#allocation12 + $0xb8] sm:$0xff]
    %v934 = vld [vmem:[#allocation12 + $0xc0] sm:$0xff]
    %v935 = vld [vmem:[#allocation12 + $0xc8] sm:$0xff]
    %v936 = vld [vmem:[#allocation12 + $0xd0] sm:$0xff]
    %v937 = vld [vmem:[#allocation12 + $0xd8] sm:$0xff]
    %v938 = vld [vmem:[#allocation12 + $0xe0] sm:$0xff]
    %v939 = vld [vmem:[#allocation12 + $0xe8] sm:$0xff]
    %v940 = vld [vmem:[#allocation12 + $0xf0] sm:$0xff]
    %v941 = vld [vmem:[#allocation12 + $0xf8] sm:$0xff]
    %v942 = vld [vmem:[#allocation12 + $0x100] sm:$0xff]
    %v943 = vld [vmem:[#allocation12 + $0x108] sm:$0xff]
    %v944 = vld [vmem:[#allocation12 + $0x110] sm:$0xff]
    %v945 = vld [vmem:[#allocation12 + $0x118] sm:$0xff]
    %v946 = vld [vmem:[#allocation12 + $0x120] sm:$0xff]
    %v947 = vld [vmem:[#allocation12 + $0x128] sm:$0xff]
    %v948 = vld [vmem:[#allocation12 + $0x130] sm:$0xff]
    %v949 = vld [vmem:[#allocation12 + $0x138] sm:$0xff]
    %v950 = vld [vmem:[#allocation12 + $0x140] sm:$0xff]
    %v951 = vld [vmem:[#allocation12 + $0x148] sm:$0xff]
    %v952 = vld [vmem:[#allocation12 + $0x150] sm:$0xff]
    %v953 = vld [vmem:[#allocation12 + $0x158] sm:$0xff]
    %v954 = vld [vmem:[#allocation12 + $0x160] sm:$0xff]
    %v955 = vld [vmem:[#allocation12 + $0x168] sm:$0xff]
    %v956 = vld [vmem:[#allocation12 + $0x170] sm:$0xff]
    %v957 = vld [vmem:[#allocation12 + $0x178] sm:$0xff]
    %v958 = vld [vmem:[#allocation12 + $0x180] sm:$0xff]
    %v959 = vld [vmem:[#allocation12 + $0x188] sm:$0xff]
    %v960 = vld [vmem:[#allocation12 + $0x190] sm:$0xff]
    %v961 = vld [vmem:[#allocation12 + $0x198] sm:$0xff]
    %v962 = vld [vmem:[#allocation12 + $0x1a0] sm:$0xff]
    %v963 = vld [vmem:[#allocation12 + $0x1a8] sm:$0xff]
    %v964 = vld [vmem:[#allocation12 + $0x1b0] sm:$0xff]
    %v965 = vld [vmem:[#allocation12 + $0x1b8] sm:$0xff]
    %v966 = vld [vmem:[#allocation12 + $0x1c0] sm:$0xff]
    %v967 = vld [vmem:[#allocation12 + $0x1c8] sm:$0xff]
    %v968 = vld [vmem:[#allocation12 + $0x1d0] sm:$0xff]
    %v969 = vld [vmem:[#allocation12 + $0x1d8] sm:$0xff]
    %v970 = vld [vmem:[#allocation12 + $0x1e0] sm:$0xff]
    %v971 = vld [vmem:[#allocation12 + $0x1e8] sm:$0xff]
    %v972 = vld [vmem:[#allocation12 + $0x1f0] sm:$0xff]
    %v973 = vld [vmem:[#allocation12 + $0x1f8] sm:$0xff]
    %v974 = vld [vmem:[#allocation12 + $0x200] sm:$0xff]
    %v975 = vld [vmem:[#allocation12 + $0x208] sm:$0xff]
    %v976 = vld [vmem:[#allocation12 + $0x210] sm:$0xff]
    %v977 = vld [vmem:[#allocation12 + $0x218] sm:$0xff]
    %v978 = vld [vmem:[#allocation12 + $0x220] sm:$0xff]
    %v979 = vld [vmem:[#allocation12 + $0x228] sm:$0xff]
    %v980 = vld [vmem:[#allocation12 + $0x230] sm:$0xff]
    %v981 = vld [vmem:[#allocation12 + $0x238] sm:$0xff]
    %v982 = vld [vmem:[#allocation12 + $0x240] sm:$0xff]
    %v983 = vld [vmem:[#allocation12 + $0x248] sm:$0xff]
    %v984 = vld [vmem:[#allocation12 + $0x250] sm:$0xff]
    %v985 = vld [vmem:[#allocation12 + $0x258] sm:$0xff]
    %v986 = vld [vmem:[#allocation12 + $0x260] sm:$0xff]
    %v987 = vld [vmem:[#allocation12 + $0x268] sm:$0xff]
    %v988 = vld [vmem:[#allocation12 + $0x270] sm:$0xff]
    %v989 = vld [vmem:[#allocation12 + $0x278] sm:$0xff]
    %v990 = vld [vmem:[#allocation12 + $0x280] sm:$0xff]
    %v991 = vld [vmem:[#allocation12 + $0x288] sm:$0xff]
    %v992 = vld [vmem:[#allocation12 + $0x290] sm:$0xff]
    %v993 = vld [vmem:[#allocation12 + $0x298] sm:$0xff]
    %v994 = vld [vmem:[#allocation12 + $0x2a0] sm:$0xff]
    %v995 = vld [vmem:[#allocation12 + $0x2a8] sm:$0xff]
    %v996 = vld [vmem:[#allocation12 + $0x2b0] sm:$0xff]
    %v997 = vld [vmem:[#allocation12 + $0x2b8] sm:$0xff]
    %v998 = vld [vmem:[#allocation12 + $0x2c0] sm:$0xff]
    %v999 = vld [vmem:[#allocation12 + $0x2c8] sm:$0xff]
    %v1000 = vld [vmem:[#allocation12 + $0x2d0] sm:$0xff]
    %v1001 = vld [vmem:[#allocation12 + $0x2d8] sm:$0xff]
    %v1002 = vld [vmem:[#allocation12 + $0x2e0] sm:$0xff]
    %v1003 = vld [vmem:[#allocation12 + $0x2e8] sm:$0xff]
    %v1004 = vld [vmem:[#allocation12 + $0x2f0] sm:$0xff]
    %v1005 = vld [vmem:[#allocation12 + $0x2f8] sm:$0xff]
    %v1006 = vld [vmem:[#allocation12 + $0x300] sm:$0xff]
    %v1007 = vld [vmem:[#allocation12 + $0x308] sm:$0xff]
    %v1008 = vld [vmem:[#allocation12 + $0x310] sm:$0xff]
    %v1009 = vld [vmem:[#allocation12 + $0x318] sm:$0xff]
    %v1010 = vld [vmem:[#allocation12 + $0x320] sm:$0xff]
    %v1011 = vld [vmem:[#allocation12 + $0x328] sm:$0xff]
    %v1012 = vld [vmem:[#allocation12 + $0x330] sm:$0xff]
    %v1013 = vld [vmem:[#allocation12 + $0x338] sm:$0xff]
    %v1014 = vld [vmem:[#allocation12 + $0x340] sm:$0xff]
    %v1015 = vld [vmem:[#allocation12 + $0x348] sm:$0xff]
    %v1016 = vld [vmem:[#allocation12 + $0x350] sm:$0xff]
    %v1017 = vld [vmem:[#allocation12 + $0x358] sm:$0xff]
    %v1018 = vld [vmem:[#allocation12 + $0x360] sm:$0xff]
    %v1019 = vld [vmem:[#allocation12 + $0x368] sm:$0xff]
    %v1020 = vld [vmem:[#allocation12 + $0x370] sm:$0xff]
    %v1021 = vld [vmem:[#allocation12 + $0x378] sm:$0xff]
    %v1022 = vld [vmem:[#allocation12 + $0x380] sm:$0xff]
    %v1023 = vld [vmem:[#allocation12 + $0x388] sm:$0xff]
    %v1024 = vld [vmem:[#allocation12 + $0x390] sm:$0xff]
    %v1025 = vld [vmem:[#allocation12 + $0x398] sm:$0xff]
    %v1026 = vld [vmem:[#allocation12 + $0x3a0] sm:$0xff]
    %v1027 = vld [vmem:[#allocation12 + $0x3a8] sm:$0xff]
    %v1028 = vld [vmem:[#allocation12 + $0x3b0] sm:$0xff]
    %v1029 = vld [vmem:[#allocation12 + $0x3b8] sm:$0xff]
    %v1030 = vld [vmem:[#allocation12 + $0x3c0] sm:$0xff]
    %v1031 = vld [vmem:[#allocation12 + $0x3c8] sm:$0xff]
    %v1032 = vld [vmem:[#allocation12 + $0x3d0] sm:$0xff]
    %v1033 = vld [vmem:[#allocation12 + $0x3d8] sm:$0xff]
    %v1034 = vld [vmem:[#allocation12 + $0x3e0] sm:$0xff]
    %v1035 = vld [vmem:[#allocation12 + $0x3e8] sm:$0xff]
    %v1036 = vld [vmem:[#allocation12 + $0x3f0] sm:$0xff]
    %v1037 = vld [vmem:[#allocation12 + $0x3f8] sm:$0xff]
    %v1038 = vmul.f32 %v782, %v910
    %v1039 = vmul.f32 %v783, %v911
    %v1040 = vmul.f32 %v784, %v912
    %v1041 = vmul.f32 %v785, %v913
    %v1042 = vmul.f32 %v786, %v914
    %v1043 = vmul.f32 %v787, %v915
    %v1044 = vmul.f32 %v788, %v916
    %v1045 = vmul.f32 %v789, %v917
    %v1046 = vmul.f32 %v790, %v918
    %v1047 = vmul.f32 %v791, %v919
    %v1048 = vmul.f32 %v792, %v920
    %v1049 = vmul.f32 %v793, %v921
    %v1050 = vmul.f32 %v794, %v922
    %v1051 = vmul.f32 %v795, %v923
    %v1052 = vmul.f32 %v796, %v924
    %v1053 = vmul.f32 %v797, %v925
    %v1054 = vmul.f32 %v798, %v926
    %v1055 = vmul.f32 %v799, %v927
    %v1056 = vmul.f32 %v800, %v928
    %v1057 = vmul.f32 %v801, %v929
    %v1058 = vmul.f32 %v802, %v930
    %v1059 = vmul.f32 %v803, %v931
    %v1060 = vmul.f32 %v804, %v932
    %v1061 = vmul.f32 %v805, %v933
    %v1062 = vmul.f32 %v806, %v934
    %v1063 = vmul.f32 %v807, %v935
    %v1064 = vmul.f32 %v808, %v936
    %v1065 = vmul.f32 %v809, %v937
    %v1066 = vmul.f32 %v810, %v938
    %v1067 = vmul.f32 %v811, %v939
    %v1068 = vmul.f32 %v812, %v940
    %v1069 = vmul.f32 %v813, %v941
    %v1070 = vmul.f32 %v814, %v942
    %v1071 = vmul.f32 %v815, %v943
    %v1072 = vmul.f32 %v816, %v944
    %v1073 = vmul.f32 %v817, %v945
    %v1074 = vmul.f32 %v818, %v946
    %v1075 = vmul.f32 %v819, %v947
    %v1076 = vmul.f32 %v820, %v948
    %v1077 = vmul.f32 %v821, %v949
    %v1078 = vmul.f32 %v822, %v950
    %v1079 = vmul.f32 %v823, %v951
    %v1080 = vmul.f32 %v824, %v952
    %v1081 = vmul.f32 %v825, %v953
    %v1082 = vmul.f32 %v826, %v954
    %v1083 = vmul.f32 %v827, %v955
    %v1084 = vmul.f32 %v828, %v956
    %v1085 = vmul.f32 %v829, %v957
    %v1086 = vmul.f32 %v830, %v958
    %v1087 = vmul.f32 %v831, %v959
    %v1088 = vmul.f32 %v832, %v960
    %v1089 = vmul.f32 %v833, %v961
    %v1090 = vmul.f32 %v834, %v962
    %v1091 = vmul.f32 %v835, %v963
    %v1092 = vmul.f32 %v836, %v964
    %v1093 = vmul.f32 %v837, %v965
    %v1094 = vmul.f32 %v838, %v966
    %v1095 = vmul.f32 %v839, %v967
    %v1096 = vmul.f32 %v840, %v968
    %v1097 = vmul.f32 %v841, %v969
    %v1098 = vmul.f32 %v842, %v970
    %v1099 = vmul.f32 %v843, %v971
    %v1100 = vmul.f32 %v844, %v972
    %v1101 = vmul.f32 %v845, %v973
    %v1102 = vmul.f32 %v846, %v974
    %v1103 = vmul.f32 %v847, %v975
    %v1104 = vmul.f32 %v848, %v976
    %v1105 = vmul.f32 %v849, %v977
    %v1106 = vmul.f32 %v850, %v978
    %v1107 = vmul.f32 %v851, %v979
    %v1108 = vmul.f32 %v852, %v980
    %v1109 = vmul.f32 %v853, %v981
    %v1110 = vmul.f32 %v854, %v982
    %v1111 = vmul.f32 %v855, %v983
    %v1112 = vmul.f32 %v856, %v984
    %v1113 = vmul.f32 %v857, %v985
    %v1114 = vmul.f32 %v858, %v986
    %v1115 = vmul.f32 %v859, %v987
    %v1116 = vmul.f32 %v860, %v988
    %v1117 = vmul.f32 %v861, %v989
    %v1118 = vmul.f32 %v862, %v990
    %v1119 = vmul.f32 %v863, %v991
    %v1120 = vmul.f32 %v864, %v992
    %v1121 = vmul.f32 %v865, %v993
    %v1122 = vmul.f32 %v866, %v994
    %v1123 = vmul.f32 %v867, %v995
    %v1124 = vmul.f32 %v868, %v996
    %v1125 = vmul.f32 %v869, %v997
    %v1126 = vmul.f32 %v870, %v998
    %v1127 = vmul.f32 %v871, %v999
    %v1128 = vmul.f32 %v872, %v1000
    %v1129 = vmul.f32 %v873, %v1001
    %v1130 = vmul.f32 %v874, %v1002
    %v1131 = vmul.f32 %v875, %v1003
    %v1132 = vmul.f32 %v876, %v1004
    %v1133 = vmul.f32 %v877, %v1005
    %v1134 = vmul.f32 %v878, %v1006
    %v1135 = vmul.f32 %v879, %v1007
    %v1136 = vmul.f32 %v880, %v1008
    %v1137 = vmul.f32 %v881, %v1009
    %v1138 = vmul.f32 %v882, %v1010
    %v1139 = vmul.f32 %v883, %v1011
    %v1140 = vmul.f32 %v884, %v1012
    %v1141 = vmul.f32 %v885, %v1013
    %v1142 = vmul.f32 %v886, %v1014
    %v1143 = vmul.f32 %v887, %v1015
    %v1144 = vmul.f32 %v888, %v1016
    %v1145 = vmul.f32 %v889, %v1017
    %v1146 = vmul.f32 %v890, %v1018
    %v1147 = vmul.f32 %v891, %v1019
    %v1148 = vmul.f32 %v892, %v1020
    %v1149 = vmul.f32 %v893, %v1021
    %v1150 = vmul.f32 %v894, %v1022
    %v1151 = vmul.f32 %v895, %v1023
    %v1152 = vmul.f32 %v896, %v1024
    %v1153 = vmul.f32 %v897, %v1025
    %v1154 = vmul.f32 %v898, %v1026
    %v1155 = vmul.f32 %v899, %v1027
    %v1156 = vmul.f32 %v900, %v1028
    %v1157 = vmul.f32 %v901, %v1029
    %v1158 = vmul.f32 %v902, %v1030
    %v1159 = vmul.f32 %v903, %v1031
    %v1160 = vmul.f32 %v904, %v1032
    %v1161 = vmul.f32 %v905, %v1033
    %v1162 = vmul.f32 %v906, %v1034
    %v1163 = vmul.f32 %v907, %v1035
    %v1164 = vmul.f32 %v908, %v1036
    %v1165 = vmul.f32 %v909, %v1037
    %v1166 = vmax.f32 %v398, 1e-08
    %v1167 = vmax.f32 %v399, 1e-08
    %v1168 = vmax.f32 %v400, 1e-08
    %v1169 = vmax.f32 %v401, 1e-08
    %v1170 = vmax.f32 %v402, 1e-08
    %v1171 = vmax.f32 %v403, 1e-08
    %v1172 = vmax.f32 %v404, 1e-08
    %v1173 = vmax.f32 %v405, 1e-08
    %v1174 = vmax.f32 %v406, 1e-08
    %v1175 = vmax.f32 %v407, 1e-08
    %v1176 = vmax.f32 %v408, 1e-08
    %v1177 = vmax.f32 %v409, 1e-08
    %v1178 = vmax.f32 %v410, 1e-08
    %v1179 = vmax.f32 %v411, 1e-08
    %v1180 = vmax.f32 %v412, 1e-08
    %v1181 = vmax.f32 %v413, 1e-08
    %v1182 = vmax.f32 %v414, 1e-08
    %v1183 = vmax.f32 %v415, 1e-08
    %v1184 = vmax.f32 %v416, 1e-08
    %v1185 = vmax.f32 %v417, 1e-08
    %v1186 = vmax.f32 %v418, 1e-08
    %v1187 = vmax.f32 %v419, 1e-08
    %v1188 = vmax.f32 %v420, 1e-08
    %v1189 = vmax.f32 %v421, 1e-08
    %v1190 = vmax.f32 %v422, 1e-08
    %v1191 = vmax.f32 %v423, 1e-08
    %v1192 = vmax.f32 %v424, 1e-08
    %v1193 = vmax.f32 %v425, 1e-08
    %v1194 = vmax.f32 %v426, 1e-08
    %v1195 = vmax.f32 %v427, 1e-08
    %v1196 = vmax.f32 %v428, 1e-08
    %v1197 = vmax.f32 %v429, 1e-08
    %v1198 = vmax.f32 %v430, 1e-08
    %v1199 = vmax.f32 %v431, 1e-08
    %v1200 = vmax.f32 %v432, 1e-08
    %v1201 = vmax.f32 %v433, 1e-08
    %v1202 = vmax.f32 %v434, 1e-08
    %v1203 = vmax.f32 %v435, 1e-08
    %v1204 = vmax.f32 %v436, 1e-08
    %v1205 = vmax.f32 %v437, 1e-08
    %v1206 = vmax.f32 %v438, 1e-08
    %v1207 = vmax.f32 %v439, 1e-08
    %v1208 = vmax.f32 %v440, 1e-08
    %v1209 = vmax.f32 %v441, 1e-08
    %v1210 = vmax.f32 %v442, 1e-08
    %v1211 = vmax.f32 %v443, 1e-08
    %v1212 = vmax.f32 %v444, 1e-08
    %v1213 = vmax.f32 %v445, 1e-08
    %v1214 = vmax.f32 %v446, 1e-08
    %v1215 = vmax.f32 %v447, 1e-08
    %v1216 = vmax.f32 %v448, 1e-08
    %v1217 = vmax.f32 %v449, 1e-08
    %v1218 = vmax.f32 %v450, 1e-08
    %v1219 = vmax.f32 %v451, 1e-08
    %v1220 = vmax.f32 %v452, 1e-08
    %v1221 = vmax.f32 %v453, 1e-08
    %v1222 = vmax.f32 %v454, 1e-08
    %v1223 = vmax.f32 %v455, 1e-08
    %v1224 = vmax.f32 %v456, 1e-08
    %v1225 = vmax.f32 %v457, 1e-08
    %v1226 = vmax.f32 %v458, 1e-08
    %v1227 = vmax.f32 %v459, 1e-08
    %v1228 = vmax.f32 %v460, 1e-08
    %v1229 = vmax.f32 %v461, 1e-08
    %v1230 = vmax.f32 %v462, 1e-08
    %v1231 = vmax.f32 %v463, 1e-08
    %v1232 = vmax.f32 %v464, 1e-08
    %v1233 = vmax.f32 %v465, 1e-08
    %v1234 = vmax.f32 %v466, 1e-08
    %v1235 = vmax.f32 %v467, 1e-08
    %v1236 = vmax.f32 %v468, 1e-08
    %v1237 = vmax.f32 %v469, 1e-08
    %v1238 = vmax.f32 %v470, 1e-08
    %v1239 = vmax.f32 %v471, 1e-08
    %v1240 = vmax.f32 %v472, 1e-08
    %v1241 = vmax.f32 %v473, 1e-08
    %v1242 = vmax.f32 %v474, 1e-08
    %v1243 = vmax.f32 %v475, 1e-08
    %v1244 = vmax.f32 %v476, 1e-08
    %v1245 = vmax.f32 %v477, 1e-08
    %v1246 = vmax.f32 %v478, 1e-08
    %v1247 = vmax.f32 %v479, 1e-08
    %v1248 = vmax.f32 %v480, 1e-08
    %v1249 = vmax.f32 %v481, 1e-08
    %v1250 = vmax.f32 %v482, 1e-08
    %v1251 = vmax.f32 %v483, 1e-08
    %v1252 = vmax.f32 %v484, 1e-08
    %v1253 = vmax.f32 %v485, 1e-08
    %v1254 = vmax.f32 %v486, 1e-08
    %v1255 = vmax.f32 %v487, 1e-08
    %v1256 = vmax.f32 %v488, 1e-08
    %v1257 = vmax.f32 %v489, 1e-08
    %v1258 = vmax.f32 %v490, 1e-08
    %v1259 = vmax.f32 %v491, 1e-08
    %v1260 = vmax.f32 %v492, 1e-08
    %v1261 = vmax.f32 %v493, 1e-08
    %v1262 = vmax.f32 %v494, 1e-08
    %v1263 = vmax.f32 %v495, 1e-08
    %v1264 = vmax.f32 %v496, 1e-08
    %v1265 = vmax.f32 %v497, 1e-08
    %v1266 = vmax.f32 %v498, 1e-08
    %v1267 = vmax.f32 %v499, 1e-08
    %v1268 = vmax.f32 %v500, 1e-08
    %v1269 = vmax.f32 %v501, 1e-08
    %v1270 = vmax.f32 %v502, 1e-08
    %v1271 = vmax.f32 %v503, 1e-08
    %v1272 = vmax.f32 %v504, 1e-08
    %v1273 = vmax.f32 %v505, 1e-08
    %v1274 = vmax.f32 %v506, 1e-08
    %v1275 = vmax.f32 %v507, 1e-08
    %v1276 = vmax.f32 %v508, 1e-08
    %v1277 = vmax.f32 %v509, 1e-08
    %v1278 = vmax.f32 %v510, 1e-08
    %v1279 = vmax.f32 %v511, 1e-08
    %v1280 = vmax.f32 %v512, 1e-08
    %v1281 = vmax.f32 %v513, 1e-08
    %v1282 = vmax.f32 %v514, 1e-08
    %v1283 = vmax.f32 %v515, 1e-08
    %v1284 = vmax.f32 %v516, 1e-08
    %v1285 = vmax.f32 %v517, 1e-08
    %v1286 = vmax.f32 %v518, 1e-08
    %v1287 = vmax.f32 %v519, 1e-08
    %v1288 = vmax.f32 %v520, 1e-08
    %v1289 = vmax.f32 %v521, 1e-08
    %v1290 = vmax.f32 %v522, 1e-08
    %v1291 = vmax.f32 %v523, 1e-08
    %v1292 = vmax.f32 %v524, 1e-08
    %v1293 = vmax.f32 %v525, 1e-08
    %v1294 = vmin.f32 %v1166, 1.0
    %v1295 = vmin.f32 %v1167, 1.0
    %v1296 = vmin.f32 %v1168, 1.0
    %v1297 = vmin.f32 %v1169, 1.0
    %v1298 = vmin.f32 %v1170, 1.0
    %v1299 = vmin.f32 %v1171, 1.0
    %v1300 = vmin.f32 %v1172, 1.0
    %v1301 = vmin.f32 %v1173, 1.0
    %v1302 = vmin.f32 %v1174, 1.0
    %v1303 = vmin.f32 %v1175, 1.0
    %v1304 = vmin.f32 %v1176, 1.0
    %v1305 = vmin.f32 %v1177, 1.0
    %v1306 = vmin.f32 %v1178, 1.0
    %v1307 = vmin.f32 %v1179, 1.0
    %v1308 = vmin.f32 %v1180, 1.0
    %v1309 = vmin.f32 %v1181, 1.0
    %v1310 = vmin.f32 %v1182, 1.0
    %v1311 = vmin.f32 %v1183, 1.0
    %v1312 = vmin.f32 %v1184, 1.0
    %v1313 = vmin.f32 %v1185, 1.0
    %v1314 = vmin.f32 %v1186, 1.0
    %v1315 = vmin.f32 %v1187, 1.0
    %v1316 = vmin.f32 %v1188, 1.0
    %v1317 = vmin.f32 %v1189, 1.0
    %v1318 = vmin.f32 %v1190, 1.0
    %v1319 = vmin.f32 %v1191, 1.0
    %v1320 = vmin.f32 %v1192, 1.0
    %v1321 = vmin.f32 %v1193, 1.0
    %v1322 = vmin.f32 %v1194, 1.0
    %v1323 = vmin.f32 %v1195, 1.0
    %v1324 = vmin.f32 %v1196, 1.0
    %v1325 = vmin.f32 %v1197, 1.0
    %v1326 = vmin.f32 %v1198, 1.0
    %v1327 = vmin.f32 %v1199, 1.0
    %v1328 = vmin.f32 %v1200, 1.0
    %v1329 = vmin.f32 %v1201, 1.0
    %v1330 = vmin.f32 %v1202, 1.0
    %v1331 = vmin.f32 %v1203, 1.0
    %v1332 = vmin.f32 %v1204, 1.0
    %v1333 = vmin.f32 %v1205, 1.0
    %v1334 = vmin.f32 %v1206, 1.0
    %v1335 = vmin.f32 %v1207, 1.0
    %v1336 = vmin.f32 %v1208, 1.0
    %v1337 = vmin.f32 %v1209, 1.0
    %v1338 = vmin.f32 %v1210, 1.0
    %v1339 = vmin.f32 %v1211, 1.0
    %v1340 = vmin.f32 %v1212, 1.0
    %v1341 = vmin.f32 %v1213, 1.0
    %v1342 = vmin.f32 %v1214, 1.0
    %v1343 = vmin.f32 %v1215, 1.0
    %v1344 = vmin.f32 %v1216, 1.0
    %v1345 = vmin.f32 %v1217, 1.0
    %v1346 = vmin.f32 %v1218, 1.0
    %v1347 = vmin.f32 %v1219, 1.0
    %v1348 = vmin.f32 %v1220, 1.0
    %v1349 = vmin.f32 %v1221, 1.0
    %v1350 = vmin.f32 %v1222, 1.0
    %v1351 = vmin.f32 %v1223, 1.0
    %v1352 = vmin.f32 %v1224, 1.0
    %v1353 = vmin.f32 %v1225, 1.0
    %v1354 = vmin.f32 %v1226, 1.0
    %v1355 = vmin.f32 %v1227, 1.0
    %v1356 = vmin.f32 %v1228, 1.0
    %v1357 = vmin.f32 %v1229, 1.0
    %v1358 = vmin.f32 %v1230, 1.0
    %v1359 = vmin.f32 %v1231, 1.0
    %v1360 = vmin.f32 %v1232, 1.0
    %v1361 = vmin.f32 %v1233, 1.0
    %v1362 = vmin.f32 %v1234, 1.0
    %v1363 = vmin.f32 %v1235, 1.0
    %v1364 = vmin.f32 %v1236, 1.0
    %v1365 = vmin.f32 %v1237, 1.0
    %v1366 = vmin.f32 %v1238, 1.0
    %v1367 = vmin.f32 %v1239, 1.0
    %v1368 = vmin.f32 %v1240, 1.0
    %v1369 = vmin.f32 %v1241, 1.0
    %v1370 = vmin.f32 %v1242, 1.0
    %v1371 = vmin.f32 %v1243, 1.0
    %v1372 = vmin.f32 %v1244, 1.0
    %v1373 = vmin.f32 %v1245, 1.0
    %v1374 = vmin.f32 %v1246, 1.0
    %v1375 = vmin.f32 %v1247, 1.0
    %v1376 = vmin.f32 %v1248, 1.0
    %v1377 = vmin.f32 %v1249, 1.0
    %v1378 = vmin.f32 %v1250, 1.0
    %v1379 = vmin.f32 %v1251, 1.0
    %v1380 = vmin.f32 %v1252, 1.0
    %v1381 = vmin.f32 %v1253, 1.0
    %v1382 = vmin.f32 %v1254, 1.0
    %v1383 = vmin.f32 %v1255, 1.0
    %v1384 = vmin.f32 %v1256, 1.0
    %v1385 = vmin.f32 %v1257, 1.0
    %v1386 = vmin.f32 %v1258, 1.0
    %v1387 = vmin.f32 %v1259, 1.0
    %v1388 = vmin.f32 %v1260, 1.0
    %v1389 = vmin.f32 %v1261, 1.0
    %v1390 = vmin.f32 %v1262, 1.0
    %v1391 = vmin.f32 %v1263, 1.0
    %v1392 = vmin.f32 %v1264, 1.0
    %v1393 = vmin.f32 %v1265, 1.0
    %v1394 = vmin.f32 %v1266, 1.0
    %v1395 = vmin.f32 %v1267, 1.0
    %v1396 = vmin.f32 %v1268, 1.0
    %v1397 = vmin.f32 %v1269, 1.0
    %v1398 = vmin.f32 %v1270, 1.0
    %v1399 = vmin.f32 %v1271, 1.0
    %v1400 = vmin.f32 %v1272, 1.0
    %v1401 = vmin.f32 %v1273, 1.0
    %v1402 = vmin.f32 %v1274, 1.0
    %v1403 = vmin.f32 %v1275, 1.0
    %v1404 = vmin.f32 %v1276, 1.0
    %v1405 = vmin.f32 %v1277, 1.0
    %v1406 = vmin.f32 %v1278, 1.0
    %v1407 = vmin.f32 %v1279, 1.0
    %v1408 = vmin.f32 %v1280, 1.0
    %v1409 = vmin.f32 %v1281, 1.0
    %v1410 = vmin.f32 %v1282, 1.0
    %v1411 = vmin.f32 %v1283, 1.0
    %v1412 = vmin.f32 %v1284, 1.0
    %v1413 = vmin.f32 %v1285, 1.0
    %v1414 = vmin.f32 %v1286, 1.0
    %v1415 = vmin.f32 %v1287, 1.0
    %v1416 = vmin.f32 %v1288, 1.0
    %v1417 = vmin.f32 %v1289, 1.0
    %v1418 = vmin.f32 %v1290, 1.0
    %v1419 = vmin.f32 %v1291, 1.0
    %v1420 = vmin.f32 %v1292, 1.0
    %v1421 = vmin.f32 %v1293, 1.0
    %v1422 = vmax.f32 %v526, 1e-08
    %v1423 = vmax.f32 %v527, 1e-08
    %v1424 = vmax.f32 %v528, 1e-08
    %v1425 = vmax.f32 %v529, 1e-08
    %v1426 = vmax.f32 %v530, 1e-08
    %v1427 = vmax.f32 %v531, 1e-08
    %v1428 = vmax.f32 %v532, 1e-08
    %v1429 = vmax.f32 %v533, 1e-08
    %v1430 = vmax.f32 %v534, 1e-08
    %v1431 = vmax.f32 %v535, 1e-08
    %v1432 = vmax.f32 %v536, 1e-08
    %v1433 = vmax.f32 %v537, 1e-08
    %v1434 = vmax.f32 %v538, 1e-08
    %v1435 = vmax.f32 %v539, 1e-08
    %v1436 = vmax.f32 %v540, 1e-08
    %v1437 = vmax.f32 %v541, 1e-08
    %v1438 = vmax.f32 %v542, 1e-08
    %v1439 = vmax.f32 %v543, 1e-08
    %v1440 = vmax.f32 %v544, 1e-08
    %v1441 = vmax.f32 %v545, 1e-08
    %v1442 = vmax.f32 %v546, 1e-08
    %v1443 = vmax.f32 %v547, 1e-08
    %v1444 = vmax.f32 %v548, 1e-08
    %v1445 = vmax.f32 %v549, 1e-08
    %v1446 = vmax.f32 %v550, 1e-08
    %v1447 = vmax.f32 %v551, 1e-08
    %v1448 = vmax.f32 %v552, 1e-08
    %v1449 = vmax.f32 %v553, 1e-08
    %v1450 = vmax.f32 %v554, 1e-08
    %v1451 = vmax.f32 %v555, 1e-08
    %v1452 = vmax.f32 %v556, 1e-08
    %v1453 = vmax.f32 %v557, 1e-08
    %v1454 = vmax.f32 %v558, 1e-08
    %v1455 = vmax.f32 %v559, 1e-08
    %v1456 = vmax.f32 %v560, 1e-08
    %v1457 = vmax.f32 %v561, 1e-08
    %v1458 = vmax.f32 %v562, 1e-08
    %v1459 = vmax.f32 %v563, 1e-08
    %v1460 = vmax.f32 %v564, 1e-08
    %v1461 = vmax.f32 %v565, 1e-08
    %v1462 = vmax.f32 %v566, 1e-08
    %v1463 = vmax.f32 %v567, 1e-08
    %v1464 = vmax.f32 %v568, 1e-08
    %v1465 = vmax.f32 %v569, 1e-08
    %v1466 = vmax.f32 %v570, 1e-08
    %v1467 = vmax.f32 %v571, 1e-08
    %v1468 = vmax.f32 %v572, 1e-08
    %v1469 = vmax.f32 %v573, 1e-08
    %v1470 = vmax.f32 %v574, 1e-08
    %v1471 = vmax.f32 %v575, 1e-08
    %v1472 = vmax.f32 %v576, 1e-08
    %v1473 = vmax.f32 %v577, 1e-08
    %v1474 = vmax.f32 %v578, 1e-08
    %v1475 = vmax.f32 %v579, 1e-08
    %v1476 = vmax.f32 %v580, 1e-08
    %v1477 = vmax.f32 %v581, 1e-08
    %v1478 = vmax.f32 %v582, 1e-08
    %v1479 = vmax.f32 %v583, 1e-08
    %v1480 = vmax.f32 %v584, 1e-08
    %v1481 = vmax.f32 %v585, 1e-08
    %v1482 = vmax.f32 %v586, 1e-08
    %v1483 = vmax.f32 %v587, 1e-08
    %v1484 = vmax.f32 %v588, 1e-08
    %v1485 = vmax.f32 %v589, 1e-08
    %v1486 = vmax.f32 %v590, 1e-08
    %v1487 = vmax.f32 %v591, 1e-08
    %v1488 = vmax.f32 %v592, 1e-08
    %v1489 = vmax.f32 %v593, 1e-08
    %v1490 = vmax.f32 %v594, 1e-08
    %v1491 = vmax.f32 %v595, 1e-08
    %v1492 = vmax.f32 %v596, 1e-08
    %v1493 = vmax.f32 %v597, 1e-08
    %v1494 = vmax.f32 %v598, 1e-08
    %v1495 = vmax.f32 %v599, 1e-08
    %v1496 = vmax.f32 %v600, 1e-08
    %v1497 = vmax.f32 %v601, 1e-08
    %v1498 = vmax.f32 %v602, 1e-08
    %v1499 = vmax.f32 %v603, 1e-08
    %v1500 = vmax.f32 %v604, 1e-08
    %v1501 = vmax.f32 %v605, 1e-08
    %v1502 = vmax.f32 %v606, 1e-08
    %v1503 = vmax.f32 %v607, 1e-08
    %v1504 = vmax.f32 %v608, 1e-08
    %v1505 = vmax.f32 %v609, 1e-08
    %v1506 = vmax.f32 %v610, 1e-08
    %v1507 = vmax.f32 %v611, 1e-08
    %v1508 = vmax.f32 %v612, 1e-08
    %v1509 = vmax.f32 %v613, 1e-08
    %v1510 = vmax.f32 %v614, 1e-08
    %v1511 = vmax.f32 %v615, 1e-08
    %v1512 = vmax.f32 %v616, 1e-08
    %v1513 = vmax.f32 %v617, 1e-08
    %v1514 = vmax.f32 %v618, 1e-08
    %v1515 = vmax.f32 %v619, 1e-08
    %v1516 = vmax.f32 %v620, 1e-08
    %v1517 = vmax.f32 %v621, 1e-08
    %v1518 = vmax.f32 %v622, 1e-08
    %v1519 = vmax.f32 %v623, 1e-08
    %v1520 = vmax.f32 %v624, 1e-08
    %v1521 = vmax.f32 %v625, 1e-08
    %v1522 = vmax.f32 %v626, 1e-08
    %v1523 = vmax.f32 %v627, 1e-08
    %v1524 = vmax.f32 %v628, 1e-08
    %v1525 = vmax.f32 %v629, 1e-08
    %v1526 = vmax.f32 %v630, 1e-08
    %v1527 = vmax.f32 %v631, 1e-08
    %v1528 = vmax.f32 %v632, 1e-08
    %v1529 = vmax.f32 %v633, 1e-08
    %v1530 = vmax.f32 %v634, 1e-08
    %v1531 = vmax.f32 %v635, 1e-08
    %v1532 = vmax.f32 %v636, 1e-08
    %v1533 = vmax.f32 %v637, 1e-08
    %v1534 = vmax.f32 %v638, 1e-08
    %v1535 = vmax.f32 %v639, 1e-08
    %v1536 = vmax.f32 %v640, 1e-08
    %v1537 = vmax.f32 %v641, 1e-08
    %v1538 = vmax.f32 %v642, 1e-08
    %v1539 = vmax.f32 %v643, 1e-08
    %v1540 = vmax.f32 %v644, 1e-08
    %v1541 = vmax.f32 %v645, 1e-08
    %v1542 = vmax.f32 %v646, 1e-08
    %v1543 = vmax.f32 %v647, 1e-08
    %v1544 = vmax.f32 %v648, 1e-08
    %v1545 = vmax.f32 %v649, 1e-08
    %v1546 = vmax.f32 %v650, 1e-08
    %v1547 = vmax.f32 %v651, 1e-08
    %v1548 = vmax.f32 %v652, 1e-08
    %v1549 = vmax.f32 %v653, 1e-08
    %v1550 = vmin.f32 %v1422, 1.0
    %v1551 = vmin.f32 %v1423, 1.0
    %v1552 = vmin.f32 %v1424, 1.0
    %v1553 = vmin.f32 %v1425, 1.0
    %v1554 = vmin.f32 %v1426, 1.0
    %v1555 = vmin.f32 %v1427, 1.0
    %v1556 = vmin.f32 %v1428, 1.0
    %v1557 = vmin.f32 %v1429, 1.0
    %v1558 = vmin.f32 %v1430, 1.0
    %v1559 = vmin.f32 %v1431, 1.0
    %v1560 = vmin.f32 %v1432, 1.0
    %v1561 = vmin.f32 %v1433, 1.0
    %v1562 = vmin.f32 %v1434, 1.0
    %v1563 = vmin.f32 %v1435, 1.0
    %v1564 = vmin.f32 %v1436, 1.0
    %v1565 = vmin.f32 %v1437, 1.0
    %v1566 = vmin.f32 %v1438, 1.0
    %v1567 = vmin.f32 %v1439, 1.0
    %v1568 = vmin.f32 %v1440, 1.0
    %v1569 = vmin.f32 %v1441, 1.0
    %v1570 = vmin.f32 %v1442, 1.0
    %v1571 = vmin.f32 %v1443, 1.0
    %v1572 = vmin.f32 %v1444, 1.0
    %v1573 = vmin.f32 %v1445, 1.0
    %v1574 = vmin.f32 %v1446, 1.0
    %v1575 = vmin.f32 %v1447, 1.0
    %v1576 = vmin.f32 %v1448, 1.0
    %v1577 = vmin.f32 %v1449, 1.0
    %v1578 = vmin.f32 %v1450, 1.0
    %v1579 = vmin.f32 %v1451, 1.0
    %v1580 = vmin.f32 %v1452, 1.0
    %v1581 = vmin.f32 %v1453, 1.0
    %v1582 = vmin.f32 %v1454, 1.0
    %v1583 = vmin.f32 %v1455, 1.0
    %v1584 = vmin.f32 %v1456, 1.0
    %v1585 = vmin.f32 %v1457, 1.0
    %v1586 = vmin.f32 %v1458, 1.0
    %v1587 = vmin.f32 %v1459, 1.0
    %v1588 = vmin.f32 %v1460, 1.0
    %v1589 = vmin.f32 %v1461, 1.0
    %v1590 = vmin.f32 %v1462, 1.0
    %v1591 = vmin.f32 %v1463, 1.0
    %v1592 = vmin.f32 %v1464, 1.0
    %v1593 = vmin.f32 %v1465, 1.0
    %v1594 = vmin.f32 %v1466, 1.0
    %v1595 = vmin.f32 %v1467, 1.0
    %v1596 = vmin.f32 %v1468, 1.0
    %v1597 = vmin.f32 %v1469, 1.0
    %v1598 = vmin.f32 %v1470, 1.0
    %v1599 = vmin.f32 %v1471, 1.0
    %v1600 = vmin.f32 %v1472, 1.0
    %v1601 = vmin.f32 %v1473, 1.0
    %v1602 = vmin.f32 %v1474, 1.0
    %v1603 = vmin.f32 %v1475, 1.0
    %v1604 = vmin.f32 %v1476, 1.0
    %v1605 = vmin.f32 %v1477, 1.0
    %v1606 = vmin.f32 %v1478, 1.0
    %v1607 = vmin.f32 %v1479, 1.0
    %v1608 = vmin.f32 %v1480, 1.0
    %v1609 = vmin.f32 %v1481, 1.0
    %v1610 = vmin.f32 %v1482, 1.0
    %v1611 = vmin.f32 %v1483, 1.0
    %v1612 = vmin.f32 %v1484, 1.0
    %v1613 = vmin.f32 %v1485, 1.0
    %v1614 = vmin.f32 %v1486, 1.0
    %v1615 = vmin.f32 %v1487, 1.0
    %v1616 = vmin.f32 %v1488, 1.0
    %v1617 = vmin.f32 %v1489, 1.0
    %v1618 = vmin.f32 %v1490, 1.0
    %v1619 = vmin.f32 %v1491, 1.0
    %v1620 = vmin.f32 %v1492, 1.0
    %v1621 = vmin.f32 %v1493, 1.0
    %v1622 = vmin.f32 %v1494, 1.0
    %v1623 = vmin.f32 %v1495, 1.0
    %v1624 = vmin.f32 %v1496, 1.0
    %v1625 = vmin.f32 %v1497, 1.0
    %v1626 = vmin.f32 %v1498, 1.0
    %v1627 = vmin.f32 %v1499, 1.0
    %v1628 = vmin.f32 %v1500, 1.0
    %v1629 = vmin.f32 %v1501, 1.0
    %v1630 = vmin.f32 %v1502, 1.0
    %v1631 = vmin.f32 %v1503, 1.0
    %v1632 = vmin.f32 %v1504, 1.0
    %v1633 = vmin.f32 %v1505, 1.0
    %v1634 = vmin.f32 %v1506, 1.0
    %v1635 = vmin.f32 %v1507, 1.0
    %v1636 = vmin.f32 %v1508, 1.0
    %v1637 = vmin.f32 %v1509, 1.0
    %v1638 = vmin.f32 %v1510, 1.0
    %v1639 = vmin.f32 %v1511, 1.0
    %v1640 = vmin.f32 %v1512, 1.0
    %v1641 = vmin.f32 %v1513, 1.0
    %v1642 = vmin.f32 %v1514, 1.0
    %v1643 = vmin.f32 %v1515, 1.0
    %v1644 = vmin.f32 %v1516, 1.0
    %v1645 = vmin.f32 %v1517, 1.0
    %v1646 = vmin.f32 %v1518, 1.0
    %v1647 = vmin.f32 %v1519, 1.0
    %v1648 = vmin.f32 %v1520, 1.0
    %v1649 = vmin.f32 %v1521, 1.0
    %v1650 = vmin.f32 %v1522, 1.0
    %v1651 = vmin.f32 %v1523, 1.0
    %v1652 = vmin.f32 %v1524, 1.0
    %v1653 = vmin.f32 %v1525, 1.0
    %v1654 = vmin.f32 %v1526, 1.0
    %v1655 = vmin.f32 %v1527, 1.0
    %v1656 = vmin.f32 %v1528, 1.0
    %v1657 = vmin.f32 %v1529, 1.0
    %v1658 = vmin.f32 %v1530, 1.0
    %v1659 = vmin.f32 %v1531, 1.0
    %v1660 = vmin.f32 %v1532, 1.0
    %v1661 = vmin.f32 %v1533, 1.0
    %v1662 = vmin.f32 %v1534, 1.0
    %v1663 = vmin.f32 %v1535, 1.0
    %v1664 = vmin.f32 %v1536, 1.0
    %v1665 = vmin.f32 %v1537, 1.0
    %v1666 = vmin.f32 %v1538, 1.0
    %v1667 = vmin.f32 %v1539, 1.0
    %v1668 = vmin.f32 %v1540, 1.0
    %v1669 = vmin.f32 %v1541, 1.0
    %v1670 = vmin.f32 %v1542, 1.0
    %v1671 = vmin.f32 %v1543, 1.0
    %v1672 = vmin.f32 %v1544, 1.0
    %v1673 = vmin.f32 %v1545, 1.0
    %v1674 = vmin.f32 %v1546, 1.0
    %v1675 = vmin.f32 %v1547, 1.0
    %v1676 = vmin.f32 %v1548, 1.0
    %v1677 = vmin.f32 %v1549, 1.0
    %v1678 = vrcp.pop %v1294
    %v1679 = vmul.f32 %v1550, %v1678
    %v1680 = vrcp.pop %v1295
    %v1681 = vmul.f32 %v1551, %v1680
    %v1682 = vrcp.pop %v1296
    %v1683 = vmul.f32 %v1552, %v1682
    %v1684 = vrcp.pop %v1297
    %v1685 = vmul.f32 %v1553, %v1684
    %v1686 = vrcp.pop %v1298
    %v1687 = vmul.f32 %v1554, %v1686
    %v1688 = vrcp.pop %v1299
    %v1689 = vmul.f32 %v1555, %v1688
    %v1690 = vrcp.pop %v1300
    %v1691 = vmul.f32 %v1556, %v1690
    %v1692 = vrcp.pop %v1301
    %v1693 = vmul.f32 %v1557, %v1692
    %v1694 = vrcp.pop %v1302
    %v1695 = vmul.f32 %v1558, %v1694
    %v1696 = vrcp.pop %v1303
    %v1697 = vmul.f32 %v1559, %v1696
    %v1698 = vrcp.pop %v1304
    %v1699 = vmul.f32 %v1560, %v1698
    %v1700 = vrcp.pop %v1305
    %v1701 = vmul.f32 %v1561, %v1700
    %v1702 = vrcp.pop %v1306
    %v1703 = vmul.f32 %v1562, %v1702
    %v1704 = vrcp.pop %v1307
    %v1705 = vmul.f32 %v1563, %v1704
    %v1706 = vrcp.pop %v1308
    %v1707 = vmul.f32 %v1564, %v1706
    %v1708 = vrcp.pop %v1309
    %v1709 = vmul.f32 %v1565, %v1708
    %v1710 = vrcp.pop %v1310
    %v1711 = vmul.f32 %v1566, %v1710
    %v1712 = vrcp.pop %v1311
    %v1713 = vmul.f32 %v1567, %v1712
    %v1714 = vrcp.pop %v1312
    %v1715 = vmul.f32 %v1568, %v1714
    %v1716 = vrcp.pop %v1313
    %v1717 = vmul.f32 %v1569, %v1716
    %v1718 = vrcp.pop %v1314
    %v1719 = vmul.f32 %v1570, %v1718
    %v1720 = vrcp.pop %v1315
    %v1721 = vmul.f32 %v1571, %v1720
    %v1722 = vrcp.pop %v1316
    %v1723 = vmul.f32 %v1572, %v1722
    %v1724 = vrcp.pop %v1317
    %v1725 = vmul.f32 %v1573, %v1724
    %v1726 = vrcp.pop %v1318
    %v1727 = vmul.f32 %v1574, %v1726
    %v1728 = vrcp.pop %v1319
    %v1729 = vmul.f32 %v1575, %v1728
    %v1730 = vrcp.pop %v1320
    %v1731 = vmul.f32 %v1576, %v1730
    %v1732 = vrcp.pop %v1321
    %v1733 = vmul.f32 %v1577, %v1732
    %v1734 = vrcp.pop %v1322
    %v1735 = vmul.f32 %v1578, %v1734
    %v1736 = vrcp.pop %v1323
    %v1737 = vmul.f32 %v1579, %v1736
    %v1738 = vrcp.pop %v1324
    %v1739 = vmul.f32 %v1580, %v1738
    %v1740 = vrcp.pop %v1325
    %v1741 = vmul.f32 %v1581, %v1740
    %v1742 = vrcp.pop %v1326
    %v1743 = vmul.f32 %v1582, %v1742
    %v1744 = vrcp.pop %v1327
    %v1745 = vmul.f32 %v1583, %v1744
    %v1746 = vrcp.pop %v1328
    %v1747 = vmul.f32 %v1584, %v1746
    %v1748 = vrcp.pop %v1329
    %v1749 = vmul.f32 %v1585, %v1748
    %v1750 = vrcp.pop %v1330
    %v1751 = vmul.f32 %v1586, %v1750
    %v1752 = vrcp.pop %v1331
    %v1753 = vmul.f32 %v1587, %v1752
    %v1754 = vrcp.pop %v1332
    %v1755 = vmul.f32 %v1588, %v1754
    %v1756 = vrcp.pop %v1333
    %v1757 = vmul.f32 %v1589, %v1756
    %v1758 = vrcp.pop %v1334
    %v1759 = vmul.f32 %v1590, %v1758
    %v1760 = vrcp.pop %v1335
    %v1761 = vmul.f32 %v1591, %v1760
    %v1762 = vrcp.pop %v1336
    %v1763 = vmul.f32 %v1592, %v1762
    %v1764 = vrcp.pop %v1337
    %v1765 = vmul.f32 %v1593, %v1764
    %v1766 = vrcp.pop %v1338
    %v1767 = vmul.f32 %v1594, %v1766
    %v1768 = vrcp.pop %v1339
    %v1769 = vmul.f32 %v1595, %v1768
    %v1770 = vrcp.pop %v1340
    %v1771 = vmul.f32 %v1596, %v1770
    %v1772 = vrcp.pop %v1341
    %v1773 = vmul.f32 %v1597, %v1772
    %v1774 = vrcp.pop %v1342
    %v1775 = vmul.f32 %v1598, %v1774
    %v1776 = vrcp.pop %v1343
    %v1777 = vmul.f32 %v1599, %v1776
    %v1778 = vrcp.pop %v1344
    %v1779 = vmul.f32 %v1600, %v1778
    %v1780 = vrcp.pop %v1345
    %v1781 = vmul.f32 %v1601, %v1780
    %v1782 = vrcp.pop %v1346
    %v1783 = vmul.f32 %v1602, %v1782
    %v1784 = vrcp.pop %v1347
    %v1785 = vmul.f32 %v1603, %v1784
    %v1786 = vrcp.pop %v1348
    %v1787 = vmul.f32 %v1604, %v1786
    %v1788 = vrcp.pop %v1349
    %v1789 = vmul.f32 %v1605, %v1788
    %v1790 = vrcp.pop %v1350
    %v1791 = vmul.f32 %v1606, %v1790
    %v1792 = vrcp.pop %v1351
    %v1793 = vmul.f32 %v1607, %v1792
    %v1794 = vrcp.pop %v1352
    %v1795 = vmul.f32 %v1608, %v1794
    %v1796 = vrcp.pop %v1353
    %v1797 = vmul.f32 %v1609, %v1796
    %v1798 = vrcp.pop %v1354
    %v1799 = vmul.f32 %v1610, %v1798
    %v1800 = vrcp.pop %v1355
    %v1801 = vmul.f32 %v1611, %v1800
    %v1802 = vrcp.pop %v1356
    %v1803 = vmul.f32 %v1612, %v1802
    %v1804 = vrcp.pop %v1357
    %v1805 = vmul.f32 %v1613, %v1804
    %v1806 = vrcp.pop %v1358
    %v1807 = vmul.f32 %v1614, %v1806
    %v1808 = vrcp.pop %v1359
    %v1809 = vmul.f32 %v1615, %v1808
    %v1810 = vrcp.pop %v1360
    %v1811 = vmul.f32 %v1616, %v1810
    %v1812 = vrcp.pop %v1361
    %v1813 = vmul.f32 %v1617, %v1812
    %v1814 = vrcp.pop %v1362
    %v1815 = vmul.f32 %v1618, %v1814
    %v1816 = vrcp.pop %v1363
    %v1817 = vmul.f32 %v1619, %v1816
    %v1818 = vrcp.pop %v1364
    %v1819 = vmul.f32 %v1620, %v1818
    %v1820 = vrcp.pop %v1365
    %v1821 = vmul.f32 %v1621, %v1820
    %v1822 = vrcp.pop %v1366
    %v1823 = vmul.f32 %v1622, %v1822
    %v1824 = vrcp.pop %v1367
    %v1825 = vmul.f32 %v1623, %v1824
    %v1826 = vrcp.pop %v1368
    %v1827 = vmul.f32 %v1624, %v1826
    %v1828 = vrcp.pop %v1369
    %v1829 = vmul.f32 %v1625, %v1828
    %v1830 = vrcp.pop %v1370
    %v1831 = vmul.f32 %v1626, %v1830
    %v1832 = vrcp.pop %v1371
    %v1833 = vmul.f32 %v1627, %v1832
    %v1834 = vrcp.pop %v1372
    %v1835 = vmul.f32 %v1628, %v1834
    %v1836 = vrcp.pop %v1373
    %v1837 = vmul.f32 %v1629, %v1836
    %v1838 = vrcp.pop %v1374
    %v1839 = vmul.f32 %v1630, %v1838
    %v1840 = vrcp.pop %v1375
    %v1841 = vmul.f32 %v1631, %v1840
    %v1842 = vrcp.pop %v1376
    %v1843 = vmul.f32 %v1632, %v1842
    %v1844 = vrcp.pop %v1377
    %v1845 = vmul.f32 %v1633, %v1844
    %v1846 = vrcp.pop %v1378
    %v1847 = vmul.f32 %v1634, %v1846
    %v1848 = vrcp.pop %v1379
    %v1849 = vmul.f32 %v1635, %v1848
    %v1850 = vrcp.pop %v1380
    %v1851 = vmul.f32 %v1636, %v1850
    %v1852 = vrcp.pop %v1381
    %v1853 = vmul.f32 %v1637, %v1852
    %v1854 = vrcp.pop %v1382
    %v1855 = vmul.f32 %v1638, %v1854
    %v1856 = vrcp.pop %v1383
    %v1857 = vmul.f32 %v1639, %v1856
    %v1858 = vrcp.pop %v1384
    %v1859 = vmul.f32 %v1640, %v1858
    %v1860 = vrcp.pop %v1385
    %v1861 = vmul.f32 %v1641, %v1860
    %v1862 = vrcp.pop %v1386
    %v1863 = vmul.f32 %v1642, %v1862
    %v1864 = vrcp.pop %v1387
    %v1865 = vmul.f32 %v1643, %v1864
    %v1866 = vrcp.pop %v1388
    %v1867 = vmul.f32 %v1644, %v1866
    %v1868 = vrcp.pop %v1389
    %v1869 = vmul.f32 %v1645, %v1868
    %v1870 = vrcp.pop %v1390
    %v1871 = vmul.f32 %v1646, %v1870
    %v1872 = vrcp.pop %v1391
    %v1873 = vmul.f32 %v1647, %v1872
    %v1874 = vrcp.pop %v1392
    %v1875 = vmul.f32 %v1648, %v1874
    %v1876 = vrcp.pop %v1393
    %v1877 = vmul.f32 %v1649, %v1876
    %v1878 = vrcp.pop %v1394
    %v1879 = vmul.f32 %v1650, %v1878
    %v1880 = vrcp.pop %v1395
    %v1881 = vmul.f32 %v1651, %v1880
    %v1882 = vrcp.pop %v1396
    %v1883 = vmul.f32 %v1652, %v1882
    %v1884 = vrcp.pop %v1397
    %v1885 = vmul.f32 %v1653, %v1884
    %v1886 = vrcp.pop %v1398
    %v1887 = vmul.f32 %v1654, %v1886
    %v1888 = vrcp.pop %v1399
    %v1889 = vmul.f32 %v1655, %v1888
    %v1890 = vrcp.pop %v1400
    %v1891 = vmul.f32 %v1656, %v1890
    %v1892 = vrcp.pop %v1401
    %v1893 = vmul.f32 %v1657, %v1892
    %v1894 = vrcp.pop %v1402
    %v1895 = vmul.f32 %v1658, %v1894
    %v1896 = vrcp.pop %v1403
    %v1897 = vmul.f32 %v1659, %v1896
    %v1898 = vrcp.pop %v1404
    %v1899 = vmul.f32 %v1660, %v1898
    %v1900 = vrcp.pop %v1405
    %v1901 = vmul.f32 %v1661, %v1900
    %v1902 = vrcp.pop %v1406
    %v1903 = vmul.f32 %v1662, %v1902
    %v1904 = vrcp.pop %v1407
    %v1905 = vmul.f32 %v1663, %v1904
    %v1906 = vrcp.pop %v1408
    %v1907 = vmul.f32 %v1664, %v1906
    %v1908 = vrcp.pop %v1409
    %v1909 = vmul.f32 %v1665, %v1908
    %v1910 = vrcp.pop %v1410
    %v1911 = vmul.f32 %v1666, %v1910
    %v1912 = vrcp.pop %v1411
    %v1913 = vmul.f32 %v1667, %v1912
    %v1914 = vrcp.pop %v1412
    %v1915 = vmul.f32 %v1668, %v1914
    %v1916 = vrcp.pop %v1413
    %v1917 = vmul.f32 %v1669, %v1916
    %v1918 = vrcp.pop %v1414
    %v1919 = vmul.f32 %v1670, %v1918
    %v1920 = vrcp.pop %v1415
    %v1921 = vmul.f32 %v1671, %v1920
    %v1922 = vrcp.pop %v1416
    %v1923 = vmul.f32 %v1672, %v1922
    %v1924 = vrcp.pop %v1417
    %v1925 = vmul.f32 %v1673, %v1924
    %v1926 = vrcp.pop %v1418
    %v1927 = vmul.f32 %v1674, %v1926
    %v1928 = vrcp.pop %v1419
    %v1929 = vmul.f32 %v1675, %v1928
    %v1930 = vrcp.pop %v1420
    %v1931 = vmul.f32 %v1676, %v1930
    %v1932 = vrcp.pop %v1421
    %v1933 = vmul.f32 %v1677, %v1932
    %v1934 = vlog2.pop %v1679
    %v1935 = vmul.f32 %v1934, 0.6931472
    %v1936 = vlog2.pop %v1681
    %v1937 = vmul.f32 %v1936, 0.6931472
    %v1938 = vlog2.pop %v1683
    %v1939 = vmul.f32 %v1938, 0.6931472
    %v1940 = vlog2.pop %v1685
    %v1941 = vmul.f32 %v1940, 0.6931472
    %v1942 = vlog2.pop %v1687
    %v1943 = vmul.f32 %v1942, 0.6931472
    %v1944 = vlog2.pop %v1689
    %v1945 = vmul.f32 %v1944, 0.6931472
    %v1946 = vlog2.pop %v1691
    %v1947 = vmul.f32 %v1946, 0.6931472
    %v1948 = vlog2.pop %v1693
    %v1949 = vmul.f32 %v1948, 0.6931472
    %v1950 = vlog2.pop %v1695
    %v1951 = vmul.f32 %v1950, 0.6931472
    %v1952 = vlog2.pop %v1697
    %v1953 = vmul.f32 %v1952, 0.6931472
    %v1954 = vlog2.pop %v1699
    %v1955 = vmul.f32 %v1954, 0.6931472
    %v1956 = vlog2.pop %v1701
    %v1957 = vmul.f32 %v1956, 0.6931472
    %v1958 = vlog2.pop %v1703
    %v1959 = vmul.f32 %v1958, 0.6931472
    %v1960 = vlog2.pop %v1705
    %v1961 = vmul.f32 %v1960, 0.6931472
    %v1962 = vlog2.pop %v1707
    %v1963 = vmul.f32 %v1962, 0.6931472
    %v1964 = vlog2.pop %v1709
    %v1965 = vmul.f32 %v1964, 0.6931472
    %v1966 = vlog2.pop %v1711
    %v1967 = vmul.f32 %v1966, 0.6931472
    %v1968 = vlog2.pop %v1713
    %v1969 = vmul.f32 %v1968, 0.6931472
    %v1970 = vlog2.pop %v1715
    %v1971 = vmul.f32 %v1970, 0.6931472
    %v1972 = vlog2.pop %v1717
    %v1973 = vmul.f32 %v1972, 0.6931472
    %v1974 = vlog2.pop %v1719
    %v1975 = vmul.f32 %v1974, 0.6931472
    %v1976 = vlog2.pop %v1721
    %v1977 = vmul.f32 %v1976, 0.6931472
    %v1978 = vlog2.pop %v1723
    %v1979 = vmul.f32 %v1978, 0.6931472
    %v1980 = vlog2.pop %v1725
    %v1981 = vmul.f32 %v1980, 0.6931472
    %v1982 = vlog2.pop %v1727
    %v1983 = vmul.f32 %v1982, 0.6931472
    %v1984 = vlog2.pop %v1729
    %v1985 = vmul.f32 %v1984, 0.6931472
    %v1986 = vlog2.pop %v1731
    %v1987 = vmul.f32 %v1986, 0.6931472
    %v1988 = vlog2.pop %v1733
    %v1989 = vmul.f32 %v1988, 0.6931472
    %v1990 = vlog2.pop %v1735
    %v1991 = vmul.f32 %v1990, 0.6931472
    %v1992 = vlog2.pop %v1737
    %v1993 = vmul.f32 %v1992, 0.6931472
    %v1994 = vlog2.pop %v1739
    %v1995 = vmul.f32 %v1994, 0.6931472
    %v1996 = vlog2.pop %v1741
    %v1997 = vmul.f32 %v1996, 0.6931472
    %v1998 = vlog2.pop %v1743
    %v1999 = vmul.f32 %v1998, 0.6931472
    %v2000 = vlog2.pop %v1745
    %v2001 = vmul.f32 %v2000, 0.6931472
    %v2002 = vlog2.pop %v1747
    %v2003 = vmul.f32 %v2002, 0.6931472
    %v2004 = vlog2.pop %v1749
    %v2005 = vmul.f32 %v2004, 0.6931472
    %v2006 = vlog2.pop %v1751
    %v2007 = vmul.f32 %v2006, 0.6931472
    %v2008 = vlog2.pop %v1753
    %v2009 = vmul.f32 %v2008, 0.6931472
    %v2010 = vlog2.pop %v1755
    %v2011 = vmul.f32 %v2010, 0.6931472
    %v2012 = vlog2.pop %v1757
    %v2013 = vmul.f32 %v2012, 0.6931472
    %v2014 = vlog2.pop %v1759
    %v2015 = vmul.f32 %v2014, 0.6931472
    %v2016 = vlog2.pop %v1761
    %v2017 = vmul.f32 %v2016, 0.6931472
    %v2018 = vlog2.pop %v1763
    %v2019 = vmul.f32 %v2018, 0.6931472
    %v2020 = vlog2.pop %v1765
    %v2021 = vmul.f32 %v2020, 0.6931472
    %v2022 = vlog2.pop %v1767
    %v2023 = vmul.f32 %v2022, 0.6931472
    %v2024 = vlog2.pop %v1769
    %v2025 = vmul.f32 %v2024, 0.6931472
    %v2026 = vlog2.pop %v1771
    %v2027 = vmul.f32 %v2026, 0.6931472
    %v2028 = vlog2.pop %v1773
    %v2029 = vmul.f32 %v2028, 0.6931472
    %v2030 = vlog2.pop %v1775
    %v2031 = vmul.f32 %v2030, 0.6931472
    %v2032 = vlog2.pop %v1777
    %v2033 = vmul.f32 %v2032, 0.6931472
    %v2034 = vlog2.pop %v1779
    %v2035 = vmul.f32 %v2034, 0.6931472
    %v2036 = vlog2.pop %v1781
    %v2037 = vmul.f32 %v2036, 0.6931472
    %v2038 = vlog2.pop %v1783
    %v2039 = vmul.f32 %v2038, 0.6931472
    %v2040 = vlog2.pop %v1785
    %v2041 = vmul.f32 %v2040, 0.6931472
    %v2042 = vlog2.pop %v1787
    %v2043 = vmul.f32 %v2042, 0.6931472
    %v2044 = vlog2.pop %v1789
    %v2045 = vmul.f32 %v2044, 0.6931472
    %v2046 = vlog2.pop %v1791
    %v2047 = vmul.f32 %v2046, 0.6931472
    %v2048 = vlog2.pop %v1793
    %v2049 = vmul.f32 %v2048, 0.6931472
    %v2050 = vlog2.pop %v1795
    %v2051 = vmul.f32 %v2050, 0.6931472
    %v2052 = vlog2.pop %v1797
    %v2053 = vmul.f32 %v2052, 0.6931472
    %v2054 = vlog2.pop %v1799
    %v2055 = vmul.f32 %v2054, 0.6931472
    %v2056 = vlog2.pop %v1801
    %v2057 = vmul.f32 %v2056, 0.6931472
    %v2058 = vlog2.pop %v1803
    %v2059 = vmul.f32 %v2058, 0.6931472
    %v2060 = vlog2.pop %v1805
    %v2061 = vmul.f32 %v2060, 0.6931472
    %v2062 = vlog2.pop %v1807
    %v2063 = vmul.f32 %v2062, 0.6931472
    %v2064 = vlog2.pop %v1809
    %v2065 = vmul.f32 %v2064, 0.6931472
    %v2066 = vlog2.pop %v1811
    %v2067 = vmul.f32 %v2066, 0.6931472
    %v2068 = vlog2.pop %v1813
    %v2069 = vmul.f32 %v2068, 0.6931472
    %v2070 = vlog2.pop %v1815
    %v2071 = vmul.f32 %v2070, 0.6931472
    %v2072 = vlog2.pop %v1817
    %v2073 = vmul.f32 %v2072, 0.6931472
    %v2074 = vlog2.pop %v1819
    %v2075 = vmul.f32 %v2074, 0.6931472
    %v2076 = vlog2.pop %v1821
    %v2077 = vmul.f32 %v2076, 0.6931472
    %v2078 = vlog2.pop %v1823
    %v2079 = vmul.f32 %v2078, 0.6931472
    %v2080 = vlog2.pop %v1825
    %v2081 = vmul.f32 %v2080, 0.6931472
    %v2082 = vlog2.pop %v1827
    %v2083 = vmul.f32 %v2082, 0.6931472
    %v2084 = vlog2.pop %v1829
    %v2085 = vmul.f32 %v2084, 0.6931472
    %v2086 = vlog2.pop %v1831
    %v2087 = vmul.f32 %v2086, 0.6931472
    %v2088 = vlog2.pop %v1833
    %v2089 = vmul.f32 %v2088, 0.6931472
    %v2090 = vlog2.pop %v1835
    %v2091 = vmul.f32 %v2090, 0.6931472
    %v2092 = vlog2.pop %v1837
    %v2093 = vmul.f32 %v2092, 0.6931472
    %v2094 = vlog2.pop %v1839
    %v2095 = vmul.f32 %v2094, 0.6931472
    %v2096 = vlog2.pop %v1841
    %v2097 = vmul.f32 %v2096, 0.6931472
    %v2098 = vlog2.pop %v1843
    %v2099 = vmul.f32 %v2098, 0.6931472
    %v2100 = vlog2.pop %v1845
    %v2101 = vmul.f32 %v2100, 0.6931472
    %v2102 = vlog2.pop %v1847
    %v2103 = vmul.f32 %v2102, 0.6931472
    %v2104 = vlog2.pop %v1849
    %v2105 = vmul.f32 %v2104, 0.6931472
    %v2106 = vlog2.pop %v1851
    %v2107 = vmul.f32 %v2106, 0.6931472
    %v2108 = vlog2.pop %v1853
    %v2109 = vmul.f32 %v2108, 0.6931472
    %v2110 = vlog2.pop %v1855
    %v2111 = vmul.f32 %v2110, 0.6931472
    %v2112 = vlog2.pop %v1857
    %v2113 = vmul.f32 %v2112, 0.6931472
    %v2114 = vlog2.pop %v1859
    %v2115 = vmul.f32 %v2114, 0.6931472
    %v2116 = vlog2.pop %v1861
    %v2117 = vmul.f32 %v2116, 0.6931472
    %v2118 = vlog2.pop %v1863
    %v2119 = vmul.f32 %v2118, 0.6931472
    %v2120 = vlog2.pop %v1865
    %v2121 = vmul.f32 %v2120, 0.6931472
    %v2122 = vlog2.pop %v1867
    %v2123 = vmul.f32 %v2122, 0.6931472
    %v2124 = vlog2.pop %v1869
    %v2125 = vmul.f32 %v2124, 0.6931472
    %v2126 = vlog2.pop %v1871
    %v2127 = vmul.f32 %v2126, 0.6931472
    %v2128 = vlog2.pop %v1873
    %v2129 = vmul.f32 %v2128, 0.6931472
    %v2130 = vlog2.pop %v1875
    %v2131 = vmul.f32 %v2130, 0.6931472
    %v2132 = vlog2.pop %v1877
    %v2133 = vmul.f32 %v2132, 0.6931472
    %v2134 = vlog2.pop %v1879
    %v2135 = vmul.f32 %v2134, 0.6931472
    %v2136 = vlog2.pop %v1881
    %v2137 = vmul.f32 %v2136, 0.6931472
    %v2138 = vlog2.pop %v1883
    %v2139 = vmul.f32 %v2138, 0.6931472
    %v2140 = vlog2.pop %v1885
    %v2141 = vmul.f32 %v2140, 0.6931472
    %v2142 = vlog2.pop %v1887
    %v2143 = vmul.f32 %v2142, 0.6931472
    %v2144 = vlog2.pop %v1889
    %v2145 = vmul.f32 %v2144, 0.6931472
    %v2146 = vlog2.pop %v1891
    %v2147 = vmul.f32 %v2146, 0.6931472
    %v2148 = vlog2.pop %v1893
    %v2149 = vmul.f32 %v2148, 0.6931472
    %v2150 = vlog2.pop %v1895
    %v2151 = vmul.f32 %v2150, 0.6931472
    %v2152 = vlog2.pop %v1897
    %v2153 = vmul.f32 %v2152, 0.6931472
    %v2154 = vlog2.pop %v1899
    %v2155 = vmul.f32 %v2154, 0.6931472
    %v2156 = vlog2.pop %v1901
    %v2157 = vmul.f32 %v2156, 0.6931472
    %v2158 = vlog2.pop %v1903
    %v2159 = vmul.f32 %v2158, 0.6931472
    %v2160 = vlog2.pop %v1905
    %v2161 = vmul.f32 %v2160, 0.6931472
    %v2162 = vlog2.pop %v1907
    %v2163 = vmul.f32 %v2162, 0.6931472
    %v2164 = vlog2.pop %v1909
    %v2165 = vmul.f32 %v2164, 0.6931472
    %v2166 = vlog2.pop %v1911
    %v2167 = vmul.f32 %v2166, 0.6931472
    %v2168 = vlog2.pop %v1913
    %v2169 = vmul.f32 %v2168, 0.6931472
    %v2170 = vlog2.pop %v1915
    %v2171 = vmul.f32 %v2170, 0.6931472
    %v2172 = vlog2.pop %v1917
    %v2173 = vmul.f32 %v2172, 0.6931472
    %v2174 = vlog2.pop %v1919
    %v2175 = vmul.f32 %v2174, 0.6931472
    %v2176 = vlog2.pop %v1921
    %v2177 = vmul.f32 %v2176, 0.6931472
    %v2178 = vlog2.pop %v1923
    %v2179 = vmul.f32 %v2178, 0.6931472
    %v2180 = vlog2.pop %v1925
    %v2181 = vmul.f32 %v2180, 0.6931472
    %v2182 = vlog2.pop %v1927
    %v2183 = vmul.f32 %v2182, 0.6931472
    %v2184 = vlog2.pop %v1929
    %v2185 = vmul.f32 %v2184, 0.6931472
    %v2186 = vlog2.pop %v1931
    %v2187 = vmul.f32 %v2186, 0.6931472
    %v2188 = vlog2.pop %v1933
    %v2189 = vmul.f32 %v2188, 0.6931472
    %v2190 = vmul.f32 %v1550, %v1935
    %v2191 = vmul.f32 %v1551, %v1937
    %v2192 = vmul.f32 %v1552, %v1939
    %v2193 = vmul.f32 %v1553, %v1941
    %v2194 = vmul.f32 %v1554, %v1943
    %v2195 = vmul.f32 %v1555, %v1945
    %v2196 = vmul.f32 %v1556, %v1947
    %v2197 = vmul.f32 %v1557, %v1949
    %v2198 = vmul.f32 %v1558, %v1951
    %v2199 = vmul.f32 %v1559, %v1953
    %v2200 = vmul.f32 %v1560, %v1955
    %v2201 = vmul.f32 %v1561, %v1957
    %v2202 = vmul.f32 %v1562, %v1959
    %v2203 = vmul.f32 %v1563, %v1961
    %v2204 = vmul.f32 %v1564, %v1963
    %v2205 = vmul.f32 %v1565, %v1965
    %v2206 = vmul.f32 %v1566, %v1967
    %v2207 = vmul.f32 %v1567, %v1969
    %v2208 = vmul.f32 %v1568, %v1971
    %v2209 = vmul.f32 %v1569, %v1973
    %v2210 = vmul.f32 %v1570, %v1975
    %v2211 = vmul.f32 %v1571, %v1977
    %v2212 = vmul.f32 %v1572, %v1979
    %v2213 = vmul.f32 %v1573, %v1981
    %v2214 = vmul.f32 %v1574, %v1983
    %v2215 = vmul.f32 %v1575, %v1985
    %v2216 = vmul.f32 %v1576, %v1987
    %v2217 = vmul.f32 %v1577, %v1989
    %v2218 = vmul.f32 %v1578, %v1991
    %v2219 = vmul.f32 %v1579, %v1993
    %v2220 = vmul.f32 %v1580, %v1995
    %v2221 = vmul.f32 %v1581, %v1997
    %v2222 = vmul.f32 %v1582, %v1999
    %v2223 = vmul.f32 %v1583, %v2001
    %v2224 = vmul.f32 %v1584, %v2003
    %v2225 = vmul.f32 %v1585, %v2005
    %v2226 = vmul.f32 %v1586, %v2007
    %v2227 = vmul.f32 %v1587, %v2009
    %v2228 = vmul.f32 %v1588, %v2011
    %v2229 = vmul.f32 %v1589, %v2013
    %v2230 = vmul.f32 %v1590, %v2015
    %v2231 = vmul.f32 %v1591, %v2017
    %v2232 = vmul.f32 %v1592, %v2019
    %v2233 = vmul.f32 %v1593, %v2021
    %v2234 = vmul.f32 %v1594, %v2023
    %v2235 = vmul.f32 %v1595, %v2025
    %v2236 = vmul.f32 %v1596, %v2027
    %v2237 = vmul.f32 %v1597, %v2029
    %v2238 = vmul.f32 %v1598, %v2031
    %v2239 = vmul.f32 %v1599, %v2033
    %v2240 = vmul.f32 %v1600, %v2035
    %v2241 = vmul.f32 %v1601, %v2037
    %v2242 = vmul.f32 %v1602, %v2039
    %v2243 = vmul.f32 %v1603, %v2041
    %v2244 = vmul.f32 %v1604, %v2043
    %v2245 = vmul.f32 %v1605, %v2045
    %v2246 = vmul.f32 %v1606, %v2047
    %v2247 = vmul.f32 %v1607, %v2049
    %v2248 = vmul.f32 %v1608, %v2051
    %v2249 = vmul.f32 %v1609, %v2053
    %v2250 = vmul.f32 %v1610, %v2055
    %v2251 = vmul.f32 %v1611, %v2057
    %v2252 = vmul.f32 %v1612, %v2059
    %v2253 = vmul.f32 %v1613, %v2061
    %v2254 = vmul.f32 %v1614, %v2063
    %v2255 = vmul.f32 %v1615, %v2065
    %v2256 = vmul.f32 %v1616, %v2067
    %v2257 = vmul.f32 %v1617, %v2069
    %v2258 = vmul.f32 %v1618, %v2071
    %v2259 = vmul.f32 %v1619, %v2073
    %v2260 = vmul.f32 %v1620, %v2075
    %v2261 = vmul.f32 %v1621, %v2077
    %v2262 = vmul.f32 %v1622, %v2079
    %v2263 = vmul.f32 %v1623, %v2081
    %v2264 = vmul.f32 %v1624, %v2083
    %v2265 = vmul.f32 %v1625, %v2085
    %v2266 = vmul.f32 %v1626, %v2087
    %v2267 = vmul.f32 %v1627, %v2089
    %v2268 = vmul.f32 %v1628, %v2091
    %v2269 = vmul.f32 %v1629, %v2093
    %v2270 = vmul.f32 %v1630, %v2095
    %v2271 = vmul.f32 %v1631, %v2097
    %v2272 = vmul.f32 %v1632, %v2099
    %v2273 = vmul.f32 %v1633, %v2101
    %v2274 = vmul.f32 %v1634, %v2103
    %v2275 = vmul.f32 %v1635, %v2105
    %v2276 = vmul.f32 %v1636, %v2107
    %v2277 = vmul.f32 %v1637, %v2109
    %v2278 = vmul.f32 %v1638, %v2111
    %v2279 = vmul.f32 %v1639, %v2113
    %v2280 = vmul.f32 %v1640, %v2115
    %v2281 = vmul.f32 %v1641, %v2117
    %v2282 = vmul.f32 %v1642, %v2119
    %v2283 = vmul.f32 %v1643, %v2121
    %v2284 = vmul.f32 %v1644, %v2123
    %v2285 = vmul.f32 %v1645, %v2125
    %v2286 = vmul.f32 %v1646, %v2127
    %v2287 = vmul.f32 %v1647, %v2129
    %v2288 = vmul.f32 %v1648, %v2131
    %v2289 = vmul.f32 %v1649, %v2133
    %v2290 = vmul.f32 %v1650, %v2135
    %v2291 = vmul.f32 %v1651, %v2137
    %v2292 = vmul.f32 %v1652, %v2139
    %v2293 = vmul.f32 %v1653, %v2141
    %v2294 = vmul.f32 %v1654, %v2143
    %v2295 = vmul.f32 %v1655, %v2145
    %v2296 = vmul.f32 %v1656, %v2147
    %v2297 = vmul.f32 %v1657, %v2149
    %v2298 = vmul.f32 %v1658, %v2151
    %v2299 = vmul.f32 %v1659, %v2153
    %v2300 = vmul.f32 %v1660, %v2155
    %v2301 = vmul.f32 %v1661, %v2157
    %v2302 = vmul.f32 %v1662, %v2159
    %v2303 = vmul.f32 %v1663, %v2161
    %v2304 = vmul.f32 %v1664, %v2163
    %v2305 = vmul.f32 %v1665, %v2165
    %v2306 = vmul.f32 %v1666, %v2167
    %v2307 = vmul.f32 %v1667, %v2169
    %v2308 = vmul.f32 %v1668, %v2171
    %v2309 = vmul.f32 %v1669, %v2173
    %v2310 = vmul.f32 %v1670, %v2175
    %v2311 = vmul.f32 %v1671, %v2177
    %v2312 = vmul.f32 %v1672, %v2179
    %v2313 = vmul.f32 %v1673, %v2181
    %v2314 = vmul.f32 %v1674, %v2183
    %v2315 = vmul.f32 %v1675, %v2185
    %v2316 = vmul.f32 %v1676, %v2187
    %v2317 = vmul.f32 %v1677, %v2189
    %p2318 = scmp.eq.s32.totalorder 0, 0
    // Predicated region
    $region42: #{tpu_custom_call.1} parent=1 // pred_check
      %p2319 = pneg %p2318
    $region43: #{tpu_custom_call.1} parent=1 // pred_check_branch
      %2321 = sbr.rel (%p2319) target = $region45
    $region44: #{tpu_custom_call.1} parent=1 // pred_region
      %2322 = vst [vmem:[#allocation2] sm:$0xff] 0.0
      %2323 = vst [vmem:[#allocation2 + $0x8] sm:$0xff] 0.0
      %2324 = vst [vmem:[#allocation2 + $0x10] sm:$0xff] 0.0
      %2325 = vst [vmem:[#allocation2 + $0x18] sm:$0xff] 0.0
      %2326 = vst [vmem:[#allocation2 + $0x20] sm:$0xff] 0.0
      %2327 = vst [vmem:[#allocation2 + $0x28] sm:$0xff] 0.0
      %2328 = vst [vmem:[#allocation2 + $0x30] sm:$0xff] 0.0
      %2329 = vst [vmem:[#allocation2 + $0x38] sm:$0xff] 0.0
      %2330 = vst [vmem:[#allocation2 + $0x40] sm:$0xff] 0.0
      %2331 = vst [vmem:[#allocation2 + $0x48] sm:$0xff] 0.0
      %2332 = vst [vmem:[#allocation2 + $0x50] sm:$0xff] 0.0
      %2333 = vst [vmem:[#allocation2 + $0x58] sm:$0xff] 0.0
      %2334 = vst [vmem:[#allocation2 + $0x60] sm:$0xff] 0.0
      %2335 = vst [vmem:[#allocation2 + $0x68] sm:$0xff] 0.0
      %2336 = vst [vmem:[#allocation2 + $0x70] sm:$0xff] 0.0
      %2337 = vst [vmem:[#allocation2 + $0x78] sm:$0xff] 0.0
      %2338 = vst [vmem:[#allocation2 + $0x80] sm:$0xff] 0.0
      %2339 = vst [vmem:[#allocation2 + $0x88] sm:$0xff] 0.0
      %2340 = vst [vmem:[#allocation2 + $0x90] sm:$0xff] 0.0
      %2341 = vst [vmem:[#allocation2 + $0x98] sm:$0xff] 0.0
      %2342 = vst [vmem:[#allocation2 + $0xa0] sm:$0xff] 0.0
      %2343 = vst [vmem:[#allocation2 + $0xa8] sm:$0xff] 0.0
      %2344 = vst [vmem:[#allocation2 + $0xb0] sm:$0xff] 0.0
      %2345 = vst [vmem:[#allocation2 + $0xb8] sm:$0xff] 0.0
      %2346 = vst [vmem:[#allocation2 + $0xc0] sm:$0xff] 0.0
      %2347 = vst [vmem:[#allocation2 + $0xc8] sm:$0xff] 0.0
      %2348 = vst [vmem:[#allocation2 + $0xd0] sm:$0xff] 0.0
      %2349 = vst [vmem:[#allocation2 + $0xd8] sm:$0xff] 0.0
      %2350 = vst [vmem:[#allocation2 + $0xe0] sm:$0xff] 0.0
      %2351 = vst [vmem:[#allocation2 + $0xe8] sm:$0xff] 0.0
      %2352 = vst [vmem:[#allocation2 + $0xf0] sm:$0xff] 0.0
      %2353 = vst [vmem:[#allocation2 + $0xf8] sm:$0xff] 0.0
      %2354 = vst [vmem:[#allocation2 + $0x100] sm:$0xff] 0.0
      %2355 = vst [vmem:[#allocation2 + $0x108] sm:$0xff] 0.0
      %2356 = vst [vmem:[#allocation2 + $0x110] sm:$0xff] 0.0
      %2357 = vst [vmem:[#allocation2 + $0x118] sm:$0xff] 0.0
      %2358 = vst [vmem:[#allocation2 + $0x120] sm:$0xff] 0.0
      %2359 = vst [vmem:[#allocation2 + $0x128] sm:$0xff] 0.0
      %2360 = vst [vmem:[#allocation2 + $0x130] sm:$0xff] 0.0
      %2361 = vst [vmem:[#allocation2 + $0x138] sm:$0xff] 0.0
      %2362 = vst [vmem:[#allocation2 + $0x140] sm:$0xff] 0.0
      %2363 = vst [vmem:[#allocation2 + $0x148] sm:$0xff] 0.0
      %2364 = vst [vmem:[#allocation2 + $0x150] sm:$0xff] 0.0
      %2365 = vst [vmem:[#allocation2 + $0x158] sm:$0xff] 0.0
      %2366 = vst [vmem:[#allocation2 + $0x160] sm:$0xff] 0.0
      %2367 = vst [vmem:[#allocation2 + $0x168] sm:$0xff] 0.0
      %2368 = vst [vmem:[#allocation2 + $0x170] sm:$0xff] 0.0
      %2369 = vst [vmem:[#allocation2 + $0x178] sm:$0xff] 0.0
      %2370 = vst [vmem:[#allocation2 + $0x180] sm:$0xff] 0.0
      %2371 = vst [vmem:[#allocation2 + $0x188] sm:$0xff] 0.0
      %2372 = vst [vmem:[#allocation2 + $0x190] sm:$0xff] 0.0
      %2373 = vst [vmem:[#allocation2 + $0x198] sm:$0xff] 0.0
      %2374 = vst [vmem:[#allocation2 + $0x1a0] sm:$0xff] 0.0
      %2375 = vst [vmem:[#allocation2 + $0x1a8] sm:$0xff] 0.0
      %2376 = vst [vmem:[#allocation2 + $0x1b0] sm:$0xff] 0.0
      %2377 = vst [vmem:[#allocation2 + $0x1b8] sm:$0xff] 0.0
      %2378 = vst [vmem:[#allocation2 + $0x1c0] sm:$0xff] 0.0
      %2379 = vst [vmem:[#allocation2 + $0x1c8] sm:$0xff] 0.0
      %2380 = vst [vmem:[#allocation2 + $0x1d0] sm:$0xff] 0.0
      %2381 = vst [vmem:[#allocation2 + $0x1d8] sm:$0xff] 0.0
      %2382 = vst [vmem:[#allocation2 + $0x1e0] sm:$0xff] 0.0
      %2383 = vst [vmem:[#allocation2 + $0x1e8] sm:$0xff] 0.0
      %2384 = vst [vmem:[#allocation2 + $0x1f0] sm:$0xff] 0.0
      %2385 = vst [vmem:[#allocation2 + $0x1f8] sm:$0xff] 0.0
      %2386 = vst [vmem:[#allocation2 + $0x200] sm:$0xff] 0.0
      %2387 = vst [vmem:[#allocation2 + $0x208] sm:$0xff] 0.0
      %2388 = vst [vmem:[#allocation2 + $0x210] sm:$0xff] 0.0
      %2389 = vst [vmem:[#allocation2 + $0x218] sm:$0xff] 0.0
      %2390 = vst [vmem:[#allocation2 + $0x220] sm:$0xff] 0.0
      %2391 = vst [vmem:[#allocation2 + $0x228] sm:$0xff] 0.0
      %2392 = vst [vmem:[#allocation2 + $0x230] sm:$0xff] 0.0
      %2393 = vst [vmem:[#allocation2 + $0x238] sm:$0xff] 0.0
      %2394 = vst [vmem:[#allocation2 + $0x240] sm:$0xff] 0.0
      %2395 = vst [vmem:[#allocation2 + $0x248] sm:$0xff] 0.0
      %2396 = vst [vmem:[#allocation2 + $0x250] sm:$0xff] 0.0
      %2397 = vst [vmem:[#allocation2 + $0x258] sm:$0xff] 0.0
      %2398 = vst [vmem:[#allocation2 + $0x260] sm:$0xff] 0.0
      %2399 = vst [vmem:[#allocation2 + $0x268] sm:$0xff] 0.0
      %2400 = vst [vmem:[#allocation2 + $0x270] sm:$0xff] 0.0
      %2401 = vst [vmem:[#allocation2 + $0x278] sm:$0xff] 0.0
      %2402 = vst [vmem:[#allocation2 + $0x280] sm:$0xff] 0.0
      %2403 = vst [vmem:[#allocation2 + $0x288] sm:$0xff] 0.0
      %2404 = vst [vmem:[#allocation2 + $0x290] sm:$0xff] 0.0
      %2405 = vst [vmem:[#allocation2 + $0x298] sm:$0xff] 0.0
      %2406 = vst [vmem:[#allocation2 + $0x2a0] sm:$0xff] 0.0
      %2407 = vst [vmem:[#allocation2 + $0x2a8] sm:$0xff] 0.0
      %2408 = vst [vmem:[#allocation2 + $0x2b0] sm:$0xff] 0.0
      %2409 = vst [vmem:[#allocation2 + $0x2b8] sm:$0xff] 0.0
      %2410 = vst [vmem:[#allocation2 + $0x2c0] sm:$0xff] 0.0
      %2411 = vst [vmem:[#allocation2 + $0x2c8] sm:$0xff] 0.0
      %2412 = vst [vmem:[#allocation2 + $0x2d0] sm:$0xff] 0.0
      %2413 = vst [vmem:[#allocation2 + $0x2d8] sm:$0xff] 0.0
      %2414 = vst [vmem:[#allocation2 + $0x2e0] sm:$0xff] 0.0
      %2415 = vst [vmem:[#allocation2 + $0x2e8] sm:$0xff] 0.0
      %2416 = vst [vmem:[#allocation2 + $0x2f0] sm:$0xff] 0.0
      %2417 = vst [vmem:[#allocation2 + $0x2f8] sm:$0xff] 0.0
      %2418 = vst [vmem:[#allocation2 + $0x300] sm:$0xff] 0.0
      %2419 = vst [vmem:[#allocation2 + $0x308] sm:$0xff] 0.0
      %2420 = vst [vmem:[#allocation2 + $0x310] sm:$0xff] 0.0
      %2421 = vst [vmem:[#allocation2 + $0x318] sm:$0xff] 0.0
      %2422 = vst [vmem:[#allocation2 + $0x320] sm:$0xff] 0.0
      %2423 = vst [vmem:[#allocation2 + $0x328] sm:$0xff] 0.0
      %2424 = vst [vmem:[#allocation2 + $0x330] sm:$0xff] 0.0
      %2425 = vst [vmem:[#allocation2 + $0x338] sm:$0xff] 0.0
      %2426 = vst [vmem:[#allocation2 + $0x340] sm:$0xff] 0.0
      %2427 = vst [vmem:[#allocation2 + $0x348] sm:$0xff] 0.0
      %2428 = vst [vmem:[#allocation2 + $0x350] sm:$0xff] 0.0
      %2429 = vst [vmem:[#allocation2 + $0x358] sm:$0xff] 0.0
      %2430 = vst [vmem:[#allocation2 + $0x360] sm:$0xff] 0.0
      %2431 = vst [vmem:[#allocation2 + $0x368] sm:$0xff] 0.0
      %2432 = vst [vmem:[#allocation2 + $0x370] sm:$0xff] 0.0
      %2433 = vst [vmem:[#allocation2 + $0x378] sm:$0xff] 0.0
      %2434 = vst [vmem:[#allocation2 + $0x380] sm:$0xff] 0.0
      %2435 = vst [vmem:[#allocation2 + $0x388] sm:$0xff] 0.0
      %2436 = vst [vmem:[#allocation2 + $0x390] sm:$0xff] 0.0
      %2437 = vst [vmem:[#allocation2 + $0x398] sm:$0xff] 0.0
      %2438 = vst [vmem:[#allocation2 + $0x3a0] sm:$0xff] 0.0
      %2439 = vst [vmem:[#allocation2 + $0x3a8] sm:$0xff] 0.0
      %2440 = vst [vmem:[#allocation2 + $0x3b0] sm:$0xff] 0.0
      %2441 = vst [vmem:[#allocation2 + $0x3b8] sm:$0xff] 0.0
      %2442 = vst [vmem:[#allocation2 + $0x3c0] sm:$0xff] 0.0
      %2443 = vst [vmem:[#allocation2 + $0x3c8] sm:$0xff] 0.0
      %2444 = vst [vmem:[#allocation2 + $0x3d0] sm:$0xff] 0.0
      %2445 = vst [vmem:[#allocation2 + $0x3d8] sm:$0xff] 0.0
      %2446 = vst [vmem:[#allocation2 + $0x3e0] sm:$0xff] 0.0
      %2447 = vst [vmem:[#allocation2 + $0x3e8] sm:$0xff] 0.0
      %2448 = vst [vmem:[#allocation2 + $0x3f0] sm:$0xff] 0.0
      %2449 = vst [vmem:[#allocation2 + $0x3f8] sm:$0xff] 0.0
      %2450 = vst [vmem:[#allocation3] sm:$0xff] 0.0
      %2451 = vst [vmem:[#allocation3 + $0x8] sm:$0xff] 0.0
      %2452 = vst [vmem:[#allocation3 + $0x10] sm:$0xff] 0.0
      %2453 = vst [vmem:[#allocation3 + $0x18] sm:$0xff] 0.0
      %2454 = vst [vmem:[#allocation3 + $0x20] sm:$0xff] 0.0
      %2455 = vst [vmem:[#allocation3 + $0x28] sm:$0xff] 0.0
      %2456 = vst [vmem:[#allocation3 + $0x30] sm:$0xff] 0.0
      %2457 = vst [vmem:[#allocation3 + $0x38] sm:$0xff] 0.0
      %2458 = vst [vmem:[#allocation3 + $0x40] sm:$0xff] 0.0
      %2459 = vst [vmem:[#allocation3 + $0x48] sm:$0xff] 0.0
      %2460 = vst [vmem:[#allocation3 + $0x50] sm:$0xff] 0.0
      %2461 = vst [vmem:[#allocation3 + $0x58] sm:$0xff] 0.0
      %2462 = vst [vmem:[#allocation3 + $0x60] sm:$0xff] 0.0
      %2463 = vst [vmem:[#allocation3 + $0x68] sm:$0xff] 0.0
      %2464 = vst [vmem:[#allocation3 + $0x70] sm:$0xff] 0.0
      %2465 = vst [vmem:[#allocation3 + $0x78] sm:$0xff] 0.0
      %2466 = vst [vmem:[#allocation3 + $0x80] sm:$0xff] 0.0
      %2467 = vst [vmem:[#allocation3 + $0x88] sm:$0xff] 0.0
      %2468 = vst [vmem:[#allocation3 + $0x90] sm:$0xff] 0.0
      %2469 = vst [vmem:[#allocation3 + $0x98] sm:$0xff] 0.0
      %2470 = vst [vmem:[#allocation3 + $0xa0] sm:$0xff] 0.0
      %2471 = vst [vmem:[#allocation3 + $0xa8] sm:$0xff] 0.0
      %2472 = vst [vmem:[#allocation3 + $0xb0] sm:$0xff] 0.0
      %2473 = vst [vmem:[#allocation3 + $0xb8] sm:$0xff] 0.0
      %2474 = vst [vmem:[#allocation3 + $0xc0] sm:$0xff] 0.0
      %2475 = vst [vmem:[#allocation3 + $0xc8] sm:$0xff] 0.0
      %2476 = vst [vmem:[#allocation3 + $0xd0] sm:$0xff] 0.0
      %2477 = vst [vmem:[#allocation3 + $0xd8] sm:$0xff] 0.0
      %2478 = vst [vmem:[#allocation3 + $0xe0] sm:$0xff] 0.0
      %2479 = vst [vmem:[#allocation3 + $0xe8] sm:$0xff] 0.0
      %2480 = vst [vmem:[#allocation3 + $0xf0] sm:$0xff] 0.0
      %2481 = vst [vmem:[#allocation3 + $0xf8] sm:$0xff] 0.0
      %2482 = vst [vmem:[#allocation3 + $0x100] sm:$0xff] 0.0
      %2483 = vst [vmem:[#allocation3 + $0x108] sm:$0xff] 0.0
      %2484 = vst [vmem:[#allocation3 + $0x110] sm:$0xff] 0.0
      %2485 = vst [vmem:[#allocation3 + $0x118] sm:$0xff] 0.0
      %2486 = vst [vmem:[#allocation3 + $0x120] sm:$0xff] 0.0
      %2487 = vst [vmem:[#allocation3 + $0x128] sm:$0xff] 0.0
      %2488 = vst [vmem:[#allocation3 + $0x130] sm:$0xff] 0.0
      %2489 = vst [vmem:[#allocation3 + $0x138] sm:$0xff] 0.0
      %2490 = vst [vmem:[#allocation3 + $0x140] sm:$0xff] 0.0
      %2491 = vst [vmem:[#allocation3 + $0x148] sm:$0xff] 0.0
      %2492 = vst [vmem:[#allocation3 + $0x150] sm:$0xff] 0.0
      %2493 = vst [vmem:[#allocation3 + $0x158] sm:$0xff] 0.0
      %2494 = vst [vmem:[#allocation3 + $0x160] sm:$0xff] 0.0
      %2495 = vst [vmem:[#allocation3 + $0x168] sm:$0xff] 0.0
      %2496 = vst [vmem:[#allocation3 + $0x170] sm:$0xff] 0.0
      %2497 = vst [vmem:[#allocation3 + $0x178] sm:$0xff] 0.0
      %2498 = vst [vmem:[#allocation3 + $0x180] sm:$0xff] 0.0
      %2499 = vst [vmem:[#allocation3 + $0x188] sm:$0xff] 0.0
      %2500 = vst [vmem:[#allocation3 + $0x190] sm:$0xff] 0.0
      %2501 = vst [vmem:[#allocation3 + $0x198] sm:$0xff] 0.0
      %2502 = vst [vmem:[#allocation3 + $0x1a0] sm:$0xff] 0.0
      %2503 = vst [vmem:[#allocation3 + $0x1a8] sm:$0xff] 0.0
      %2504 = vst [vmem:[#allocation3 + $0x1b0] sm:$0xff] 0.0
      %2505 = vst [vmem:[#allocation3 + $0x1b8] sm:$0xff] 0.0
      %2506 = vst [vmem:[#allocation3 + $0x1c0] sm:$0xff] 0.0
      %2507 = vst [vmem:[#allocation3 + $0x1c8] sm:$0xff] 0.0
      %2508 = vst [vmem:[#allocation3 + $0x1d0] sm:$0xff] 0.0
      %2509 = vst [vmem:[#allocation3 + $0x1d8] sm:$0xff] 0.0
      %2510 = vst [vmem:[#allocation3 + $0x1e0] sm:$0xff] 0.0
      %2511 = vst [vmem:[#allocation3 + $0x1e8] sm:$0xff] 0.0
      %2512 = vst [vmem:[#allocation3 + $0x1f0] sm:$0xff] 0.0
      %2513 = vst [vmem:[#allocation3 + $0x1f8] sm:$0xff] 0.0
      %2514 = vst [vmem:[#allocation3 + $0x200] sm:$0xff] 0.0
      %2515 = vst [vmem:[#allocation3 + $0x208] sm:$0xff] 0.0
      %2516 = vst [vmem:[#allocation3 + $0x210] sm:$0xff] 0.0
      %2517 = vst [vmem:[#allocation3 + $0x218] sm:$0xff] 0.0
      %2518 = vst [vmem:[#allocation3 + $0x220] sm:$0xff] 0.0
      %2519 = vst [vmem:[#allocation3 + $0x228] sm:$0xff] 0.0
      %2520 = vst [vmem:[#allocation3 + $0x230] sm:$0xff] 0.0
      %2521 = vst [vmem:[#allocation3 + $0x238] sm:$0xff] 0.0
      %2522 = vst [vmem:[#allocation3 + $0x240] sm:$0xff] 0.0
      %2523 = vst [vmem:[#allocation3 + $0x248] sm:$0xff] 0.0
      %2524 = vst [vmem:[#allocation3 + $0x250] sm:$0xff] 0.0
      %2525 = vst [vmem:[#allocation3 + $0x258] sm:$0xff] 0.0
      %2526 = vst [vmem:[#allocation3 + $0x260] sm:$0xff] 0.0
      %2527 = vst [vmem:[#allocation3 + $0x268] sm:$0xff] 0.0
      %2528 = vst [vmem:[#allocation3 + $0x270] sm:$0xff] 0.0
      %2529 = vst [vmem:[#allocation3 + $0x278] sm:$0xff] 0.0
      %2530 = vst [vmem:[#allocation3 + $0x280] sm:$0xff] 0.0
      %2531 = vst [vmem:[#allocation3 + $0x288] sm:$0xff] 0.0
      %2532 = vst [vmem:[#allocation3 + $0x290] sm:$0xff] 0.0
      %2533 = vst [vmem:[#allocation3 + $0x298] sm:$0xff] 0.0
      %2534 = vst [vmem:[#allocation3 + $0x2a0] sm:$0xff] 0.0
      %2535 = vst [vmem:[#allocation3 + $0x2a8] sm:$0xff] 0.0
      %2536 = vst [vmem:[#allocation3 + $0x2b0] sm:$0xff] 0.0
      %2537 = vst [vmem:[#allocation3 + $0x2b8] sm:$0xff] 0.0
      %2538 = vst [vmem:[#allocation3 + $0x2c0] sm:$0xff] 0.0
      %2539 = vst [vmem:[#allocation3 + $0x2c8] sm:$0xff] 0.0
      %2540 = vst [vmem:[#allocation3 + $0x2d0] sm:$0xff] 0.0
      %2541 = vst [vmem:[#allocation3 + $0x2d8] sm:$0xff] 0.0
      %2542 = vst [vmem:[#allocation3 + $0x2e0] sm:$0xff] 0.0
      %2543 = vst [vmem:[#allocation3 + $0x2e8] sm:$0xff] 0.0
      %2544 = vst [vmem:[#allocation3 + $0x2f0] sm:$0xff] 0.0
      %2545 = vst [vmem:[#allocation3 + $0x2f8] sm:$0xff] 0.0
      %2546 = vst [vmem:[#allocation3 + $0x300] sm:$0xff] 0.0
      %2547 = vst [vmem:[#allocation3 + $0x308] sm:$0xff] 0.0
      %2548 = vst [vmem:[#allocation3 + $0x310] sm:$0xff] 0.0
      %2549 = vst [vmem:[#allocation3 + $0x318] sm:$0xff] 0.0
      %2550 = vst [vmem:[#allocation3 + $0x320] sm:$0xff] 0.0
      %2551 = vst [vmem:[#allocation3 + $0x328] sm:$0xff] 0.0
      %2552 = vst [vmem:[#allocation3 + $0x330] sm:$0xff] 0.0
      %2553 = vst [vmem:[#allocation3 + $0x338] sm:$0xff] 0.0
      %2554 = vst [vmem:[#allocation3 + $0x340] sm:$0xff] 0.0
      %2555 = vst [vmem:[#allocation3 + $0x348] sm:$0xff] 0.0
      %2556 = vst [vmem:[#allocation3 + $0x350] sm:$0xff] 0.0
      %2557 = vst [vmem:[#allocation3 + $0x358] sm:$0xff] 0.0
      %2558 = vst [vmem:[#allocation3 + $0x360] sm:$0xff] 0.0
      %2559 = vst [vmem:[#allocation3 + $0x368] sm:$0xff] 0.0
      %2560 = vst [vmem:[#allocation3 + $0x370] sm:$0xff] 0.0
      %2561 = vst [vmem:[#allocation3 + $0x378] sm:$0xff] 0.0
      %2562 = vst [vmem:[#allocation3 + $0x380] sm:$0xff] 0.0
      %2563 = vst [vmem:[#allocation3 + $0x388] sm:$0xff] 0.0
      %2564 = vst [vmem:[#allocation3 + $0x390] sm:$0xff] 0.0
      %2565 = vst [vmem:[#allocation3 + $0x398] sm:$0xff] 0.0
      %2566 = vst [vmem:[#allocation3 + $0x3a0] sm:$0xff] 0.0
      %2567 = vst [vmem:[#allocation3 + $0x3a8] sm:$0xff] 0.0
      %2568 = vst [vmem:[#allocation3 + $0x3b0] sm:$0xff] 0.0
      %2569 = vst [vmem:[#allocation3 + $0x3b8] sm:$0xff] 0.0
      %2570 = vst [vmem:[#allocation3 + $0x3c0] sm:$0xff] 0.0
      %2571 = vst [vmem:[#allocation3 + $0x3c8] sm:$0xff] 0.0
      %2572 = vst [vmem:[#allocation3 + $0x3d0] sm:$0xff] 0.0
      %2573 = vst [vmem:[#allocation3 + $0x3d8] sm:$0xff] 0.0
      %2574 = vst [vmem:[#allocation3 + $0x3e0] sm:$0xff] 0.0
      %2575 = vst [vmem:[#allocation3 + $0x3e8] sm:$0xff] 0.0
      %2576 = vst [vmem:[#allocation3 + $0x3f0] sm:$0xff] 0.0
      %2577 = vst [vmem:[#allocation3 + $0x3f8] sm:$0xff] 0.0
    $region45: #{tpu_custom_call.1} parent=1 // pred_fallthru
      _
    %v2578 = vld [vmem:[#allocation2] sm:$0xff]
    %v2579 = vld [vmem:[#allocation2 + $0x8] sm:$0xff]
    %v2580 = vld [vmem:[#allocation2 + $0x10] sm:$0xff]
    %v2581 = vld [vmem:[#allocation2 + $0x18] sm:$0xff]
    %v2582 = vld [vmem:[#allocation2 + $0x20] sm:$0xff]
    %v2583 = vld [vmem:[#allocation2 + $0x28] sm:$0xff]
    %v2584 = vld [vmem:[#allocation2 + $0x30] sm:$0xff]
    %v2585 = vld [vmem:[#allocation2 + $0x38] sm:$0xff]
    %v2586 = vld [vmem:[#allocation2 + $0x40] sm:$0xff]
    %v2587 = vld [vmem:[#allocation2 + $0x48] sm:$0xff]
    %v2588 = vld [vmem:[#allocation2 + $0x50] sm:$0xff]
    %v2589 = vld [vmem:[#allocation2 + $0x58] sm:$0xff]
    %v2590 = vld [vmem:[#allocation2 + $0x60] sm:$0xff]
    %v2591 = vld [vmem:[#allocation2 + $0x68] sm:$0xff]
    %v2592 = vld [vmem:[#allocation2 + $0x70] sm:$0xff]
    %v2593 = vld [vmem:[#allocation2 + $0x78] sm:$0xff]
    %v2594 = vld [vmem:[#allocation2 + $0x80] sm:$0xff]
    %v2595 = vld [vmem:[#allocation2 + $0x88] sm:$0xff]
    %v2596 = vld [vmem:[#allocation2 + $0x90] sm:$0xff]
    %v2597 = vld [vmem:[#allocation2 + $0x98] sm:$0xff]
    %v2598 = vld [vmem:[#allocation2 + $0xa0] sm:$0xff]
    %v2599 = vld [vmem:[#allocation2 + $0xa8] sm:$0xff]
    %v2600 = vld [vmem:[#allocation2 + $0xb0] sm:$0xff]
    %v2601 = vld [vmem:[#allocation2 + $0xb8] sm:$0xff]
    %v2602 = vld [vmem:[#allocation2 + $0xc0] sm:$0xff]
    %v2603 = vld [vmem:[#allocation2 + $0xc8] sm:$0xff]
    %v2604 = vld [vmem:[#allocation2 + $0xd0] sm:$0xff]
    %v2605 = vld [vmem:[#allocation2 + $0xd8] sm:$0xff]
    %v2606 = vld [vmem:[#allocation2 + $0xe0] sm:$0xff]
    %v2607 = vld [vmem:[#allocation2 + $0xe8] sm:$0xff]
    %v2608 = vld [vmem:[#allocation2 + $0xf0] sm:$0xff]
    %v2609 = vld [vmem:[#allocation2 + $0xf8] sm:$0xff]
    %v2610 = vld [vmem:[#allocation2 + $0x100] sm:$0xff]
    %v2611 = vld [vmem:[#allocation2 + $0x108] sm:$0xff]
    %v2612 = vld [vmem:[#allocation2 + $0x110] sm:$0xff]
    %v2613 = vld [vmem:[#allocation2 + $0x118] sm:$0xff]
    %v2614 = vld [vmem:[#allocation2 + $0x120] sm:$0xff]
    %v2615 = vld [vmem:[#allocation2 + $0x128] sm:$0xff]
    %v2616 = vld [vmem:[#allocation2 + $0x130] sm:$0xff]
    %v2617 = vld [vmem:[#allocation2 + $0x138] sm:$0xff]
    %v2618 = vld [vmem:[#allocation2 + $0x140] sm:$0xff]
    %v2619 = vld [vmem:[#allocation2 + $0x148] sm:$0xff]
    %v2620 = vld [vmem:[#allocation2 + $0x150] sm:$0xff]
    %v2621 = vld [vmem:[#allocation2 + $0x158] sm:$0xff]
    %v2622 = vld [vmem:[#allocation2 + $0x160] sm:$0xff]
    %v2623 = vld [vmem:[#allocation2 + $0x168] sm:$0xff]
    %v2624 = vld [vmem:[#allocation2 + $0x170] sm:$0xff]
    %v2625 = vld [vmem:[#allocation2 + $0x178] sm:$0xff]
    %v2626 = vld [vmem:[#allocation2 + $0x180] sm:$0xff]
    %v2627 = vld [vmem:[#allocation2 + $0x188] sm:$0xff]
    %v2628 = vld [vmem:[#allocation2 + $0x190] sm:$0xff]
    %v2629 = vld [vmem:[#allocation2 + $0x198] sm:$0xff]
    %v2630 = vld [vmem:[#allocation2 + $0x1a0] sm:$0xff]
    %v2631 = vld [vmem:[#allocation2 + $0x1a8] sm:$0xff]
    %v2632 = vld [vmem:[#allocation2 + $0x1b0] sm:$0xff]
    %v2633 = vld [vmem:[#allocation2 + $0x1b8] sm:$0xff]
    %v2634 = vld [vmem:[#allocation2 + $0x1c0] sm:$0xff]
    %v2635 = vld [vmem:[#allocation2 + $0x1c8] sm:$0xff]
    %v2636 = vld [vmem:[#allocation2 + $0x1d0] sm:$0xff]
    %v2637 = vld [vmem:[#allocation2 + $0x1d8] sm:$0xff]
    %v2638 = vld [vmem:[#allocation2 + $0x1e0] sm:$0xff]
    %v2639 = vld [vmem:[#allocation2 + $0x1e8] sm:$0xff]
    %v2640 = vld [vmem:[#allocation2 + $0x1f0] sm:$0xff]
    %v2641 = vld [vmem:[#allocation2 + $0x1f8] sm:$0xff]
    %v2642 = vld [vmem:[#allocation2 + $0x200] sm:$0xff]
    %v2643 = vld [vmem:[#allocation2 + $0x208] sm:$0xff]
    %v2644 = vld [vmem:[#allocation2 + $0x210] sm:$0xff]
    %v2645 = vld [vmem:[#allocation2 + $0x218] sm:$0xff]
    %v2646 = vld [vmem:[#allocation2 + $0x220] sm:$0xff]
    %v2647 = vld [vmem:[#allocation2 + $0x228] sm:$0xff]
    %v2648 = vld [vmem:[#allocation2 + $0x230] sm:$0xff]
    %v2649 = vld [vmem:[#allocation2 + $0x238] sm:$0xff]
    %v2650 = vld [vmem:[#allocation2 + $0x240] sm:$0xff]
    %v2651 = vld [vmem:[#allocation2 + $0x248] sm:$0xff]
    %v2652 = vld [vmem:[#allocation2 + $0x250] sm:$0xff]
    %v2653 = vld [vmem:[#allocation2 + $0x258] sm:$0xff]
    %v2654 = vld [vmem:[#allocation2 + $0x260] sm:$0xff]
    %v2655 = vld [vmem:[#allocation2 + $0x268] sm:$0xff]
    %v2656 = vld [vmem:[#allocation2 + $0x270] sm:$0xff]
    %v2657 = vld [vmem:[#allocation2 + $0x278] sm:$0xff]
    %v2658 = vld [vmem:[#allocation2 + $0x280] sm:$0xff]
    %v2659 = vld [vmem:[#allocation2 + $0x288] sm:$0xff]
    %v2660 = vld [vmem:[#allocation2 + $0x290] sm:$0xff]
    %v2661 = vld [vmem:[#allocation2 + $0x298] sm:$0xff]
    %v2662 = vld [vmem:[#allocation2 + $0x2a0] sm:$0xff]
    %v2663 = vld [vmem:[#allocation2 + $0x2a8] sm:$0xff]
    %v2664 = vld [vmem:[#allocation2 + $0x2b0] sm:$0xff]
    %v2665 = vld [vmem:[#allocation2 + $0x2b8] sm:$0xff]
    %v2666 = vld [vmem:[#allocation2 + $0x2c0] sm:$0xff]
    %v2667 = vld [vmem:[#allocation2 + $0x2c8] sm:$0xff]
    %v2668 = vld [vmem:[#allocation2 + $0x2d0] sm:$0xff]
    %v2669 = vld [vmem:[#allocation2 + $0x2d8] sm:$0xff]
    %v2670 = vld [vmem:[#allocation2 + $0x2e0] sm:$0xff]
    %v2671 = vld [vmem:[#allocation2 + $0x2e8] sm:$0xff]
    %v2672 = vld [vmem:[#allocation2 + $0x2f0] sm:$0xff]
    %v2673 = vld [vmem:[#allocation2 + $0x2f8] sm:$0xff]
    %v2674 = vld [vmem:[#allocation2 + $0x300] sm:$0xff]
    %v2675 = vld [vmem:[#allocation2 + $0x308] sm:$0xff]
    %v2676 = vld [vmem:[#allocation2 + $0x310] sm:$0xff]
    %v2677 = vld [vmem:[#allocation2 + $0x318] sm:$0xff]
    %v2678 = vld [vmem:[#allocation2 + $0x320] sm:$0xff]
    %v2679 = vld [vmem:[#allocation2 + $0x328] sm:$0xff]
    %v2680 = vld [vmem:[#allocation2 + $0x330] sm:$0xff]
    %v2681 = vld [vmem:[#allocation2 + $0x338] sm:$0xff]
    %v2682 = vld [vmem:[#allocation2 + $0x340] sm:$0xff]
    %v2683 = vld [vmem:[#allocation2 + $0x348] sm:$0xff]
    %v2684 = vld [vmem:[#allocation2 + $0x350] sm:$0xff]
    %v2685 = vld [vmem:[#allocation2 + $0x358] sm:$0xff]
    %v2686 = vld [vmem:[#allocation2 + $0x360] sm:$0xff]
    %v2687 = vld [vmem:[#allocation2 + $0x368] sm:$0xff]
    %v2688 = vld [vmem:[#allocation2 + $0x370] sm:$0xff]
    %v2689 = vld [vmem:[#allocation2 + $0x378] sm:$0xff]
    %v2690 = vld [vmem:[#allocation2 + $0x380] sm:$0xff]
    %v2691 = vld [vmem:[#allocation2 + $0x388] sm:$0xff]
    %v2692 = vld [vmem:[#allocation2 + $0x390] sm:$0xff]
    %v2693 = vld [vmem:[#allocation2 + $0x398] sm:$0xff]
    %v2694 = vld [vmem:[#allocation2 + $0x3a0] sm:$0xff]
    %v2695 = vld [vmem:[#allocation2 + $0x3a8] sm:$0xff]
    %v2696 = vld [vmem:[#allocation2 + $0x3b0] sm:$0xff]
    %v2697 = vld [vmem:[#allocation2 + $0x3b8] sm:$0xff]
    %v2698 = vld [vmem:[#allocation2 + $0x3c0] sm:$0xff]
    %v2699 = vld [vmem:[#allocation2 + $0x3c8] sm:$0xff]
    %v2700 = vld [vmem:[#allocation2 + $0x3d0] sm:$0xff]
    %v2701 = vld [vmem:[#allocation2 + $0x3d8] sm:$0xff]
    %v2702 = vld [vmem:[#allocation2 + $0x3e0] sm:$0xff]
    %v2703 = vld [vmem:[#allocation2 + $0x3e8] sm:$0xff]
    %v2704 = vld [vmem:[#allocation2 + $0x3f0] sm:$0xff]
    %v2705 = vld [vmem:[#allocation2 + $0x3f8] sm:$0xff]
    %v2706 = vadd.f32 %v2578, %v1038
    %v2707 = vadd.f32 %v2579, %v1039
    %v2708 = vadd.f32 %v2580, %v1040
    %v2709 = vadd.f32 %v2581, %v1041
    %v2710 = vadd.f32 %v2582, %v1042
    %v2711 = vadd.f32 %v2583, %v1043
    %v2712 = vadd.f32 %v2584, %v1044
    %v2713 = vadd.f32 %v2585, %v1045
    %v2714 = vadd.f32 %v2586, %v1046
    %v2715 = vadd.f32 %v2587, %v1047
    %v2716 = vadd.f32 %v2588, %v1048
    %v2717 = vadd.f32 %v2589, %v1049
    %v2718 = vadd.f32 %v2590, %v1050
    %v2719 = vadd.f32 %v2591, %v1051
    %v2720 = vadd.f32 %v2592, %v1052
    %v2721 = vadd.f32 %v2593, %v1053
    %v2722 = vadd.f32 %v2594, %v1054
    %v2723 = vadd.f32 %v2595, %v1055
    %v2724 = vadd.f32 %v2596, %v1056
    %v2725 = vadd.f32 %v2597, %v1057
    %v2726 = vadd.f32 %v2598, %v1058
    %v2727 = vadd.f32 %v2599, %v1059
    %v2728 = vadd.f32 %v2600, %v1060
    %v2729 = vadd.f32 %v2601, %v1061
    %v2730 = vadd.f32 %v2602, %v1062
    %v2731 = vadd.f32 %v2603, %v1063
    %v2732 = vadd.f32 %v2604, %v1064
    %v2733 = vadd.f32 %v2605, %v1065
    %v2734 = vadd.f32 %v2606, %v1066
    %v2735 = vadd.f32 %v2607, %v1067
    %v2736 = vadd.f32 %v2608, %v1068
    %v2737 = vadd.f32 %v2609, %v1069
    %v2738 = vadd.f32 %v2610, %v1070
    %v2739 = vadd.f32 %v2611, %v1071
    %v2740 = vadd.f32 %v2612, %v1072
    %v2741 = vadd.f32 %v2613, %v1073
    %v2742 = vadd.f32 %v2614, %v1074
    %v2743 = vadd.f32 %v2615, %v1075
    %v2744 = vadd.f32 %v2616, %v1076
    %v2745 = vadd.f32 %v2617, %v1077
    %v2746 = vadd.f32 %v2618, %v1078
    %v2747 = vadd.f32 %v2619, %v1079
    %v2748 = vadd.f32 %v2620, %v1080
    %v2749 = vadd.f32 %v2621, %v1081
    %v2750 = vadd.f32 %v2622, %v1082
    %v2751 = vadd.f32 %v2623, %v1083
    %v2752 = vadd.f32 %v2624, %v1084
    %v2753 = vadd.f32 %v2625, %v1085
    %v2754 = vadd.f32 %v2626, %v1086
    %v2755 = vadd.f32 %v2627, %v1087
    %v2756 = vadd.f32 %v2628, %v1088
    %v2757 = vadd.f32 %v2629, %v1089
    %v2758 = vadd.f32 %v2630, %v1090
    %v2759 = vadd.f32 %v2631, %v1091
    %v2760 = vadd.f32 %v2632, %v1092
    %v2761 = vadd.f32 %v2633, %v1093
    %v2762 = vadd.f32 %v2634, %v1094
    %v2763 = vadd.f32 %v2635, %v1095
    %v2764 = vadd.f32 %v2636, %v1096
    %v2765 = vadd.f32 %v2637, %v1097
    %v2766 = vadd.f32 %v2638, %v1098
    %v2767 = vadd.f32 %v2639, %v1099
    %v2768 = vadd.f32 %v2640, %v1100
    %v2769 = vadd.f32 %v2641, %v1101
    %v2770 = vadd.f32 %v2642, %v1102
    %v2771 = vadd.f32 %v2643, %v1103
    %v2772 = vadd.f32 %v2644, %v1104
    %v2773 = vadd.f32 %v2645, %v1105
    %v2774 = vadd.f32 %v2646, %v1106
    %v2775 = vadd.f32 %v2647, %v1107
    %v2776 = vadd.f32 %v2648, %v1108
    %v2777 = vadd.f32 %v2649, %v1109
    %v2778 = vadd.f32 %v2650, %v1110
    %v2779 = vadd.f32 %v2651, %v1111
    %v2780 = vadd.f32 %v2652, %v1112
    %v2781 = vadd.f32 %v2653, %v1113
    %v2782 = vadd.f32 %v2654, %v1114
    %v2783 = vadd.f32 %v2655, %v1115
    %v2784 = vadd.f32 %v2656, %v1116
    %v2785 = vadd.f32 %v2657, %v1117
    %v2786 = vadd.f32 %v2658, %v1118
    %v2787 = vadd.f32 %v2659, %v1119
    %v2788 = vadd.f32 %v2660, %v1120
    %v2789 = vadd.f32 %v2661, %v1121
    %v2790 = vadd.f32 %v2662, %v1122
    %v2791 = vadd.f32 %v2663, %v1123
    %v2792 = vadd.f32 %v2664, %v1124
    %v2793 = vadd.f32 %v2665, %v1125
    %v2794 = vadd.f32 %v2666, %v1126
    %v2795 = vadd.f32 %v2667, %v1127
    %v2796 = vadd.f32 %v2668, %v1128
    %v2797 = vadd.f32 %v2669, %v1129
    %v2798 = vadd.f32 %v2670, %v1130
    %v2799 = vadd.f32 %v2671, %v1131
    %v2800 = vadd.f32 %v2672, %v1132
    %v2801 = vadd.f32 %v2673, %v1133
    %v2802 = vadd.f32 %v2674, %v1134
    %v2803 = vadd.f32 %v2675, %v1135
    %v2804 = vadd.f32 %v2676, %v1136
    %v2805 = vadd.f32 %v2677, %v1137
    %v2806 = vadd.f32 %v2678, %v1138
    %v2807 = vadd.f32 %v2679, %v1139
    %v2808 = vadd.f32 %v2680, %v1140
    %v2809 = vadd.f32 %v2681, %v1141
    %v2810 = vadd.f32 %v2682, %v1142
    %v2811 = vadd.f32 %v2683, %v1143
    %v2812 = vadd.f32 %v2684, %v1144
    %v2813 = vadd.f32 %v2685, %v1145
    %v2814 = vadd.f32 %v2686, %v1146
    %v2815 = vadd.f32 %v2687, %v1147
    %v2816 = vadd.f32 %v2688, %v1148
    %v2817 = vadd.f32 %v2689, %v1149
    %v2818 = vadd.f32 %v2690, %v1150
    %v2819 = vadd.f32 %v2691, %v1151
    %v2820 = vadd.f32 %v2692, %v1152
    %v2821 = vadd.f32 %v2693, %v1153
    %v2822 = vadd.f32 %v2694, %v1154
    %v2823 = vadd.f32 %v2695, %v1155
    %v2824 = vadd.f32 %v2696, %v1156
    %v2825 = vadd.f32 %v2697, %v1157
    %v2826 = vadd.f32 %v2698, %v1158
    %v2827 = vadd.f32 %v2699, %v1159
    %v2828 = vadd.f32 %v2700, %v1160
    %v2829 = vadd.f32 %v2701, %v1161
    %v2830 = vadd.f32 %v2702, %v1162
    %v2831 = vadd.f32 %v2703, %v1163
    %v2832 = vadd.f32 %v2704, %v1164
    %v2833 = vadd.f32 %v2705, %v1165
    %2834 = vst [vmem:[#allocation2] sm:$0xff] %v2706
    %2835 = vst [vmem:[#allocation2 + $0x8] sm:$0xff] %v2707
    %2836 = vst [vmem:[#allocation2 + $0x10] sm:$0xff] %v2708
    %2837 = vst [vmem:[#allocation2 + $0x18] sm:$0xff] %v2709
    %2838 = vst [vmem:[#allocation2 + $0x20] sm:$0xff] %v2710
    %2839 = vst [vmem:[#allocation2 + $0x28] sm:$0xff] %v2711
    %2840 = vst [vmem:[#allocation2 + $0x30] sm:$0xff] %v2712
    %2841 = vst [vmem:[#allocation2 + $0x38] sm:$0xff] %v2713
    %2842 = vst [vmem:[#allocation2 + $0x40] sm:$0xff] %v2714
    %2843 = vst [vmem:[#allocation2 + $0x48] sm:$0xff] %v2715
    %2844 = vst [vmem:[#allocation2 + $0x50] sm:$0xff] %v2716
    %2845 = vst [vmem:[#allocation2 + $0x58] sm:$0xff] %v2717
    %2846 = vst [vmem:[#allocation2 + $0x60] sm:$0xff] %v2718
    %2847 = vst [vmem:[#allocation2 + $0x68] sm:$0xff] %v2719
    %2848 = vst [vmem:[#allocation2 + $0x70] sm:$0xff] %v2720
    %2849 = vst [vmem:[#allocation2 + $0x78] sm:$0xff] %v2721
    %2850 = vst [vmem:[#allocation2 + $0x80] sm:$0xff] %v2722
    %2851 = vst [vmem:[#allocation2 + $0x88] sm:$0xff] %v2723
    %2852 = vst [vmem:[#allocation2 + $0x90] sm:$0xff] %v2724
    %2853 = vst [vmem:[#allocation2 + $0x98] sm:$0xff] %v2725
    %2854 = vst [vmem:[#allocation2 + $0xa0] sm:$0xff] %v2726
    %2855 = vst [vmem:[#allocation2 + $0xa8] sm:$0xff] %v2727
    %2856 = vst [vmem:[#allocation2 + $0xb0] sm:$0xff] %v2728
    %2857 = vst [vmem:[#allocation2 + $0xb8] sm:$0xff] %v2729
    %2858 = vst [vmem:[#allocation2 + $0xc0] sm:$0xff] %v2730
    %2859 = vst [vmem:[#allocation2 + $0xc8] sm:$0xff] %v2731
    %2860 = vst [vmem:[#allocation2 + $0xd0] sm:$0xff] %v2732
    %2861 = vst [vmem:[#allocation2 + $0xd8] sm:$0xff] %v2733
    %2862 = vst [vmem:[#allocation2 + $0xe0] sm:$0xff] %v2734
    %2863 = vst [vmem:[#allocation2 + $0xe8] sm:$0xff] %v2735
    %2864 = vst [vmem:[#allocation2 + $0xf0] sm:$0xff] %v2736
    %2865 = vst [vmem:[#allocation2 + $0xf8] sm:$0xff] %v2737
    %2866 = vst [vmem:[#allocation2 + $0x100] sm:$0xff] %v2738
    %2867 = vst [vmem:[#allocation2 + $0x108] sm:$0xff] %v2739
    %2868 = vst [vmem:[#allocation2 + $0x110] sm:$0xff] %v2740
    %2869 = vst [vmem:[#allocation2 + $0x118] sm:$0xff] %v2741
    %2870 = vst [vmem:[#allocation2 + $0x120] sm:$0xff] %v2742
    %2871 = vst [vmem:[#allocation2 + $0x128] sm:$0xff] %v2743
    %2872 = vst [vmem:[#allocation2 + $0x130] sm:$0xff] %v2744
    %2873 = vst [vmem:[#allocation2 + $0x138] sm:$0xff] %v2745
    %2874 = vst [vmem:[#allocation2 + $0x140] sm:$0xff] %v2746
    %2875 = vst [vmem:[#allocation2 + $0x148] sm:$0xff] %v2747
    %2876 = vst [vmem:[#allocation2 + $0x150] sm:$0xff] %v2748
    %2877 = vst [vmem:[#allocation2 + $0x158] sm:$0xff] %v2749
    %2878 = vst [vmem:[#allocation2 + $0x160] sm:$0xff] %v2750
    %2879 = vst [vmem:[#allocation2 + $0x168] sm:$0xff] %v2751
    %2880 = vst [vmem:[#allocation2 + $0x170] sm:$0xff] %v2752
    %2881 = vst [vmem:[#allocation2 + $0x178] sm:$0xff] %v2753
    %2882 = vst [vmem:[#allocation2 + $0x180] sm:$0xff] %v2754
    %2883 = vst [vmem:[#allocation2 + $0x188] sm:$0xff] %v2755
    %2884 = vst [vmem:[#allocation2 + $0x190] sm:$0xff] %v2756
    %2885 = vst [vmem:[#allocation2 + $0x198] sm:$0xff] %v2757
    %2886 = vst [vmem:[#allocation2 + $0x1a0] sm:$0xff] %v2758
    %2887 = vst [vmem:[#allocation2 + $0x1a8] sm:$0xff] %v2759
    %2888 = vst [vmem:[#allocation2 + $0x1b0] sm:$0xff] %v2760
    %2889 = vst [vmem:[#allocation2 + $0x1b8] sm:$0xff] %v2761
    %2890 = vst [vmem:[#allocation2 + $0x1c0] sm:$0xff] %v2762
    %2891 = vst [vmem:[#allocation2 + $0x1c8] sm:$0xff] %v2763
    %2892 = vst [vmem:[#allocation2 + $0x1d0] sm:$0xff] %v2764
    %2893 = vst [vmem:[#allocation2 + $0x1d8] sm:$0xff] %v2765
    %2894 = vst [vmem:[#allocation2 + $0x1e0] sm:$0xff] %v2766
    %2895 = vst [vmem:[#allocation2 + $0x1e8] sm:$0xff] %v2767
    %2896 = vst [vmem:[#allocation2 + $0x1f0] sm:$0xff] %v2768
    %2897 = vst [vmem:[#allocation2 + $0x1f8] sm:$0xff] %v2769
    %2898 = vst [vmem:[#allocation2 + $0x200] sm:$0xff] %v2770
    %2899 = vst [vmem:[#allocation2 + $0x208] sm:$0xff] %v2771
    %2900 = vst [vmem:[#allocation2 + $0x210] sm:$0xff] %v2772
    %2901 = vst [vmem:[#allocation2 + $0x218] sm:$0xff] %v2773
    %2902 = vst [vmem:[#allocation2 + $0x220] sm:$0xff] %v2774
    %2903 = vst [vmem:[#allocation2 + $0x228] sm:$0xff] %v2775
    %2904 = vst [vmem:[#allocation2 + $0x230] sm:$0xff] %v2776
    %2905 = vst [vmem:[#allocation2 + $0x238] sm:$0xff] %v2777
    %2906 = vst [vmem:[#allocation2 + $0x240] sm:$0xff] %v2778
    %2907 = vst [vmem:[#allocation2 + $0x248] sm:$0xff] %v2779
    %2908 = vst [vmem:[#allocation2 + $0x250] sm:$0xff] %v2780
    %2909 = vst [vmem:[#allocation2 + $0x258] sm:$0xff] %v2781
    %2910 = vst [vmem:[#allocation2 + $0x260] sm:$0xff] %v2782
    %2911 = vst [vmem:[#allocation2 + $0x268] sm:$0xff] %v2783
    %2912 = vst [vmem:[#allocation2 + $0x270] sm:$0xff] %v2784
    %2913 = vst [vmem:[#allocation2 + $0x278] sm:$0xff] %v2785
    %2914 = vst [vmem:[#allocation2 + $0x280] sm:$0xff] %v2786
    %2915 = vst [vmem:[#allocation2 + $0x288] sm:$0xff] %v2787
    %2916 = vst [vmem:[#allocation2 + $0x290] sm:$0xff] %v2788
    %2917 = vst [vmem:[#allocation2 + $0x298] sm:$0xff] %v2789
    %2918 = vst [vmem:[#allocation2 + $0x2a0] sm:$0xff] %v2790
    %2919 = vst [vmem:[#allocation2 + $0x2a8] sm:$0xff] %v2791
    %2920 = vst [vmem:[#allocation2 + $0x2b0] sm:$0xff] %v2792
    %2921 = vst [vmem:[#allocation2 + $0x2b8] sm:$0xff] %v2793
    %2922 = vst [vmem:[#allocation2 + $0x2c0] sm:$0xff] %v2794
    %2923 = vst [vmem:[#allocation2 + $0x2c8] sm:$0xff] %v2795
    %2924 = vst [vmem:[#allocation2 + $0x2d0] sm:$0xff] %v2796
    %2925 = vst [vmem:[#allocation2 + $0x2d8] sm:$0xff] %v2797
    %2926 = vst [vmem:[#allocation2 + $0x2e0] sm:$0xff] %v2798
    %2927 = vst [vmem:[#allocation2 + $0x2e8] sm:$0xff] %v2799
    %2928 = vst [vmem:[#allocation2 + $0x2f0] sm:$0xff] %v2800
    %2929 = vst [vmem:[#allocation2 + $0x2f8] sm:$0xff] %v2801
    %2930 = vst [vmem:[#allocation2 + $0x300] sm:$0xff] %v2802
    %2931 = vst [vmem:[#allocation2 + $0x308] sm:$0xff] %v2803
    %2932 = vst [vmem:[#allocation2 + $0x310] sm:$0xff] %v2804
    %2933 = vst [vmem:[#allocation2 + $0x318] sm:$0xff] %v2805
    %2934 = vst [vmem:[#allocation2 + $0x320] sm:$0xff] %v2806
    %2935 = vst [vmem:[#allocation2 + $0x328] sm:$0xff] %v2807
    %2936 = vst [vmem:[#allocation2 + $0x330] sm:$0xff] %v2808
    %2937 = vst [vmem:[#allocation2 + $0x338] sm:$0xff] %v2809
    %2938 = vst [vmem:[#allocation2 + $0x340] sm:$0xff] %v2810
    %2939 = vst [vmem:[#allocation2 + $0x348] sm:$0xff] %v2811
    %2940 = vst [vmem:[#allocation2 + $0x350] sm:$0xff] %v2812
    %2941 = vst [vmem:[#allocation2 + $0x358] sm:$0xff] %v2813
    %2942 = vst [vmem:[#allocation2 + $0x360] sm:$0xff] %v2814
    %2943 = vst [vmem:[#allocation2 + $0x368] sm:$0xff] %v2815
    %2944 = vst [vmem:[#allocation2 + $0x370] sm:$0xff] %v2816
    %2945 = vst [vmem:[#allocation2 + $0x378] sm:$0xff] %v2817
    %2946 = vst [vmem:[#allocation2 + $0x380] sm:$0xff] %v2818
    %2947 = vst [vmem:[#allocation2 + $0x388] sm:$0xff] %v2819
    %2948 = vst [vmem:[#allocation2 + $0x390] sm:$0xff] %v2820
    %2949 = vst [vmem:[#allocation2 + $0x398] sm:$0xff] %v2821
    %2950 = vst [vmem:[#allocation2 + $0x3a0] sm:$0xff] %v2822
    %2951 = vst [vmem:[#allocation2 + $0x3a8] sm:$0xff] %v2823
    %2952 = vst [vmem:[#allocation2 + $0x3b0] sm:$0xff] %v2824
    %2953 = vst [vmem:[#allocation2 + $0x3b8] sm:$0xff] %v2825
    %2954 = vst [vmem:[#allocation2 + $0x3c0] sm:$0xff] %v2826
    %2955 = vst [vmem:[#allocation2 + $0x3c8] sm:$0xff] %v2827
    %2956 = vst [vmem:[#allocation2 + $0x3d0] sm:$0xff] %v2828
    %2957 = vst [vmem:[#allocation2 + $0x3d8] sm:$0xff] %v2829
    %2958 = vst [vmem:[#allocation2 + $0x3e0] sm:$0xff] %v2830
    %2959 = vst [vmem:[#allocation2 + $0x3e8] sm:$0xff] %v2831
    %2960 = vst [vmem:[#allocation2 + $0x3f0] sm:$0xff] %v2832
    %2961 = vst [vmem:[#allocation2 + $0x3f8] sm:$0xff] %v2833
    %v2962 = vld [vmem:[#allocation3] sm:$0xff]
    %v2963 = vld [vmem:[#allocation3 + $0x8] sm:$0xff]
    %v2964 = vld [vmem:[#allocation3 + $0x10] sm:$0xff]
    %v2965 = vld [vmem:[#allocation3 + $0x18] sm:$0xff]
    %v2966 = vld [vmem:[#allocation3 + $0x20] sm:$0xff]
    %v2967 = vld [vmem:[#allocation3 + $0x28] sm:$0xff]
    %v2968 = vld [vmem:[#allocation3 + $0x30] sm:$0xff]
    %v2969 = vld [vmem:[#allocation3 + $0x38] sm:$0xff]
    %v2970 = vld [vmem:[#allocation3 + $0x40] sm:$0xff]
    %v2971 = vld [vmem:[#allocation3 + $0x48] sm:$0xff]
    %v2972 = vld [vmem:[#allocation3 + $0x50] sm:$0xff]
    %v2973 = vld [vmem:[#allocation3 + $0x58] sm:$0xff]
    %v2974 = vld [vmem:[#allocation3 + $0x60] sm:$0xff]
    %v2975 = vld [vmem:[#allocation3 + $0x68] sm:$0xff]
    %v2976 = vld [vmem:[#allocation3 + $0x70] sm:$0xff]
    %v2977 = vld [vmem:[#allocation3 + $0x78] sm:$0xff]
    %v2978 = vld [vmem:[#allocation3 + $0x80] sm:$0xff]
    %v2979 = vld [vmem:[#allocation3 + $0x88] sm:$0xff]
    %v2980 = vld [vmem:[#allocation3 + $0x90] sm:$0xff]
    %v2981 = vld [vmem:[#allocation3 + $0x98] sm:$0xff]
    %v2982 = vld [vmem:[#allocation3 + $0xa0] sm:$0xff]
    %v2983 = vld [vmem:[#allocation3 + $0xa8] sm:$0xff]
    %v2984 = vld [vmem:[#allocation3 + $0xb0] sm:$0xff]
    %v2985 = vld [vmem:[#allocation3 + $0xb8] sm:$0xff]
    %v2986 = vld [vmem:[#allocation3 + $0xc0] sm:$0xff]
    %v2987 = vld [vmem:[#allocation3 + $0xc8] sm:$0xff]
    %v2988 = vld [vmem:[#allocation3 + $0xd0] sm:$0xff]
    %v2989 = vld [vmem:[#allocation3 + $0xd8] sm:$0xff]
    %v2990 = vld [vmem:[#allocation3 + $0xe0] sm:$0xff]
    %v2991 = vld [vmem:[#allocation3 + $0xe8] sm:$0xff]
    %v2992 = vld [vmem:[#allocation3 + $0xf0] sm:$0xff]
    %v2993 = vld [vmem:[#allocation3 + $0xf8] sm:$0xff]
    %v2994 = vld [vmem:[#allocation3 + $0x100] sm:$0xff]
    %v2995 = vld [vmem:[#allocation3 + $0x108] sm:$0xff]
    %v2996 = vld [vmem:[#allocation3 + $0x110] sm:$0xff]
    %v2997 = vld [vmem:[#allocation3 + $0x118] sm:$0xff]
    %v2998 = vld [vmem:[#allocation3 + $0x120] sm:$0xff]
    %v2999 = vld [vmem:[#allocation3 + $0x128] sm:$0xff]
    %v3000 = vld [vmem:[#allocation3 + $0x130] sm:$0xff]
    %v3001 = vld [vmem:[#allocation3 + $0x138] sm:$0xff]
    %v3002 = vld [vmem:[#allocation3 + $0x140] sm:$0xff]
    %v3003 = vld [vmem:[#allocation3 + $0x148] sm:$0xff]
    %v3004 = vld [vmem:[#allocation3 + $0x150] sm:$0xff]
    %v3005 = vld [vmem:[#allocation3 + $0x158] sm:$0xff]
    %v3006 = vld [vmem:[#allocation3 + $0x160] sm:$0xff]
    %v3007 = vld [vmem:[#allocation3 + $0x168] sm:$0xff]
    %v3008 = vld [vmem:[#allocation3 + $0x170] sm:$0xff]
    %v3009 = vld [vmem:[#allocation3 + $0x178] sm:$0xff]
    %v3010 = vld [vmem:[#allocation3 + $0x180] sm:$0xff]
    %v3011 = vld [vmem:[#allocation3 + $0x188] sm:$0xff]
    %v3012 = vld [vmem:[#allocation3 + $0x190] sm:$0xff]
    %v3013 = vld [vmem:[#allocation3 + $0x198] sm:$0xff]
    %v3014 = vld [vmem:[#allocation3 + $0x1a0] sm:$0xff]
    %v3015 = vld [vmem:[#allocation3 + $0x1a8] sm:$0xff]
    %v3016 = vld [vmem:[#allocation3 + $0x1b0] sm:$0xff]
    %v3017 = vld [vmem:[#allocation3 + $0x1b8] sm:$0xff]
    %v3018 = vld [vmem:[#allocation3 + $0x1c0] sm:$0xff]
    %v3019 = vld [vmem:[#allocation3 + $0x1c8] sm:$0xff]
    %v3020 = vld [vmem:[#allocation3 + $0x1d0] sm:$0xff]
    %v3021 = vld [vmem:[#allocation3 + $0x1d8] sm:$0xff]
    %v3022 = vld [vmem:[#allocation3 + $0x1e0] sm:$0xff]
    %v3023 = vld [vmem:[#allocation3 + $0x1e8] sm:$0xff]
    %v3024 = vld [vmem:[#allocation3 + $0x1f0] sm:$0xff]
    %v3025 = vld [vmem:[#allocation3 + $0x1f8] sm:$0xff]
    %v3026 = vld [vmem:[#allocation3 + $0x200] sm:$0xff]
    %v3027 = vld [vmem:[#allocation3 + $0x208] sm:$0xff]
    %v3028 = vld [vmem:[#allocation3 + $0x210] sm:$0xff]
    %v3029 = vld [vmem:[#allocation3 + $0x218] sm:$0xff]
    %v3030 = vld [vmem:[#allocation3 + $0x220] sm:$0xff]
    %v3031 = vld [vmem:[#allocation3 + $0x228] sm:$0xff]
    %v3032 = vld [vmem:[#allocation3 + $0x230] sm:$0xff]
    %v3033 = vld [vmem:[#allocation3 + $0x238] sm:$0xff]
    %v3034 = vld [vmem:[#allocation3 + $0x240] sm:$0xff]
    %v3035 = vld [vmem:[#allocation3 + $0x248] sm:$0xff]
    %v3036 = vld [vmem:[#allocation3 + $0x250] sm:$0xff]
    %v3037 = vld [vmem:[#allocation3 + $0x258] sm:$0xff]
    %v3038 = vld [vmem:[#allocation3 + $0x260] sm:$0xff]
    %v3039 = vld [vmem:[#allocation3 + $0x268] sm:$0xff]
    %v3040 = vld [vmem:[#allocation3 + $0x270] sm:$0xff]
    %v3041 = vld [vmem:[#allocation3 + $0x278] sm:$0xff]
    %v3042 = vld [vmem:[#allocation3 + $0x280] sm:$0xff]
    %v3043 = vld [vmem:[#allocation3 + $0x288] sm:$0xff]
    %v3044 = vld [vmem:[#allocation3 + $0x290] sm:$0xff]
    %v3045 = vld [vmem:[#allocation3 + $0x298] sm:$0xff]
    %v3046 = vld [vmem:[#allocation3 + $0x2a0] sm:$0xff]
    %v3047 = vld [vmem:[#allocation3 + $0x2a8] sm:$0xff]
    %v3048 = vld [vmem:[#allocation3 + $0x2b0] sm:$0xff]
    %v3049 = vld [vmem:[#allocation3 + $0x2b8] sm:$0xff]
    %v3050 = vld [vmem:[#allocation3 + $0x2c0] sm:$0xff]
    %v3051 = vld [vmem:[#allocation3 + $0x2c8] sm:$0xff]
    %v3052 = vld [vmem:[#allocation3 + $0x2d0] sm:$0xff]
    %v3053 = vld [vmem:[#allocation3 + $0x2d8] sm:$0xff]
    %v3054 = vld [vmem:[#allocation3 + $0x2e0] sm:$0xff]
    %v3055 = vld [vmem:[#allocation3 + $0x2e8] sm:$0xff]
    %v3056 = vld [vmem:[#allocation3 + $0x2f0] sm:$0xff]
    %v3057 = vld [vmem:[#allocation3 + $0x2f8] sm:$0xff]
    %v3058 = vld [vmem:[#allocation3 + $0x300] sm:$0xff]
    %v3059 = vld [vmem:[#allocation3 + $0x308] sm:$0xff]
    %v3060 = vld [vmem:[#allocation3 + $0x310] sm:$0xff]
    %v3061 = vld [vmem:[#allocation3 + $0x318] sm:$0xff]
    %v3062 = vld [vmem:[#allocation3 + $0x320] sm:$0xff]
    %v3063 = vld [vmem:[#allocation3 + $0x328] sm:$0xff]
    %v3064 = vld [vmem:[#allocation3 + $0x330] sm:$0xff]
    %v3065 = vld [vmem:[#allocation3 + $0x338] sm:$0xff]
    %v3066 = vld [vmem:[#allocation3 + $0x340] sm:$0xff]
    %v3067 = vld [vmem:[#allocation3 + $0x348] sm:$0xff]
    %v3068 = vld [vmem:[#allocation3 + $0x350] sm:$0xff]
    %v3069 = vld [vmem:[#allocation3 + $0x358] sm:$0xff]
    %v3070 = vld [vmem:[#allocation3 + $0x360] sm:$0xff]
    %v3071 = vld [vmem:[#allocation3 + $0x368] sm:$0xff]
    %v3072 = vld [vmem:[#allocation3 + $0x370] sm:$0xff]
    %v3073 = vld [vmem:[#allocation3 + $0x378] sm:$0xff]
    %v3074 = vld [vmem:[#allocation3 + $0x380] sm:$0xff]
    %v3075 = vld [vmem:[#allocation3 + $0x388] sm:$0xff]
    %v3076 = vld [vmem:[#allocation3 + $0x390] sm:$0xff]
    %v3077 = vld [vmem:[#allocation3 + $0x398] sm:$0xff]
    %v3078 = vld [vmem:[#allocation3 + $0x3a0] sm:$0xff]
    %v3079 = vld [vmem:[#allocation3 + $0x3a8] sm:$0xff]
    %v3080 = vld [vmem:[#allocation3 + $0x3b0] sm:$0xff]
    %v3081 = vld [vmem:[#allocation3 + $0x3b8] sm:$0xff]
    %v3082 = vld [vmem:[#allocation3 + $0x3c0] sm:$0xff]
    %v3083 = vld [vmem:[#allocation3 + $0x3c8] sm:$0xff]
    %v3084 = vld [vmem:[#allocation3 + $0x3d0] sm:$0xff]
    %v3085 = vld [vmem:[#allocation3 + $0x3d8] sm:$0xff]
    %v3086 = vld [vmem:[#allocation3 + $0x3e0] sm:$0xff]
    %v3087 = vld [vmem:[#allocation3 + $0x3e8] sm:$0xff]
    %v3088 = vld [vmem:[#allocation3 + $0x3f0] sm:$0xff]
    %v3089 = vld [vmem:[#allocation3 + $0x3f8] sm:$0xff]
    %v3090 = vadd.f32 %v2962, %v2190
    %v3091 = vadd.f32 %v2963, %v2191
    %v3092 = vadd.f32 %v2964, %v2192
    %v3093 = vadd.f32 %v2965, %v2193
    %v3094 = vadd.f32 %v2966, %v2194
    %v3095 = vadd.f32 %v2967, %v2195
    %v3096 = vadd.f32 %v2968, %v2196
    %v3097 = vadd.f32 %v2969, %v2197
    %v3098 = vadd.f32 %v2970, %v2198
    %v3099 = vadd.f32 %v2971, %v2199
    %v3100 = vadd.f32 %v2972, %v2200
    %v3101 = vadd.f32 %v2973, %v2201
    %v3102 = vadd.f32 %v2974, %v2202
    %v3103 = vadd.f32 %v2975, %v2203
    %v3104 = vadd.f32 %v2976, %v2204
    %v3105 = vadd.f32 %v2977, %v2205
    %v3106 = vadd.f32 %v2978, %v2206
    %v3107 = vadd.f32 %v2979, %v2207
    %v3108 = vadd.f32 %v2980, %v2208
    %v3109 = vadd.f32 %v2981, %v2209
    %v3110 = vadd.f32 %v2982, %v2210
    %v3111 = vadd.f32 %v2983, %v2211
    %v3112 = vadd.f32 %v2984, %v2212
    %v3113 = vadd.f32 %v2985, %v2213
    %v3114 = vadd.f32 %v2986, %v2214
    %v3115 = vadd.f32 %v2987, %v2215
    %v3116 = vadd.f32 %v2988, %v2216
    %v3117 = vadd.f32 %v2989, %v2217
    %v3118 = vadd.f32 %v2990, %v2218
    %v3119 = vadd.f32 %v2991, %v2219
    %v3120 = vadd.f32 %v2992, %v2220
    %v3121 = vadd.f32 %v2993, %v2221
    %v3122 = vadd.f32 %v2994, %v2222
    %v3123 = vadd.f32 %v2995, %v2223
    %v3124 = vadd.f32 %v2996, %v2224
    %v3125 = vadd.f32 %v2997, %v2225
    %v3126 = vadd.f32 %v2998, %v2226
    %v3127 = vadd.f32 %v2999, %v2227
    %v3128 = vadd.f32 %v3000, %v2228
    %v3129 = vadd.f32 %v3001, %v2229
    %v3130 = vadd.f32 %v3002, %v2230
    %v3131 = vadd.f32 %v3003, %v2231
    %v3132 = vadd.f32 %v3004, %v2232
    %v3133 = vadd.f32 %v3005, %v2233
    %v3134 = vadd.f32 %v3006, %v2234
    %v3135 = vadd.f32 %v3007, %v2235
    %v3136 = vadd.f32 %v3008, %v2236
    %v3137 = vadd.f32 %v3009, %v2237
    %v3138 = vadd.f32 %v3010, %v2238
    %v3139 = vadd.f32 %v3011, %v2239
    %v3140 = vadd.f32 %v3012, %v2240
    %v3141 = vadd.f32 %v3013, %v2241
    %v3142 = vadd.f32 %v3014, %v2242
    %v3143 = vadd.f32 %v3015, %v2243
    %v3144 = vadd.f32 %v3016, %v2244
    %v3145 = vadd.f32 %v3017, %v2245
    %v3146 = vadd.f32 %v3018, %v2246
    %v3147 = vadd.f32 %v3019, %v2247
    %v3148 = vadd.f32 %v3020, %v2248
    %v3149 = vadd.f32 %v3021, %v2249
    %v3150 = vadd.f32 %v3022, %v2250
    %v3151 = vadd.f32 %v3023, %v2251
    %v3152 = vadd.f32 %v3024, %v2252
    %v3153 = vadd.f32 %v3025, %v2253
    %v3154 = vadd.f32 %v3026, %v2254
    %v3155 = vadd.f32 %v3027, %v2255
    %v3156 = vadd.f32 %v3028, %v2256
    %v3157 = vadd.f32 %v3029, %v2257
    %v3158 = vadd.f32 %v3030, %v2258
    %v3159 = vadd.f32 %v3031, %v2259
    %v3160 = vadd.f32 %v3032, %v2260
    %v3161 = vadd.f32 %v3033, %v2261
    %v3162 = vadd.f32 %v3034, %v2262
    %v3163 = vadd.f32 %v3035, %v2263
    %v3164 = vadd.f32 %v3036, %v2264
    %v3165 = vadd.f32 %v3037, %v2265
    %v3166 = vadd.f32 %v3038, %v2266
    %v3167 = vadd.f32 %v3039, %v2267
    %v3168 = vadd.f32 %v3040, %v2268
    %v3169 = vadd.f32 %v3041, %v2269
    %v3170 = vadd.f32 %v3042, %v2270
    %v3171 = vadd.f32 %v3043, %v2271
    %v3172 = vadd.f32 %v3044, %v2272
    %v3173 = vadd.f32 %v3045, %v2273
    %v3174 = vadd.f32 %v3046, %v2274
    %v3175 = vadd.f32 %v3047, %v2275
    %v3176 = vadd.f32 %v3048, %v2276
    %v3177 = vadd.f32 %v3049, %v2277
    %v3178 = vadd.f32 %v3050, %v2278
    %v3179 = vadd.f32 %v3051, %v2279
    %v3180 = vadd.f32 %v3052, %v2280
    %v3181 = vadd.f32 %v3053, %v2281
    %v3182 = vadd.f32 %v3054, %v2282
    %v3183 = vadd.f32 %v3055, %v2283
    %v3184 = vadd.f32 %v3056, %v2284
    %v3185 = vadd.f32 %v3057, %v2285
    %v3186 = vadd.f32 %v3058, %v2286
    %v3187 = vadd.f32 %v3059, %v2287
    %v3188 = vadd.f32 %v3060, %v2288
    %v3189 = vadd.f32 %v3061, %v2289
    %v3190 = vadd.f32 %v3062, %v2290
    %v3191 = vadd.f32 %v3063, %v2291
    %v3192 = vadd.f32 %v3064, %v2292
    %v3193 = vadd.f32 %v3065, %v2293
    %v3194 = vadd.f32 %v3066, %v2294
    %v3195 = vadd.f32 %v3067, %v2295
    %v3196 = vadd.f32 %v3068, %v2296
    %v3197 = vadd.f32 %v3069, %v2297
    %v3198 = vadd.f32 %v3070, %v2298
    %v3199 = vadd.f32 %v3071, %v2299
    %v3200 = vadd.f32 %v3072, %v2300
    %v3201 = vadd.f32 %v3073, %v2301
    %v3202 = vadd.f32 %v3074, %v2302
    %v3203 = vadd.f32 %v3075, %v2303
    %v3204 = vadd.f32 %v3076, %v2304
    %v3205 = vadd.f32 %v3077, %v2305
    %v3206 = vadd.f32 %v3078, %v2306
    %v3207 = vadd.f32 %v3079, %v2307
    %v3208 = vadd.f32 %v3080, %v2308
    %v3209 = vadd.f32 %v3081, %v2309
    %v3210 = vadd.f32 %v3082, %v2310
    %v3211 = vadd.f32 %v3083, %v2311
    %v3212 = vadd.f32 %v3084, %v2312
    %v3213 = vadd.f32 %v3085, %v2313
    %v3214 = vadd.f32 %v3086, %v2314
    %v3215 = vadd.f32 %v3087, %v2315
    %v3216 = vadd.f32 %v3088, %v2316
    %v3217 = vadd.f32 %v3089, %v2317
    %3218 = vst [vmem:[#allocation3] sm:$0xff] %v3090
    %3219 = vst [vmem:[#allocation3 + $0x8] sm:$0xff] %v3091
    %3220 = vst [vmem:[#allocation3 + $0x10] sm:$0xff] %v3092
    %3221 = vst [vmem:[#allocation3 + $0x18] sm:$0xff] %v3093
    %3222 = vst [vmem:[#allocation3 + $0x20] sm:$0xff] %v3094
    %3223 = vst [vmem:[#allocation3 + $0x28] sm:$0xff] %v3095
    %3224 = vst [vmem:[#allocation3 + $0x30] sm:$0xff] %v3096
    %3225 = vst [vmem:[#allocation3 + $0x38] sm:$0xff] %v3097
    %3226 = vst [vmem:[#allocation3 + $0x40] sm:$0xff] %v3098
    %3227 = vst [vmem:[#allocation3 + $0x48] sm:$0xff] %v3099
    %3228 = vst [vmem:[#allocation3 + $0x50] sm:$0xff] %v3100
    %3229 = vst [vmem:[#allocation3 + $0x58] sm:$0xff] %v3101
    %3230 = vst [vmem:[#allocation3 + $0x60] sm:$0xff] %v3102
    %3231 = vst [vmem:[#allocation3 + $0x68] sm:$0xff] %v3103
    %3232 = vst [vmem:[#allocation3 + $0x70] sm:$0xff] %v3104
    %3233 = vst [vmem:[#allocation3 + $0x78] sm:$0xff] %v3105
    %3234 = vst [vmem:[#allocation3 + $0x80] sm:$0xff] %v3106
    %3235 = vst [vmem:[#allocation3 + $0x88] sm:$0xff] %v3107
    %3236 = vst [vmem:[#allocation3 + $0x90] sm:$0xff] %v3108
    %3237 = vst [vmem:[#allocation3 + $0x98] sm:$0xff] %v3109
    %3238 = vst [vmem:[#allocation3 + $0xa0] sm:$0xff] %v3110
    %3239 = vst [vmem:[#allocation3 + $0xa8] sm:$0xff] %v3111
    %3240 = vst [vmem:[#allocation3 + $0xb0] sm:$0xff] %v3112
    %3241 = vst [vmem:[#allocation3 + $0xb8] sm:$0xff] %v3113
    %3242 = vst [vmem:[#allocation3 + $0xc0] sm:$0xff] %v3114
    %3243 = vst [vmem:[#allocation3 + $0xc8] sm:$0xff] %v3115
    %3244 = vst [vmem:[#allocation3 + $0xd0] sm:$0xff] %v3116
    %3245 = vst [vmem:[#allocation3 + $0xd8] sm:$0xff] %v3117
    %3246 = vst [vmem:[#allocation3 + $0xe0] sm:$0xff] %v3118
    %3247 = vst [vmem:[#allocation3 + $0xe8] sm:$0xff] %v3119
    %3248 = vst [vmem:[#allocation3 + $0xf0] sm:$0xff] %v3120
    %3249 = vst [vmem:[#allocation3 + $0xf8] sm:$0xff] %v3121
    %3250 = vst [vmem:[#allocation3 + $0x100] sm:$0xff] %v3122
    %3251 = vst [vmem:[#allocation3 + $0x108] sm:$0xff] %v3123
    %3252 = vst [vmem:[#allocation3 + $0x110] sm:$0xff] %v3124
    %3253 = vst [vmem:[#allocation3 + $0x118] sm:$0xff] %v3125
    %3254 = vst [vmem:[#allocation3 + $0x120] sm:$0xff] %v3126
    %3255 = vst [vmem:[#allocation3 + $0x128] sm:$0xff] %v3127
    %3256 = vst [vmem:[#allocation3 + $0x130] sm:$0xff] %v3128
    %3257 = vst [vmem:[#allocation3 + $0x138] sm:$0xff] %v3129
    %3258 = vst [vmem:[#allocation3 + $0x140] sm:$0xff] %v3130
    %3259 = vst [vmem:[#allocation3 + $0x148] sm:$0xff] %v3131
    %3260 = vst [vmem:[#allocation3 + $0x150] sm:$0xff] %v3132
    %3261 = vst [vmem:[#allocation3 + $0x158] sm:$0xff] %v3133
    %3262 = vst [vmem:[#allocation3 + $0x160] sm:$0xff] %v3134
    %3263 = vst [vmem:[#allocation3 + $0x168] sm:$0xff] %v3135
    %3264 = vst [vmem:[#allocation3 + $0x170] sm:$0xff] %v3136
    %3265 = vst [vmem:[#allocation3 + $0x178] sm:$0xff] %v3137
    %3266 = vst [vmem:[#allocation3 + $0x180] sm:$0xff] %v3138
    %3267 = vst [vmem:[#allocation3 + $0x188] sm:$0xff] %v3139
    %3268 = vst [vmem:[#allocation3 + $0x190] sm:$0xff] %v3140
    %3269 = vst [vmem:[#allocation3 + $0x198] sm:$0xff] %v3141
    %3270 = vst [vmem:[#allocation3 + $0x1a0] sm:$0xff] %v3142
    %3271 = vst [vmem:[#allocation3 + $0x1a8] sm:$0xff] %v3143
    %3272 = vst [vmem:[#allocation3 + $0x1b0] sm:$0xff] %v3144
    %3273 = vst [vmem:[#allocation3 + $0x1b8] sm:$0xff] %v3145
    %3274 = vst [vmem:[#allocation3 + $0x1c0] sm:$0xff] %v3146
    %3275 = vst [vmem:[#allocation3 + $0x1c8] sm:$0xff] %v3147
    %3276 = vst [vmem:[#allocation3 + $0x1d0] sm:$0xff] %v3148
    %3277 = vst [vmem:[#allocation3 + $0x1d8] sm:$0xff] %v3149
    %3278 = vst [vmem:[#allocation3 + $0x1e0] sm:$0xff] %v3150
    %3279 = vst [vmem:[#allocation3 + $0x1e8] sm:$0xff] %v3151
    %3280 = vst [vmem:[#allocation3 + $0x1f0] sm:$0xff] %v3152
    %3281 = vst [vmem:[#allocation3 + $0x1f8] sm:$0xff] %v3153
    %3282 = vst [vmem:[#allocation3 + $0x200] sm:$0xff] %v3154
    %3283 = vst [vmem:[#allocation3 + $0x208] sm:$0xff] %v3155
    %3284 = vst [vmem:[#allocation3 + $0x210] sm:$0xff] %v3156
    %3285 = vst [vmem:[#allocation3 + $0x218] sm:$0xff] %v3157
    %3286 = vst [vmem:[#allocation3 + $0x220] sm:$0xff] %v3158
    %3287 = vst [vmem:[#allocation3 + $0x228] sm:$0xff] %v3159
    %3288 = vst [vmem:[#allocation3 + $0x230] sm:$0xff] %v3160
    %3289 = vst [vmem:[#allocation3 + $0x238] sm:$0xff] %v3161
    %3290 = vst [vmem:[#allocation3 + $0x240] sm:$0xff] %v3162
    %3291 = vst [vmem:[#allocation3 + $0x248] sm:$0xff] %v3163
    %3292 = vst [vmem:[#allocation3 + $0x250] sm:$0xff] %v3164
    %3293 = vst [vmem:[#allocation3 + $0x258] sm:$0xff] %v3165
    %3294 = vst [vmem:[#allocation3 + $0x260] sm:$0xff] %v3166
    %3295 = vst [vmem:[#allocation3 + $0x268] sm:$0xff] %v3167
    %3296 = vst [vmem:[#allocation3 + $0x270] sm:$0xff] %v3168
    %3297 = vst [vmem:[#allocation3 + $0x278] sm:$0xff] %v3169
    %3298 = vst [vmem:[#allocation3 + $0x280] sm:$0xff] %v3170
    %3299 = vst [vmem:[#allocation3 + $0x288] sm:$0xff] %v3171
    %3300 = vst [vmem:[#allocation3 + $0x290] sm:$0xff] %v3172
    %3301 = vst [vmem:[#allocation3 + $0x298] sm:$0xff] %v3173
    %3302 = vst [vmem:[#allocation3 + $0x2a0] sm:$0xff] %v3174
    %3303 = vst [vmem:[#allocation3 + $0x2a8] sm:$0xff] %v3175
    %3304 = vst [vmem:[#allocation3 + $0x2b0] sm:$0xff] %v3176
    %3305 = vst [vmem:[#allocation3 + $0x2b8] sm:$0xff] %v3177
    %3306 = vst [vmem:[#allocation3 + $0x2c0] sm:$0xff] %v3178
    %3307 = vst [vmem:[#allocation3 + $0x2c8] sm:$0xff] %v3179
    %3308 = vst [vmem:[#allocation3 + $0x2d0] sm:$0xff] %v3180
    %3309 = vst [vmem:[#allocation3 + $0x2d8] sm:$0xff] %v3181
    %3310 = vst [vmem:[#allocation3 + $0x2e0] sm:$0xff] %v3182
    %3311 = vst [vmem:[#allocation3 + $0x2e8] sm:$0xff] %v3183
    %3312 = vst [vmem:[#allocation3 + $0x2f0] sm:$0xff] %v3184
    %3313 = vst [vmem:[#allocation3 + $0x2f8] sm:$0xff] %v3185
    %3314 = vst [vmem:[#allocation3 + $0x300] sm:$0xff] %v3186
    %3315 = vst [vmem:[#allocation3 + $0x308] sm:$0xff] %v3187
    %3316 = vst [vmem:[#allocation3 + $0x310] sm:$0xff] %v3188
    %3317 = vst [vmem:[#allocation3 + $0x318] sm:$0xff] %v3189
    %3318 = vst [vmem:[#allocation3 + $0x320] sm:$0xff] %v3190
    %3319 = vst [vmem:[#allocation3 + $0x328] sm:$0xff] %v3191
    %3320 = vst [vmem:[#allocation3 + $0x330] sm:$0xff] %v3192
    %3321 = vst [vmem:[#allocation3 + $0x338] sm:$0xff] %v3193
    %3322 = vst [vmem:[#allocation3 + $0x340] sm:$0xff] %v3194
    %3323 = vst [vmem:[#allocation3 + $0x348] sm:$0xff] %v3195
    %3324 = vst [vmem:[#allocation3 + $0x350] sm:$0xff] %v3196
    %3325 = vst [vmem:[#allocation3 + $0x358] sm:$0xff] %v3197
    %3326 = vst [vmem:[#allocation3 + $0x360] sm:$0xff] %v3198
    %3327 = vst [vmem:[#allocation3 + $0x368] sm:$0xff] %v3199
    %3328 = vst [vmem:[#allocation3 + $0x370] sm:$0xff] %v3200
    %3329 = vst [vmem:[#allocation3 + $0x378] sm:$0xff] %v3201
    %3330 = vst [vmem:[#allocation3 + $0x380] sm:$0xff] %v3202
    %3331 = vst [vmem:[#allocation3 + $0x388] sm:$0xff] %v3203
    %3332 = vst [vmem:[#allocation3 + $0x390] sm:$0xff] %v3204
    %3333 = vst [vmem:[#allocation3 + $0x398] sm:$0xff] %v3205
    %3334 = vst [vmem:[#allocation3 + $0x3a0] sm:$0xff] %v3206
    %3335 = vst [vmem:[#allocation3 + $0x3a8] sm:$0xff] %v3207
    %3336 = vst [vmem:[#allocation3 + $0x3b0] sm:$0xff] %v3208
    %3337 = vst [vmem:[#allocation3 + $0x3b8] sm:$0xff] %v3209
    %3338 = vst [vmem:[#allocation3 + $0x3c0] sm:$0xff] %v3210
    %3339 = vst [vmem:[#allocation3 + $0x3c8] sm:$0xff] %v3211
    %3340 = vst [vmem:[#allocation3 + $0x3d0] sm:$0xff] %v3212
    %3341 = vst [vmem:[#allocation3 + $0x3d8] sm:$0xff] %v3213
    %3342 = vst [vmem:[#allocation3 + $0x3e0] sm:$0xff] %v3214
    %3343 = vst [vmem:[#allocation3 + $0x3e8] sm:$0xff] %v3215
    %3344 = vst [vmem:[#allocation3 + $0x3f0] sm:$0xff] %v3216
    %3345 = vst [vmem:[#allocation3 + $0x3f8] sm:$0xff] %v3217
    // Predicated region
    $region46: #{tpu_custom_call.1} parent=1 // pred_check
      %p3346 = pneg %p2318
    $region47: #{tpu_custom_call.1} parent=1 // pred_check_branch
      %3348 = sbr.rel (%p3346) target = $region49
    $region48: #{tpu_custom_call.1} parent=1 // pred_region
      %v3349 = vld [vmem:[#allocation2] sm:$0xff]
      %v3350 = vld [vmem:[#allocation2 + $0x8] sm:$0xff]
      %v3351 = vld [vmem:[#allocation2 + $0x10] sm:$0xff]
      %v3352 = vld [vmem:[#allocation2 + $0x18] sm:$0xff]
      %v3353 = vld [vmem:[#allocation2 + $0x20] sm:$0xff]
      %v3354 = vld [vmem:[#allocation2 + $0x28] sm:$0xff]
      %v3355 = vld [vmem:[#allocation2 + $0x30] sm:$0xff]
      %v3356 = vld [vmem:[#allocation2 + $0x38] sm:$0xff]
      %v3357 = vld [vmem:[#allocation2 + $0x40] sm:$0xff]
      %v3358 = vld [vmem:[#allocation2 + $0x48] sm:$0xff]
      %v3359 = vld [vmem:[#allocation2 + $0x50] sm:$0xff]
      %v3360 = vld [vmem:[#allocation2 + $0x58] sm:$0xff]
      %v3361 = vld [vmem:[#allocation2 + $0x60] sm:$0xff]
      %v3362 = vld [vmem:[#allocation2 + $0x68] sm:$0xff]
      %v3363 = vld [vmem:[#allocation2 + $0x70] sm:$0xff]
      %v3364 = vld [vmem:[#allocation2 + $0x78] sm:$0xff]
      %v3365 = vld [vmem:[#allocation2 + $0x80] sm:$0xff]
      %v3366 = vld [vmem:[#allocation2 + $0x88] sm:$0xff]
      %v3367 = vld [vmem:[#allocation2 + $0x90] sm:$0xff]
      %v3368 = vld [vmem:[#allocation2 + $0x98] sm:$0xff]
      %v3369 = vld [vmem:[#allocation2 + $0xa0] sm:$0xff]
      %v3370 = vld [vmem:[#allocation2 + $0xa8] sm:$0xff]
      %v3371 = vld [vmem:[#allocation2 + $0xb0] sm:$0xff]
      %v3372 = vld [vmem:[#allocation2 + $0xb8] sm:$0xff]
      %v3373 = vld [vmem:[#allocation2 + $0xc0] sm:$0xff]
      %v3374 = vld [vmem:[#allocation2 + $0xc8] sm:$0xff]
      %v3375 = vld [vmem:[#allocation2 + $0xd0] sm:$0xff]
      %v3376 = vld [vmem:[#allocation2 + $0xd8] sm:$0xff]
      %v3377 = vld [vmem:[#allocation2 + $0xe0] sm:$0xff]
      %v3378 = vld [vmem:[#allocation2 + $0xe8] sm:$0xff]
      %v3379 = vld [vmem:[#allocation2 + $0xf0] sm:$0xff]
      %v3380 = vld [vmem:[#allocation2 + $0xf8] sm:$0xff]
      %v3381 = vld [vmem:[#allocation2 + $0x100] sm:$0xff]
      %v3382 = vld [vmem:[#allocation2 + $0x108] sm:$0xff]
      %v3383 = vld [vmem:[#allocation2 + $0x110] sm:$0xff]
      %v3384 = vld [vmem:[#allocation2 + $0x118] sm:$0xff]
      %v3385 = vld [vmem:[#allocation2 + $0x120] sm:$0xff]
      %v3386 = vld [vmem:[#allocation2 + $0x128] sm:$0xff]
      %v3387 = vld [vmem:[#allocation2 + $0x130] sm:$0xff]
      %v3388 = vld [vmem:[#allocation2 + $0x138] sm:$0xff]
      %v3389 = vld [vmem:[#allocation2 + $0x140] sm:$0xff]
      %v3390 = vld [vmem:[#allocation2 + $0x148] sm:$0xff]
      %v3391 = vld [vmem:[#allocation2 + $0x150] sm:$0xff]
      %v3392 = vld [vmem:[#allocation2 + $0x158] sm:$0xff]
      %v3393 = vld [vmem:[#allocation2 + $0x160] sm:$0xff]
      %v3394 = vld [vmem:[#allocation2 + $0x168] sm:$0xff]
      %v3395 = vld [vmem:[#allocation2 + $0x170] sm:$0xff]
      %v3396 = vld [vmem:[#allocation2 + $0x178] sm:$0xff]
      %v3397 = vld [vmem:[#allocation2 + $0x180] sm:$0xff]
      %v3398 = vld [vmem:[#allocation2 + $0x188] sm:$0xff]
      %v3399 = vld [vmem:[#allocation2 + $0x190] sm:$0xff]
      %v3400 = vld [vmem:[#allocation2 + $0x198] sm:$0xff]
      %v3401 = vld [vmem:[#allocation2 + $0x1a0] sm:$0xff]
      %v3402 = vld [vmem:[#allocation2 + $0x1a8] sm:$0xff]
      %v3403 = vld [vmem:[#allocation2 + $0x1b0] sm:$0xff]
      %v3404 = vld [vmem:[#allocation2 + $0x1b8] sm:$0xff]
      %v3405 = vld [vmem:[#allocation2 + $0x1c0] sm:$0xff]
      %v3406 = vld [vmem:[#allocation2 + $0x1c8] sm:$0xff]
      %v3407 = vld [vmem:[#allocation2 + $0x1d0] sm:$0xff]
      %v3408 = vld [vmem:[#allocation2 + $0x1d8] sm:$0xff]
      %v3409 = vld [vmem:[#allocation2 + $0x1e0] sm:$0xff]
      %v3410 = vld [vmem:[#allocation2 + $0x1e8] sm:$0xff]
      %v3411 = vld [vmem:[#allocation2 + $0x1f0] sm:$0xff]
      %v3412 = vld [vmem:[#allocation2 + $0x1f8] sm:$0xff]
      %v3413 = vld [vmem:[#allocation2 + $0x200] sm:$0xff]
      %v3414 = vld [vmem:[#allocation2 + $0x208] sm:$0xff]
      %v3415 = vld [vmem:[#allocation2 + $0x210] sm:$0xff]
      %v3416 = vld [vmem:[#allocation2 + $0x218] sm:$0xff]
      %v3417 = vld [vmem:[#allocation2 + $0x220] sm:$0xff]
      %v3418 = vld [vmem:[#allocation2 + $0x228] sm:$0xff]
      %v3419 = vld [vmem:[#allocation2 + $0x230] sm:$0xff]
      %v3420 = vld [vmem:[#allocation2 + $0x238] sm:$0xff]
      %v3421 = vld [vmem:[#allocation2 + $0x240] sm:$0xff]
      %v3422 = vld [vmem:[#allocation2 + $0x248] sm:$0xff]
      %v3423 = vld [vmem:[#allocation2 + $0x250] sm:$0xff]
      %v3424 = vld [vmem:[#allocation2 + $0x258] sm:$0xff]
      %v3425 = vld [vmem:[#allocation2 + $0x260] sm:$0xff]
      %v3426 = vld [vmem:[#allocation2 + $0x268] sm:$0xff]
      %v3427 = vld [vmem:[#allocation2 + $0x270] sm:$0xff]
      %v3428 = vld [vmem:[#allocation2 + $0x278] sm:$0xff]
      %v3429 = vld [vmem:[#allocation2 + $0x280] sm:$0xff]
      %v3430 = vld [vmem:[#allocation2 + $0x288] sm:$0xff]
      %v3431 = vld [vmem:[#allocation2 + $0x290] sm:$0xff]
      %v3432 = vld [vmem:[#allocation2 + $0x298] sm:$0xff]
      %v3433 = vld [vmem:[#allocation2 + $0x2a0] sm:$0xff]
      %v3434 = vld [vmem:[#allocation2 + $0x2a8] sm:$0xff]
      %v3435 = vld [vmem:[#allocation2 + $0x2b0] sm:$0xff]
      %v3436 = vld [vmem:[#allocation2 + $0x2b8] sm:$0xff]
      %v3437 = vld [vmem:[#allocation2 + $0x2c0] sm:$0xff]
      %v3438 = vld [vmem:[#allocation2 + $0x2c8] sm:$0xff]
      %v3439 = vld [vmem:[#allocation2 + $0x2d0] sm:$0xff]
      %v3440 = vld [vmem:[#allocation2 + $0x2d8] sm:$0xff]
      %v3441 = vld [vmem:[#allocation2 + $0x2e0] sm:$0xff]
      %v3442 = vld [vmem:[#allocation2 + $0x2e8] sm:$0xff]
      %v3443 = vld [vmem:[#allocation2 + $0x2f0] sm:$0xff]
      %v3444 = vld [vmem:[#allocation2 + $0x2f8] sm:$0xff]
      %v3445 = vld [vmem:[#allocation2 + $0x300] sm:$0xff]
      %v3446 = vld [vmem:[#allocation2 + $0x308] sm:$0xff]
      %v3447 = vld [vmem:[#allocation2 + $0x310] sm:$0xff]
      %v3448 = vld [vmem:[#allocation2 + $0x318] sm:$0xff]
      %v3449 = vld [vmem:[#allocation2 + $0x320] sm:$0xff]
      %v3450 = vld [vmem:[#allocation2 + $0x328] sm:$0xff]
      %v3451 = vld [vmem:[#allocation2 + $0x330] sm:$0xff]
      %v3452 = vld [vmem:[#allocation2 + $0x338] sm:$0xff]
      %v3453 = vld [vmem:[#allocation2 + $0x340] sm:$0xff]
      %v3454 = vld [vmem:[#allocation2 + $0x348] sm:$0xff]
      %v3455 = vld [vmem:[#allocation2 + $0x350] sm:$0xff]
      %v3456 = vld [vmem:[#allocation2 + $0x358] sm:$0xff]
      %v3457 = vld [vmem:[#allocation2 + $0x360] sm:$0xff]
      %v3458 = vld [vmem:[#allocation2 + $0x368] sm:$0xff]
      %v3459 = vld [vmem:[#allocation2 + $0x370] sm:$0xff]
      %v3460 = vld [vmem:[#allocation2 + $0x378] sm:$0xff]
      %v3461 = vld [vmem:[#allocation2 + $0x380] sm:$0xff]
      %v3462 = vld [vmem:[#allocation2 + $0x388] sm:$0xff]
      %v3463 = vld [vmem:[#allocation2 + $0x390] sm:$0xff]
      %v3464 = vld [vmem:[#allocation2 + $0x398] sm:$0xff]
      %v3465 = vld [vmem:[#allocation2 + $0x3a0] sm:$0xff]
      %v3466 = vld [vmem:[#allocation2 + $0x3a8] sm:$0xff]
      %v3467 = vld [vmem:[#allocation2 + $0x3b0] sm:$0xff]
      %v3468 = vld [vmem:[#allocation2 + $0x3b8] sm:$0xff]
      %v3469 = vld [vmem:[#allocation2 + $0x3c0] sm:$0xff]
      %v3470 = vld [vmem:[#allocation2 + $0x3c8] sm:$0xff]
      %v3471 = vld [vmem:[#allocation2 + $0x3d0] sm:$0xff]
      %v3472 = vld [vmem:[#allocation2 + $0x3d8] sm:$0xff]
      %v3473 = vld [vmem:[#allocation2 + $0x3e0] sm:$0xff]
      %v3474 = vld [vmem:[#allocation2 + $0x3e8] sm:$0xff]
      %v3475 = vld [vmem:[#allocation2 + $0x3f0] sm:$0xff]
      %v3476 = vld [vmem:[#allocation2 + $0x3f8] sm:$0xff]
      %v3477 = vadd.f32 %v3349, %v3350
      %v3478 = vadd.f32 %v3477, %v3351
      %v3479 = vadd.f32 %v3478, %v3352
      %v3480 = vadd.f32 %v3479, %v3353
      %v3481 = vadd.f32 %v3480, %v3354
      %v3482 = vadd.f32 %v3481, %v3355
      %v3483 = vadd.f32 %v3482, %v3356
      %v3484 = vadd.f32 %v3483, %v3357
      %v3485 = vadd.f32 %v3484, %v3358
      %v3486 = vadd.f32 %v3485, %v3359
      %v3487 = vadd.f32 %v3486, %v3360
      %v3488 = vadd.f32 %v3487, %v3361
      %v3489 = vadd.f32 %v3488, %v3362
      %v3490 = vadd.f32 %v3489, %v3363
      %v3491 = vadd.f32 %v3490, %v3364
      %v3492 = vadd.f32 %v3491, %v3365
      %v3493 = vadd.f32 %v3492, %v3366
      %v3494 = vadd.f32 %v3493, %v3367
      %v3495 = vadd.f32 %v3494, %v3368
      %v3496 = vadd.f32 %v3495, %v3369
      %v3497 = vadd.f32 %v3496, %v3370
      %v3498 = vadd.f32 %v3497, %v3371
      %v3499 = vadd.f32 %v3498, %v3372
      %v3500 = vadd.f32 %v3499, %v3373
      %v3501 = vadd.f32 %v3500, %v3374
      %v3502 = vadd.f32 %v3501, %v3375
      %v3503 = vadd.f32 %v3502, %v3376
      %v3504 = vadd.f32 %v3503, %v3377
      %v3505 = vadd.f32 %v3504, %v3378
      %v3506 = vadd.f32 %v3505, %v3379
      %v3507 = vadd.f32 %v3506, %v3380
      %v3508 = vadd.f32 %v3507, %v3381
      %v3509 = vadd.f32 %v3508, %v3382
      %v3510 = vadd.f32 %v3509, %v3383
      %v3511 = vadd.f32 %v3510, %v3384
      %v3512 = vadd.f32 %v3511, %v3385
      %v3513 = vadd.f32 %v3512, %v3386
      %v3514 = vadd.f32 %v3513, %v3387
      %v3515 = vadd.f32 %v3514, %v3388
      %v3516 = vadd.f32 %v3515, %v3389
      %v3517 = vadd.f32 %v3516, %v3390
      %v3518 = vadd.f32 %v3517, %v3391
      %v3519 = vadd.f32 %v3518, %v3392
      %v3520 = vadd.f32 %v3519, %v3393
      %v3521 = vadd.f32 %v3520, %v3394
      %v3522 = vadd.f32 %v3521, %v3395
      %v3523 = vadd.f32 %v3522, %v3396
      %v3524 = vadd.f32 %v3523, %v3397
      %v3525 = vadd.f32 %v3524, %v3398
      %v3526 = vadd.f32 %v3525, %v3399
      %v3527 = vadd.f32 %v3526, %v3400
      %v3528 = vadd.f32 %v3527, %v3401
      %v3529 = vadd.f32 %v3528, %v3402
      %v3530 = vadd.f32 %v3529, %v3403
      %v3531 = vadd.f32 %v3530, %v3404
      %v3532 = vadd.f32 %v3531, %v3405
      %v3533 = vadd.f32 %v3532, %v3406
      %v3534 = vadd.f32 %v3533, %v3407
      %v3535 = vadd.f32 %v3534, %v3408
      %v3536 = vadd.f32 %v3535, %v3409
      %v3537 = vadd.f32 %v3536, %v3410
      %v3538 = vadd.f32 %v3537, %v3411
      %v3539 = vadd.f32 %v3538, %v3412
      %v3540 = vadd.f32 %v3539, %v3413
      %v3541 = vadd.f32 %v3540, %v3414
      %v3542 = vadd.f32 %v3541, %v3415
      %v3543 = vadd.f32 %v3542, %v3416
      %v3544 = vadd.f32 %v3543, %v3417
      %v3545 = vadd.f32 %v3544, %v3418
      %v3546 = vadd.f32 %v3545, %v3419
      %v3547 = vadd.f32 %v3546, %v3420
      %v3548 = vadd.f32 %v3547, %v3421
      %v3549 = vadd.f32 %v3548, %v3422
      %v3550 = vadd.f32 %v3549, %v3423
      %v3551 = vadd.f32 %v3550, %v3424
      %v3552 = vadd.f32 %v3551, %v3425
      %v3553 = vadd.f32 %v3552, %v3426
      %v3554 = vadd.f32 %v3553, %v3427
      %v3555 = vadd.f32 %v3554, %v3428
      %v3556 = vadd.f32 %v3555, %v3429
      %v3557 = vadd.f32 %v3556, %v3430
      %v3558 = vadd.f32 %v3557, %v3431
      %v3559 = vadd.f32 %v3558, %v3432
      %v3560 = vadd.f32 %v3559, %v3433
      %v3561 = vadd.f32 %v3560, %v3434
      %v3562 = vadd.f32 %v3561, %v3435
      %v3563 = vadd.f32 %v3562, %v3436
      %v3564 = vadd.f32 %v3563, %v3437
      %v3565 = vadd.f32 %v3564, %v3438
      %v3566 = vadd.f32 %v3565, %v3439
      %v3567 = vadd.f32 %v3566, %v3440
      %v3568 = vadd.f32 %v3567, %v3441
      %v3569 = vadd.f32 %v3568, %v3442
      %v3570 = vadd.f32 %v3569, %v3443
      %v3571 = vadd.f32 %v3570, %v3444
      %v3572 = vadd.f32 %v3571, %v3445
      %v3573 = vadd.f32 %v3572, %v3446
      %v3574 = vadd.f32 %v3573, %v3447
      %v3575 = vadd.f32 %v3574, %v3448
      %v3576 = vadd.f32 %v3575, %v3449
      %v3577 = vadd.f32 %v3576, %v3450
      %v3578 = vadd.f32 %v3577, %v3451
      %v3579 = vadd.f32 %v3578, %v3452
      %v3580 = vadd.f32 %v3579, %v3453
      %v3581 = vadd.f32 %v3580, %v3454
      %v3582 = vadd.f32 %v3581, %v3455
      %v3583 = vadd.f32 %v3582, %v3456
      %v3584 = vadd.f32 %v3583, %v3457
      %v3585 = vadd.f32 %v3584, %v3458
      %v3586 = vadd.f32 %v3585, %v3459
      %v3587 = vadd.f32 %v3586, %v3460
      %v3588 = vadd.f32 %v3587, %v3461
      %v3589 = vadd.f32 %v3588, %v3462
      %v3590 = vadd.f32 %v3589, %v3463
      %v3591 = vadd.f32 %v3590, %v3464
      %v3592 = vadd.f32 %v3591, %v3465
      %v3593 = vadd.f32 %v3592, %v3466
      %v3594 = vadd.f32 %v3593, %v3467
      %v3595 = vadd.f32 %v3594, %v3468
      %v3596 = vadd.f32 %v3595, %v3469
      %v3597 = vadd.f32 %v3596, %v3470
      %v3598 = vadd.f32 %v3597, %v3471
      %v3599 = vadd.f32 %v3598, %v3472
      %v3600 = vadd.f32 %v3599, %v3473
      %v3601 = vadd.f32 %v3600, %v3474
      %v3602 = vadd.f32 %v3601, %v3475
      %v3603 = vadd.f32 %v3602, %v3476
      %3604 = vadd.xlane.f32.xlu0 %v3603
      %v3605 = vpop.xlane.xlu0 %3604
      %v3606 = vrot.slane %v3605, 4
      %v3607 = vadd.f32 %v3605, %v3606
      %v3608 = vrot.slane %v3607, 2
      %v3609 = vadd.f32 %v3607, %v3608
      %v3610 = vrot.slane %v3609, 1
      %v3611 = vadd.f32 %v3609, %v3610
      %s3612 = vtos %v3611
      %s3613 = scalar_lea.smem [#allocation13], 0
      %3614 = sst [smem:[%s3613]] %s3612
      %v3615 = vld [vmem:[#allocation3] sm:$0xff]
      %v3616 = vld [vmem:[#allocation3 + $0x8] sm:$0xff]
      %v3617 = vld [vmem:[#allocation3 + $0x10] sm:$0xff]
      %v3618 = vld [vmem:[#allocation3 + $0x18] sm:$0xff]
      %v3619 = vld [vmem:[#allocation3 + $0x20] sm:$0xff]
      %v3620 = vld [vmem:[#allocation3 + $0x28] sm:$0xff]
      %v3621 = vld [vmem:[#allocation3 + $0x30] sm:$0xff]
      %v3622 = vld [vmem:[#allocation3 + $0x38] sm:$0xff]
      %v3623 = vld [vmem:[#allocation3 + $0x40] sm:$0xff]
      %v3624 = vld [vmem:[#allocation3 + $0x48] sm:$0xff]
      %v3625 = vld [vmem:[#allocation3 + $0x50] sm:$0xff]
      %v3626 = vld [vmem:[#allocation3 + $0x58] sm:$0xff]
      %v3627 = vld [vmem:[#allocation3 + $0x60] sm:$0xff]
      %v3628 = vld [vmem:[#allocation3 + $0x68] sm:$0xff]
      %v3629 = vld [vmem:[#allocation3 + $0x70] sm:$0xff]
      %v3630 = vld [vmem:[#allocation3 + $0x78] sm:$0xff]
      %v3631 = vld [vmem:[#allocation3 + $0x80] sm:$0xff]
      %v3632 = vld [vmem:[#allocation3 + $0x88] sm:$0xff]
      %v3633 = vld [vmem:[#allocation3 + $0x90] sm:$0xff]
      %v3634 = vld [vmem:[#allocation3 + $0x98] sm:$0xff]
      %v3635 = vld [vmem:[#allocation3 + $0xa0] sm:$0xff]
      %v3636 = vld [vmem:[#allocation3 + $0xa8] sm:$0xff]
      %v3637 = vld [vmem:[#allocation3 + $0xb0] sm:$0xff]
      %v3638 = vld [vmem:[#allocation3 + $0xb8] sm:$0xff]
      %v3639 = vld [vmem:[#allocation3 + $0xc0] sm:$0xff]
      %v3640 = vld [vmem:[#allocation3 + $0xc8] sm:$0xff]
      %v3641 = vld [vmem:[#allocation3 + $0xd0] sm:$0xff]
      %v3642 = vld [vmem:[#allocation3 + $0xd8] sm:$0xff]
      %v3643 = vld [vmem:[#allocation3 + $0xe0] sm:$0xff]
      %v3644 = vld [vmem:[#allocation3 + $0xe8] sm:$0xff]
      %v3645 = vld [vmem:[#allocation3 + $0xf0] sm:$0xff]
      %v3646 = vld [vmem:[#allocation3 + $0xf8] sm:$0xff]
      %v3647 = vld [vmem:[#allocation3 + $0x100] sm:$0xff]
      %v3648 = vld [vmem:[#allocation3 + $0x108] sm:$0xff]
      %v3649 = vld [vmem:[#allocation3 + $0x110] sm:$0xff]
      %v3650 = vld [vmem:[#allocation3 + $0x118] sm:$0xff]
      %v3651 = vld [vmem:[#allocation3 + $0x120] sm:$0xff]
      %v3652 = vld [vmem:[#allocation3 + $0x128] sm:$0xff]
      %v3653 = vld [vmem:[#allocation3 + $0x130] sm:$0xff]
      %v3654 = vld [vmem:[#allocation3 + $0x138] sm:$0xff]
      %v3655 = vld [vmem:[#allocation3 + $0x140] sm:$0xff]
      %v3656 = vld [vmem:[#allocation3 + $0x148] sm:$0xff]
      %v3657 = vld [vmem:[#allocation3 + $0x150] sm:$0xff]
      %v3658 = vld [vmem:[#allocation3 + $0x158] sm:$0xff]
      %v3659 = vld [vmem:[#allocation3 + $0x160] sm:$0xff]
      %v3660 = vld [vmem:[#allocation3 + $0x168] sm:$0xff]
      %v3661 = vld [vmem:[#allocation3 + $0x170] sm:$0xff]
      %v3662 = vld [vmem:[#allocation3 + $0x178] sm:$0xff]
      %v3663 = vld [vmem:[#allocation3 + $0x180] sm:$0xff]
      %v3664 = vld [vmem:[#allocation3 + $0x188] sm:$0xff]
      %v3665 = vld [vmem:[#allocation3 + $0x190] sm:$0xff]
      %v3666 = vld [vmem:[#allocation3 + $0x198] sm:$0xff]
      %v3667 = vld [vmem:[#allocation3 + $0x1a0] sm:$0xff]
      %v3668 = vld [vmem:[#allocation3 + $0x1a8] sm:$0xff]
      %v3669 = vld [vmem:[#allocation3 + $0x1b0] sm:$0xff]
      %v3670 = vld [vmem:[#allocation3 + $0x1b8] sm:$0xff]
      %v3671 = vld [vmem:[#allocation3 + $0x1c0] sm:$0xff]
      %v3672 = vld [vmem:[#allocation3 + $0x1c8] sm:$0xff]
      %v3673 = vld [vmem:[#allocation3 + $0x1d0] sm:$0xff]
      %v3674 = vld [vmem:[#allocation3 + $0x1d8] sm:$0xff]
      %v3675 = vld [vmem:[#allocation3 + $0x1e0] sm:$0xff]
      %v3676 = vld [vmem:[#allocation3 + $0x1e8] sm:$0xff]
      %v3677 = vld [vmem:[#allocation3 + $0x1f0] sm:$0xff]
      %v3678 = vld [vmem:[#allocation3 + $0x1f8] sm:$0xff]
      %v3679 = vld [vmem:[#allocation3 + $0x200] sm:$0xff]
      %v3680 = vld [vmem:[#allocation3 + $0x208] sm:$0xff]
      %v3681 = vld [vmem:[#allocation3 + $0x210] sm:$0xff]
      %v3682 = vld [vmem:[#allocation3 + $0x218] sm:$0xff]
      %v3683 = vld [vmem:[#allocation3 + $0x220] sm:$0xff]
      %v3684 = vld [vmem:[#allocation3 + $0x228] sm:$0xff]
      %v3685 = vld [vmem:[#allocation3 + $0x230] sm:$0xff]
      %v3686 = vld [vmem:[#allocation3 + $0x238] sm:$0xff]
      %v3687 = vld [vmem:[#allocation3 + $0x240] sm:$0xff]
      %v3688 = vld [vmem:[#allocation3 + $0x248] sm:$0xff]
      %v3689 = vld [vmem:[#allocation3 + $0x250] sm:$0xff]
      %v3690 = vld [vmem:[#allocation3 + $0x258] sm:$0xff]
      %v3691 = vld [vmem:[#allocation3 + $0x260] sm:$0xff]
      %v3692 = vld [vmem:[#allocation3 + $0x268] sm:$0xff]
      %v3693 = vld [vmem:[#allocation3 + $0x270] sm:$0xff]
      %v3694 = vld [vmem:[#allocation3 + $0x278] sm:$0xff]
      %v3695 = vld [vmem:[#allocation3 + $0x280] sm:$0xff]
      %v3696 = vld [vmem:[#allocation3 + $0x288] sm:$0xff]
      %v3697 = vld [vmem:[#allocation3 + $0x290] sm:$0xff]
      %v3698 = vld [vmem:[#allocation3 + $0x298] sm:$0xff]
      %v3699 = vld [vmem:[#allocation3 + $0x2a0] sm:$0xff]
      %v3700 = vld [vmem:[#allocation3 + $0x2a8] sm:$0xff]
      %v3701 = vld [vmem:[#allocation3 + $0x2b0] sm:$0xff]
      %v3702 = vld [vmem:[#allocation3 + $0x2b8] sm:$0xff]
      %v3703 = vld [vmem:[#allocation3 + $0x2c0] sm:$0xff]
      %v3704 = vld [vmem:[#allocation3 + $0x2c8] sm:$0xff]
      %v3705 = vld [vmem:[#allocation3 + $0x2d0] sm:$0xff]
      %v3706 = vld [vmem:[#allocation3 + $0x2d8] sm:$0xff]
      %v3707 = vld [vmem:[#allocation3 + $0x2e0] sm:$0xff]
      %v3708 = vld [vmem:[#allocation3 + $0x2e8] sm:$0xff]
      %v3709 = vld [vmem:[#allocation3 + $0x2f0] sm:$0xff]
      %v3710 = vld [vmem:[#allocation3 + $0x2f8] sm:$0xff]
      %v3711 = vld [vmem:[#allocation3 + $0x300] sm:$0xff]
      %v3712 = vld [vmem:[#allocation3 + $0x308] sm:$0xff]
      %v3713 = vld [vmem:[#allocation3 + $0x310] sm:$0xff]
      %v3714 = vld [vmem:[#allocation3 + $0x318] sm:$0xff]
      %v3715 = vld [vmem:[#allocation3 + $0x320] sm:$0xff]
      %v3716 = vld [vmem:[#allocation3 + $0x328] sm:$0xff]
      %v3717 = vld [vmem:[#allocation3 + $0x330] sm:$0xff]
      %v3718 = vld [vmem:[#allocation3 + $0x338] sm:$0xff]
      %v3719 = vld [vmem:[#allocation3 + $0x340] sm:$0xff]
      %v3720 = vld [vmem:[#allocation3 + $0x348] sm:$0xff]
      %v3721 = vld [vmem:[#allocation3 + $0x350] sm:$0xff]
      %v3722 = vld [vmem:[#allocation3 + $0x358] sm:$0xff]
      %v3723 = vld [vmem:[#allocation3 + $0x360] sm:$0xff]
      %v3724 = vld [vmem:[#allocation3 + $0x368] sm:$0xff]
      %v3725 = vld [vmem:[#allocation3 + $0x370] sm:$0xff]
      %v3726 = vld [vmem:[#allocation3 + $0x378] sm:$0xff]
      %v3727 = vld [vmem:[#allocation3 + $0x380] sm:$0xff]
      %v3728 = vld [vmem:[#allocation3 + $0x388] sm:$0xff]
      %v3729 = vld [vmem:[#allocation3 + $0x390] sm:$0xff]
      %v3730 = vld [vmem:[#allocation3 + $0x398] sm:$0xff]
      %v3731 = vld [vmem:[#allocation3 + $0x3a0] sm:$0xff]
      %v3732 = vld [vmem:[#allocation3 + $0x3a8] sm:$0xff]
      %v3733 = vld [vmem:[#allocation3 + $0x3b0] sm:$0xff]
      %v3734 = vld [vmem:[#allocation3 + $0x3b8] sm:$0xff]
      %v3735 = vld [vmem:[#allocation3 + $0x3c0] sm:$0xff]
      %v3736 = vld [vmem:[#allocation3 + $0x3c8] sm:$0xff]
      %v3737 = vld [vmem:[#allocation3 + $0x3d0] sm:$0xff]
      %v3738 = vld [vmem:[#allocation3 + $0x3d8] sm:$0xff]
      %v3739 = vld [vmem:[#allocation3 + $0x3e0] sm:$0xff]
      %v3740 = vld [vmem:[#allocation3 + $0x3e8] sm:$0xff]
      %v3741 = vld [vmem:[#allocation3 + $0x3f0] sm:$0xff]
      %v3742 = vld [vmem:[#allocation3 + $0x3f8] sm:$0xff]
      %v3743 = vadd.f32 %v3615, %v3616
      %v3744 = vadd.f32 %v3743, %v3617
      %v3745 = vadd.f32 %v3744, %v3618
      %v3746 = vadd.f32 %v3745, %v3619
      %v3747 = vadd.f32 %v3746, %v3620
      %v3748 = vadd.f32 %v3747, %v3621
      %v3749 = vadd.f32 %v3748, %v3622
      %v3750 = vadd.f32 %v3749, %v3623
      %v3751 = vadd.f32 %v3750, %v3624
      %v3752 = vadd.f32 %v3751, %v3625
      %v3753 = vadd.f32 %v3752, %v3626
      %v3754 = vadd.f32 %v3753, %v3627
      %v3755 = vadd.f32 %v3754, %v3628
      %v3756 = vadd.f32 %v3755, %v3629
      %v3757 = vadd.f32 %v3756, %v3630
      %v3758 = vadd.f32 %v3757, %v3631
      %v3759 = vadd.f32 %v3758, %v3632
      %v3760 = vadd.f32 %v3759, %v3633
      %v3761 = vadd.f32 %v3760, %v3634
      %v3762 = vadd.f32 %v3761, %v3635
      %v3763 = vadd.f32 %v3762, %v3636
      %v3764 = vadd.f32 %v3763, %v3637
      %v3765 = vadd.f32 %v3764, %v3638
      %v3766 = vadd.f32 %v3765, %v3639
      %v3767 = vadd.f32 %v3766, %v3640
      %v3768 = vadd.f32 %v3767, %v3641
      %v3769 = vadd.f32 %v3768, %v3642
      %v3770 = vadd.f32 %v3769, %v3643
      %v3771 = vadd.f32 %v3770, %v3644
      %v3772 = vadd.f32 %v3771, %v3645
      %v3773 = vadd.f32 %v3772, %v3646
      %v3774 = vadd.f32 %v3773, %v3647
      %v3775 = vadd.f32 %v3774, %v3648
      %v3776 = vadd.f32 %v3775, %v3649
      %v3777 = vadd.f32 %v3776, %v3650
      %v3778 = vadd.f32 %v3777, %v3651
      %v3779 = vadd.f32 %v3778, %v3652
      %v3780 = vadd.f32 %v3779, %v3653
      %v3781 = vadd.f32 %v3780, %v3654
      %v3782 = vadd.f32 %v3781, %v3655
      %v3783 = vadd.f32 %v3782, %v3656
      %v3784 = vadd.f32 %v3783, %v3657
      %v3785 = vadd.f32 %v3784, %v3658
      %v3786 = vadd.f32 %v3785, %v3659
      %v3787 = vadd.f32 %v3786, %v3660
      %v3788 = vadd.f32 %v3787, %v3661
      %v3789 = vadd.f32 %v3788, %v3662
      %v3790 = vadd.f32 %v3789, %v3663
      %v3791 = vadd.f32 %v3790, %v3664
      %v3792 = vadd.f32 %v3791, %v3665
      %v3793 = vadd.f32 %v3792, %v3666
      %v3794 = vadd.f32 %v3793, %v3667
      %v3795 = vadd.f32 %v3794, %v3668
      %v3796 = vadd.f32 %v3795, %v3669
      %v3797 = vadd.f32 %v3796, %v3670
      %v3798 = vadd.f32 %v3797, %v3671
      %v3799 = vadd.f32 %v3798, %v3672
      %v3800 = vadd.f32 %v3799, %v3673
      %v3801 = vadd.f32 %v3800, %v3674
      %v3802 = vadd.f32 %v3801, %v3675
      %v3803 = vadd.f32 %v3802, %v3676
      %v3804 = vadd.f32 %v3803, %v3677
      %v3805 = vadd.f32 %v3804, %v3678
      %v3806 = vadd.f32 %v3805, %v3679
      %v3807 = vadd.f32 %v3806, %v3680
      %v3808 = vadd.f32 %v3807, %v3681
      %v3809 = vadd.f32 %v3808, %v3682
      %v3810 = vadd.f32 %v3809, %v3683
      %v3811 = vadd.f32 %v3810, %v3684
      %v3812 = vadd.f32 %v3811, %v3685
      %v3813 = vadd.f32 %v3812, %v3686
      %v3814 = vadd.f32 %v3813, %v3687
      %v3815 = vadd.f32 %v3814, %v3688
      %v3816 = vadd.f32 %v3815, %v3689
      %v3817 = vadd.f32 %v3816, %v3690
      %v3818 = vadd.f32 %v3817, %v3691
      %v3819 = vadd.f32 %v3818, %v3692
      %v3820 = vadd.f32 %v3819, %v3693
      %v3821 = vadd.f32 %v3820, %v3694
      %v3822 = vadd.f32 %v3821, %v3695
      %v3823 = vadd.f32 %v3822, %v3696
      %v3824 = vadd.f32 %v3823, %v3697
      %v3825 = vadd.f32 %v3824, %v3698
      %v3826 = vadd.f32 %v3825, %v3699
      %v3827 = vadd.f32 %v3826, %v3700
      %v3828 = vadd.f32 %v3827, %v3701
      %v3829 = vadd.f32 %v3828, %v3702
      %v3830 = vadd.f32 %v3829, %v3703
      %v3831 = vadd.f32 %v3830, %v3704
      %v3832 = vadd.f32 %v3831, %v3705
      %v3833 = vadd.f32 %v3832, %v3706
      %v3834 = vadd.f32 %v3833, %v3707
      %v3835 = vadd.f32 %v3834, %v3708
      %v3836 = vadd.f32 %v3835, %v3709
      %v3837 = vadd.f32 %v3836, %v3710
      %v3838 = vadd.f32 %v3837, %v3711
      %v3839 = vadd.f32 %v3838, %v3712
      %v3840 = vadd.f32 %v3839, %v3713
      %v3841 = vadd.f32 %v3840, %v3714
      %v3842 = vadd.f32 %v3841, %v3715
      %v3843 = vadd.f32 %v3842, %v3716
      %v3844 = vadd.f32 %v3843, %v3717
      %v3845 = vadd.f32 %v3844, %v3718
      %v3846 = vadd.f32 %v3845, %v3719
      %v3847 = vadd.f32 %v3846, %v3720
      %v3848 = vadd.f32 %v3847, %v3721
      %v3849 = vadd.f32 %v3848, %v3722
      %v3850 = vadd.f32 %v3849, %v3723
      %v3851 = vadd.f32 %v3850, %v3724
      %v3852 = vadd.f32 %v3851, %v3725
      %v3853 = vadd.f32 %v3852, %v3726
      %v3854 = vadd.f32 %v3853, %v3727
      %v3855 = vadd.f32 %v3854, %v3728
      %v3856 = vadd.f32 %v3855, %v3729
      %v3857 = vadd.f32 %v3856, %v3730
      %v3858 = vadd.f32 %v3857, %v3731
      %v3859 = vadd.f32 %v3858, %v3732
      %v3860 = vadd.f32 %v3859, %v3733
      %v3861 = vadd.f32 %v3860, %v3734
      %v3862 = vadd.f32 %v3861, %v3735
      %v3863 = vadd.f32 %v3862, %v3736
      %v3864 = vadd.f32 %v3863, %v3737
      %v3865 = vadd.f32 %v3864, %v3738
      %v3866 = vadd.f32 %v3865, %v3739
      %v3867 = vadd.f32 %v3866, %v3740
      %v3868 = vadd.f32 %v3867, %v3741
      %v3869 = vadd.f32 %v3868, %v3742
      %3870 = vadd.xlane.f32.xlu0 %v3869
      %v3871 = vpop.xlane.xlu0 %3870
      %v3872 = vrot.slane %v3871, 4
      %v3873 = vadd.f32 %v3871, %v3872
      %v3874 = vrot.slane %v3873, 2
      %v3875 = vadd.f32 %v3873, %v3874
      %v3876 = vrot.slane %v3875, 1
      %v3877 = vadd.f32 %v3875, %v3876
      %s3878 = vtos %v3877
      %s3879 = scalar_lea.smem [#allocation14], 0
      %3880 = sst [smem:[%s3879]] %s3878
    $region49: #{tpu_custom_call.1} parent=1 // pred_fallthru
      _
    // Predicated region
    $region50: #{tpu_custom_call.1} parent=1 // pred_check
      _
    $region51: #{tpu_custom_call.1} parent=1 // pred_check_branch
      %3882 = sbr.rel (0) target = $region53
    $region52: #{tpu_custom_call.1} parent=1 // pred_region
      %s3884 = ssub.s32 16, 16
      %3885 = vsyncadd [#allocation6], %s3884
      %3888 = dma.smem_to_hbm [#allocation13], 16, %s5, [#allocation6]
    $region53: #{tpu_custom_call.1} parent=1 // pred_fallthru
      _
    // Predicated region
    $region54: #{tpu_custom_call.1} parent=1 // pred_check
      _
    $region55: #{tpu_custom_call.1} parent=1 // pred_check_branch
      %3890 = sbr.rel (0) target = $region57
    $region56: #{tpu_custom_call.1} parent=1 // pred_region
      %s3892 = ssub.s32 16, 16
      %3893 = vsyncadd [#allocation15], %s3892
      %3896 = dma.smem_to_hbm [#allocation14], 16, %s6, [#allocation15]
    $region57: #{tpu_custom_call.1} parent=1 // pred_fallthru
      _
    // Predicated region
    $region58: #{tpu_custom_call.1} parent=1 // pred_check
      _
    $region59: #{tpu_custom_call.1} parent=1 // pred_check_branch
      %3898 = sbr.rel (0) target = $region61
    $region60: #{tpu_custom_call.1} parent=1 // pred_region
      %3899 = dma.done [#allocation6], 16
    $region61: #{tpu_custom_call.1} parent=1 // pred_fallthru
      _
    // Predicated region
    $region62: #{tpu_custom_call.1} parent=1 // pred_check
      _
    $region63: #{tpu_custom_call.1} parent=1 // pred_check_branch
      %3901 = sbr.rel (0) target = $region65
    $region64: #{tpu_custom_call.1} parent=1 // pred_region
      %3902 = dma.done [#allocation15], 16
    $region65: #{tpu_custom_call.1} parent=1 // pred_fallthru
      _
    %3903 = sfence
    %3904 = vsyncpa [#allocation5], 1
    %3905 = vsyncpa [#allocation8], 1
    %3906 = vsyncpa [#allocation11], 1
    %3907 = vsyncpa [#allocation6], 1
    %3908 = vsyncpa [#allocation15], 1

</llo_original>
